<compile_context>
chip_gen: v7x
topology: tpu7x:2x2x1
jax: 0.10.0
libtpu: 0.0.40
codegen_flags: <defaults>
</compile_context>

<pallas_src>
import functools
import numpy as np

import jax
import jax.numpy as jnp
from jax.experimental import pallas as pl
from jax.experimental.pallas import tpu as pltpu

TM = 256          # GEMM row tile (pixels).  >=2 tiles keeps both v7x TCs busy.
TN = 128          # GEMM col tile (output channels, padded).
_LOG_2PI = float(np.log(2.0 * np.pi))


def _round_up(x, m):
    return (x + m - 1) // m * m


# ---------------------------------------------------------------------------
# Pallas kernel 1: GEMM + bias (+ optional ReLU, + optional fused residual add)
#   A/W are bf16 (MXU native), epilogue in f32 (v5e has no bf16 VPU).
# ---------------------------------------------------------------------------
def _gemm_kernel(a_ref, w_ref, bias_ref, *rest, activation, has_residual):
    if has_residual:
        res_ref, o_ref = rest
    else:
        (o_ref,) = rest
    acc = jnp.dot(a_ref[...], w_ref[...], preferred_element_type=jnp.float32)
    acc = acc + bias_ref[...]                 # (1, TN) broadcasts over (TM, TN)
    if activation == "relu":
        acc = jnp.maximum(acc, 0.0)
    if has_residual:
        acc = acc + res_ref[...]              # fused `h = h + u`
    o_ref[...] = acc.astype(o_ref.dtype)


def pallas_gemm(a_bf16, w_bf16, bias_f32, activation=None, residual=None):
    """a: (Mp, Kp) bf16, w: (Kp, Np) bf16, bias: (1, Np) f32,
    residual: (Mp, Np) f32 or None  ->  (Mp, Np) f32."""
    Mp, Kp = a_bf16.shape
    Kp2, Np = w_bf16.shape
    assert Kp == Kp2 and Mp % TM == 0 and Np % TN == 0
    has_residual = residual is not None

    in_specs = [
        pl.BlockSpec((TM, Kp), lambda i, j: (i, 0)),
        pl.BlockSpec((Kp, TN), lambda i, j: (0, j)),
        pl.BlockSpec((1, TN), lambda i, j: (0, j)),
    ]
    args = [a_bf16, w_bf16, bias_f32]
    if has_residual:
        in_specs.append(pl.BlockSpec((TM, TN), lambda i, j: (i, j)))
        args.append(residual)

    kern = functools.partial(_gemm_kernel, activation=activation,
                             has_residual=has_residual)
    return pl.pallas_call(
        kern,
        out_shape=jax.ShapeDtypeStruct((Mp, Np), jnp.float32),
        grid_spec=pltpu.PrefetchScalarGridSpec(
            num_scalar_prefetch=0,
            grid=(Mp // TM, Np // TN),
            in_specs=in_specs,
            out_specs=pl.BlockSpec((TM, TN), lambda i, j: (i, j)),
        ),
        compiler_params=pltpu.CompilerParams(
            dimension_semantics=("parallel", "parallel")),
    )(*args)


# ---------------------------------------------------------------------------
# Pallas kernel 2: fused 1x1 heads (conv+ReLU, conv) + summed Gaussian NLL.
#   mu / log_sigma come from separate (pre-split) weight column blocks so no
#   lane-shifting of the packed head output is needed.  Scalar accumulates in SMEM.
# ---------------------------------------------------------------------------
def _head_nll_kernel(h_ref, w1_ref, b1_ref, wmu_ref, bmu_ref, wls_ref, bls_ref,
                     x_ref, nll_ref, *, c_valid, m_valid):
    i = pl.program_id(0)

    @pl.when(i == 0)
    def _():
        nll_ref[0, 0] = 0.0

    h = h_ref[...].astype(jnp.bfloat16)
    h2 = jnp.dot(h, w1_ref[...], preferred_element_type=jnp.float32) + b1_ref[...]
    h2 = jnp.maximum(h2, 0.0).astype(jnp.bfloat16)
    mu = jnp.dot(h2, wmu_ref[...], preferred_element_type=jnp.float32) + bmu_ref[...]
    ls = jnp.dot(h2, wls_ref[...], preferred_element_type=jnp.float32) + bls_ref[...]

    x = x_ref[...]
    col = jax.lax.broadcasted_iota(jnp.int32, x.shape, 1)
    row = jax.lax.broadcasted_iota(jnp.int32, x.shape, 0) + i * x.shape[0]
    valid = (col < c_valid) & (row < m_valid)

    z = (x - mu) * jnp.exp(-ls)
    nll = ls + 0.5 * z * z + 0.5 * _LOG_2PI
    nll_ref[0, 0] += jnp.sum(jnp.where(valid, nll, 0.0))


def pallas_head_nll(h_pad, x_pad, w1, b1, wmu, bmu, wls, bls, c_valid, m_valid):
    Mp, Np = h_pad.shape
    assert Mp % TM == 0 and Np == TN
    kern = functools.partial(_head_nll_kernel, c_valid=c_valid, m_valid=m_valid)
    out = pl.pallas_call(
        kern,
        out_shape=jax.ShapeDtypeStruct((1, 1), jnp.float32),
        grid_spec=pltpu.PrefetchScalarGridSpec(
            num_scalar_prefetch=0,
            grid=(Mp // TM,),
            in_specs=[
                pl.BlockSpec((TM, TN), lambda i: (i, 0)),    # h (pre-head activation)
                pl.BlockSpec((TN, TN), lambda i: (0, 0)),    # head1 weight
                pl.BlockSpec((1, TN), lambda i: (0, 0)),     # head1 bias
                pl.BlockSpec((TN, TN), lambda i: (0, 0)),    # head2 mu weight
                pl.BlockSpec((1, TN), lambda i: (0, 0)),     # head2 mu bias
                pl.BlockSpec((TN, TN), lambda i: (0, 0)),    # head2 log_sigma weight
                pl.BlockSpec((1, TN), lambda i: (0, 0)),     # head2 log_sigma bias
                pl.BlockSpec((TM, TN), lambda i: (i, 0)),    # real x
            ],
            out_specs=pl.BlockSpec(memory_space=pltpu.SMEM),
        ),
        compiler_params=pltpu.CompilerParams(
            dimension_semantics=("arbitrary",)),
    )(h_pad, w1, b1, wmu, bmu, wls, bls, x_pad)
    return out[0, 0]


# ---------------------------------------------------------------------------
# Glue: masked-conv taps, reduced im2col, one-time weight packing, forward pass
# ---------------------------------------------------------------------------
def _mask_taps(ksize, mask_type):
    """(dy, dx) kernel offsets that the PixelCNN mask keeps (A: 4/9, B: 5/9 for 3x3)."""
    cy, cx = ksize // 2, ksize // 2
    taps = []
    for dy in range(ksize):
        for dx in range(ksize):
            if dy < cy or (dy == cy and (dx < cx or (dx == cx and mask_type == "B"))):
                taps.append((dy, dx))
    return tuple(taps)


def im2col_taps(x_bf16, taps, ksize, kp):
    """x: (N,H,W,C) bf16 -> (N*H*W, kp) bf16.  'same' zero padding, only unmasked
    taps, and zero columns appended so K is already padded (no separate pad copy)."""
    N, H, W, C = x_bf16.shape
    ph = pw = ksize // 2
    xp = jnp.pad(x_bf16, ((0, 0), (ph, ph), (pw, pw), (0, 0)))
    cols = [xp[:, dy:dy + H, dx:dx + W, :] for (dy, dx) in taps]
    k = len(taps) * C
    if kp > k:
        cols.append(jnp.zeros((N, H, W, kp - k), x_bf16.dtype))
    return jnp.concatenate(cols, axis=-1).reshape(N * H * W, kp)


def init_params(key, in_ch=10, nr_filters=32, nr_resnet=2, ksize=3):
    def nrm(k, shape, scale=0.05):
        return scale * jax.random.normal(k, shape, dtype=jnp.float32)

    keys = iter(jax.random.split(key, 16))
    params = {
        "conv0_w": nrm(next(keys), (ksize, ksize, in_ch, nr_filters)),
        "conv0_b": jnp.zeros((nr_filters,), jnp.float32),
    }
    for r in range(nr_resnet):
        params[f"res{r}_w1"] = nrm(next(keys), (ksize, ksize, nr_filters, nr_filters))
        params[f"res{r}_b1"] = jnp.zeros((nr_filters,), jnp.float32)
        params[f"res{r}_w2"] = nrm(next(keys), (ksize, ksize, nr_filters, nr_filters))
        params[f"res{r}_b2"] = jnp.zeros((nr_filters,), jnp.float32)
    params["head1_w"] = nrm(next(keys), (1, 1, nr_filters, nr_filters))
    params["head1_b"] = jnp.zeros((nr_filters,), jnp.float32)
    params["head2_w"] = nrm(next(keys), (1, 1, nr_filters, 2 * in_ch))
    params["head2_b"] = jnp.zeros((2 * in_ch,), jnp.float32)
    return params


def _pack_conv(w, b, taps):
    """Masked conv weight -> GEMM-ready: keep unmasked taps only, flatten, pad to
    (Kp, Np), cast to bf16.  Bias -> (1, Np) f32.  Done once at setup."""
    kh, kw, cin, cout = w.shape
    wf = jnp.concatenate([w[dy, dx] for (dy, dx) in taps], axis=0)   # (len(taps)*cin, cout)
    k, n = wf.shape
    kp, n_p = _round_up(k, 128), _round_up(n, TN)
    wf = jnp.pad(wf, ((0, kp - k), (0, n_p - n))).astype(jnp.bfloat16)
    bf = jnp.pad(b, (0, n_p - n)).astype(jnp.float32).reshape(1, n_p)
    return wf, bf


def _pack_dense(w, b):
    """(cin, cout) 1x1-conv weight -> (TN, TN) bf16, bias -> (1, TN) f32."""
    cin, cout = w.shape
    wf = jnp.pad(w, ((0, TN - cin), (0, TN - cout))).astype(jnp.bfloat16)
    bf = jnp.pad(b, (0, TN - cout)).astype(jnp.float32).reshape(1, TN)
    return wf, bf


def prepare_params(params, nr_resnet, in_ch, ksize=3):
    tapsA, tapsB = _mask_taps(ksize, "A"), _mask_taps(ksize, "B")
    prep = {"tapsA": tapsA, "tapsB": tapsB, "ksize": ksize}
    prep["conv0_w"], prep["conv0_b"] = _pack_conv(params["conv0_w"],
                                                  params["conv0_b"], tapsA)
    for r in range(nr_resnet):
        prep[f"res{r}_w1"], prep[f"res{r}_b1"] = _pack_conv(
            params[f"res{r}_w1"], params[f"res{r}_b1"], tapsB)
        prep[f"res{r}_w2"], prep[f"res{r}_b2"] = _pack_conv(
            params[f"res{r}_w2"], params[f"res{r}_b2"], tapsB)
    prep["head1_w"], prep["head1_b"] = _pack_dense(params["head1_w"][0, 0],
                                                   params["head1_b"])
    w2, b2 = params["head2_w"][0, 0], params["head2_b"]      # (F, 2*in_ch)
    prep["head_mu_w"], prep["head_mu_b"] = _pack_dense(w2[:, :in_ch], b2[:in_ch])
    prep["head_ls_w"], prep["head_ls_b"] = _pack_dense(w2[:, in_ch:], b2[in_ch:])
    return prep


def pixelcnn_nll(x_nhwc, prep, nr_resnet, in_ch, nr_filters):
    N, H, W, _ = x_nhwc.shape
    M = N * H * W
    Mp = _round_up(M, TM)
    ksize = prep["ksize"]

    def to_gemm_rows(patches):            # row-pad (no-op when M % TM == 0)
        return patches if Mp == M else jnp.pad(patches, ((0, Mp - M), (0, 0)))

    # First layer: mask 'A' (no access to current pixel), fused ReLU.
    x_bf = x_nhwc.astype(jnp.bfloat16)
    a0 = to_gemm_rows(im2col_taps(x_bf, prep["tapsA"], ksize,
                                  prep["conv0_w"].shape[0]))
    h_pad = pallas_gemm(a0, prep["conv0_w"], prep["conv0_b"], activation="relu")

    # Residual blocks with mask 'B' convs; residual add fused into the 2nd GEMM.
    for r in range(nr_resnet):
        h_sp = h_pad[:M, :nr_filters].astype(jnp.bfloat16).reshape(N, H, W, nr_filters)
        a1 = to_gemm_rows(im2col_taps(h_sp, prep["tapsB"], ksize,
                                      prep[f"res{r}_w1"].shape[0]))
        u_pad = pallas_gemm(a1, prep[f"res{r}_w1"], prep[f"res{r}_b1"],
                            activation="relu")
        u_sp = u_pad[:M, :nr_filters].astype(jnp.bfloat16).reshape(N, H, W, nr_filters)
        a2 = to_gemm_rows(im2col_taps(u_sp, prep["tapsB"], ksize,
                                      prep[f"res{r}_w2"].shape[0]))
        h_pad = pallas_gemm(a2, prep[f"res{r}_w2"], prep[f"res{r}_b2"],
                            activation=None, residual=h_pad)   # fused h = h + u

    # Fused 1x1 heads + summed Gaussian NLL (single pallas_call).
    x_flat = x_nhwc.reshape(M, in_ch)
    x_pad = jnp.pad(x_flat, ((0, Mp - M), (0, TN - in_ch)))
    return pallas_head_nll(h_pad, x_pad,
                           prep["head1_w"], prep["head1_b"],
                           prep["head_mu_w"], prep["head_mu_b"],
                           prep["head_ls_w"], prep["head_ls_b"],
                           c_valid=in_ch, m_valid=M)


def pc_forward(c_nchw, prep, nr_resnet, in_ch, nr_filters):
    """Forward branch of Pc with c given: return (c, -gaussian_loss(c, model(c)))."""
    x = jnp.transpose(c_nchw, (0, 2, 3, 1)).astype(jnp.float32)   # NCHW -> NHWC
    nll = pixelcnn_nll(x, prep, nr_resnet, in_ch, nr_filters)
    return c_nchw, -nll


if __name__ == "__main__":
    in_ch, nr_filters, nr_resnet = 10, 32, 2   # nr_resnet = args.nr_resnet // 2 style
    key = jax.random.PRNGKey(0)
    k_param, k_x = jax.random.split(key)
    params = init_params(k_param, in_ch=in_ch, nr_filters=nr_filters,
                         nr_resnet=nr_resnet, ksize=3)
    # One-time packing: masked taps dropped, reshaped, padded, bf16-cast.
    prep = prepare_params(params, nr_resnet, in_ch, ksize=3)

    c = jax.random.normal(k_x, (2, in_ch, 16, 16), dtype=jnp.float32)

    fwd = jax.jit(lambda cc: pc_forward(cc, prep, nr_resnet, in_ch, nr_filters))
    c_out, logp = fwd(c)
    jax.block_until_ready((c_out, logp))
    assert c_out.shape == (2, in_ch, 16, 16)
    assert logp.shape == () and bool(jnp.isfinite(logp))
    print("KERNEL_OK")
</pallas_src>

<mosaic_0001>
module attributes {stable_mosaic.version = 11 : i64} {
  func.func @_gemm_kernel(%arg0: i32, %arg1: i32, %arg2: memref<256x128xbf16, #tpu.memory_space<vmem>>, %arg3: memref<128x128xbf16, #tpu.memory_space<vmem>>, %arg4: memref<1x128xf32, #tpu.memory_space<vmem>>, %arg5: memref<256x128xf32, #tpu.memory_space<vmem>>) attributes {dimension_semantics = [#tpu.dimension_semantics<parallel>, #tpu.dimension_semantics<parallel>], iteration_bounds = array<i64: 2, 1>, scalar_prefetch = 0 : i64, scratch_operands = 0 : i64, tpu.core_type = #tpu.core_type<tc>, window_params = [{transform_indices = @transform_0, window_bounds = array<i64: 256, 128>}, {transform_indices = @transform_1, window_bounds = array<i64: 128, 128>}, {transform_indices = @transform_2, window_bounds = array<i64: 1, 128>}, {transform_indices = @transform_3, window_bounds = array<i64: 256, 128>}]} {
    %c0 = arith.constant 0 : index
    %c0_0 = arith.constant 0 : index
    %0 = vector.load %arg2[%c0, %c0_0] : memref<256x128xbf16, #tpu.memory_space<vmem>>, vector<256x128xbf16>
    %c0_1 = arith.constant 0 : index
    %c0_2 = arith.constant 0 : index
    %1 = vector.load %arg3[%c0_1, %c0_2] : memref<128x128xbf16, #tpu.memory_space<vmem>>, vector<128x128xbf16>
    %cst = arith.constant dense<0.000000e+00> : vector<256x128xf32>
    %2 = tpu.matmul %0, %1, %cst {dimension_numbers = #tpu.dot_dimension_numbers<[1], [0], [0], [1], [0, 0, 1, 1], [], []>} : vector<256x128xbf16>, vector<128x128xbf16>, vector<256x128xf32> -> vector<256x128xf32>
    %c0_3 = arith.constant 0 : index
    %c0_4 = arith.constant 0 : index
    %3 = vector.load %arg4[%c0_3, %c0_4] : memref<1x128xf32, #tpu.memory_space<vmem>>, vector<1x128xf32>
    %4 = vector.broadcast %3 : vector<1x128xf32> to vector<256x128xf32>
    %5 = arith.addf %2, %4 : vector<256x128xf32>
    %cst_5 = arith.constant 0.000000e+00 : f32
    %6 = vector.broadcast %cst_5 : f32 to vector<256x128xf32>
    %7 = arith.maximumf %5, %6 : vector<256x128xf32>
    %c0_6 = arith.constant 0 : index
    %c0_7 = arith.constant 0 : index
    %8 = vector.load %arg5[%c0_6, %c0_7] : memref<256x128xf32, #tpu.memory_space<vmem>>, vector<256x128xf32>
    tpu.vector_store %arg5[%c0_6, %c0_7], %7 {strides = array<i32>} : memref<256x128xf32, #tpu.memory_space<vmem>>, vector<256x128xf32>,
    return
  }
  func.func @transform_0(%arg0: i32, %arg1: i32) -> (i32, i32) {
    %c0_i32 = arith.constant 0 : i32
    %c0_i32_0 = arith.constant 0 : i32
    return %arg0, %c0_i32 : i32, i32
  }
  func.func @transform_1(%arg0: i32, %arg1: i32) -> (i32, i32) {
    %c0_i32 = arith.constant 0 : i32
    %c0_i32_0 = arith.constant 0 : i32
    return %c0_i32, %arg1 : i32, i32
  }
  func.func @transform_2(%arg0: i32, %arg1: i32) -> (i32, i32) {
    %c0_i32 = arith.constant 0 : i32
    %c0_i32_0 = arith.constant 0 : i32
    return %c0_i32, %arg1 : i32, i32
  }
  func.func @transform_3(%arg0: i32, %arg1: i32) -> (i32, i32) {
    %c0_i32 = arith.constant 0 : i32
    return %arg0, %arg1 : i32, i32
  }
}

module attributes {stable_mosaic.version = 11 : i64} {
  func.func @_gemm_kernel(%arg0: i32, %arg1: i32, %arg2: memref<256x256xbf16, #tpu.memory_space<vmem>>, %arg3: memref<256x128xbf16, #tpu.memory_space<vmem>>, %arg4: memref<1x128xf32, #tpu.memory_space<vmem>>, %arg5: memref<256x128xf32, #tpu.memory_space<vmem>>) attributes {dimension_semantics = [#tpu.dimension_semantics<parallel>, #tpu.dimension_semantics<parallel>], iteration_bounds = array<i64: 2, 1>, scalar_prefetch = 0 : i64, scratch_operands = 0 : i64, tpu.core_type = #tpu.core_type<tc>, window_params = [{transform_indices = @transform_0, window_bounds = array<i64: 256, 256>}, {transform_indices = @transform_1, window_bounds = array<i64: 256, 128>}, {transform_indices = @transform_2, window_bounds = array<i64: 1, 128>}, {transform_indices = @transform_3, window_bounds = array<i64: 256, 128>}]} {
    %c0 = arith.constant 0 : index
    %c0_0 = arith.constant 0 : index
    %0 = vector.load %arg2[%c0, %c0_0] : memref<256x256xbf16, #tpu.memory_space<vmem>>, vector<256x256xbf16>
    %c0_1 = arith.constant 0 : index
    %c0_2 = arith.constant 0 : index
    %1 = vector.load %arg3[%c0_1, %c0_2] : memref<256x128xbf16, #tpu.memory_space<vmem>>, vector<256x128xbf16>
    %cst = arith.constant dense<0.000000e+00> : vector<256x128xf32>
    %2 = tpu.matmul %0, %1, %cst {dimension_numbers = #tpu.dot_dimension_numbers<[1], [0], [0], [1], [0, 0, 1, 1], [], []>} : vector<256x256xbf16>, vector<256x128xbf16>, vector<256x128xf32> -> vector<256x128xf32>
    %c0_3 = arith.constant 0 : index
    %c0_4 = arith.constant 0 : index
    %3 = vector.load %arg4[%c0_3, %c0_4] : memref<1x128xf32, #tpu.memory_space<vmem>>, vector<1x128xf32>
    %4 = vector.broadcast %3 : vector<1x128xf32> to vector<256x128xf32>
    %5 = arith.addf %2, %4 : vector<256x128xf32>
    %cst_5 = arith.constant 0.000000e+00 : f32
    %6 = vector.broadcast %cst_5 : f32 to vector<256x128xf32>
    %7 = arith.maximumf %5, %6 : vector<256x128xf32>
    %c0_6 = arith.constant 0 : index
    %c0_7 = arith.constant 0 : index
    %8 = vector.load %arg5[%c0_6, %c0_7] : memref<256x128xf32, #tpu.memory_space<vmem>>, vector<256x128xf32>
    tpu.vector_store %arg5[%c0_6, %c0_7], %7 {strides = array<i32>} : memref<256x128xf32, #tpu.memory_space<vmem>>, vector<256x128xf32>,
    return
  }
  func.func @transform_0(%arg0: i32, %arg1: i32) -> (i32, i32) {
    %c0_i32 = arith.constant 0 : i32
    %c0_i32_0 = arith.constant 0 : i32
    return %arg0, %c0_i32 : i32, i32
  }
  func.func @transform_1(%arg0: i32, %arg1: i32) -> (i32, i32) {
    %c0_i32 = arith.constant 0 : i32
    %c0_i32_0 = arith.constant 0 : i32
    return %c0_i32, %arg1 : i32, i32
  }
  func.func @transform_2(%arg0: i32, %arg1: i32) -> (i32, i32) {
    %c0_i32 = arith.constant 0 : i32
    %c0_i32_0 = arith.constant 0 : i32
    return %c0_i32, %arg1 : i32, i32
  }
  func.func @transform_3(%arg0: i32, %arg1: i32) -> (i32, i32) {
    %c0_i32 = arith.constant 0 : i32
    return %arg0, %arg1 : i32, i32
  }
}

module attributes {stable_mosaic.version = 11 : i64} {
  func.func @_gemm_kernel(%arg0: i32, %arg1: i32, %arg2: memref<256x256xbf16, #tpu.memory_space<vmem>>, %arg3: memref<256x128xbf16, #tpu.memory_space<vmem>>, %arg4: memref<1x128xf32, #tpu.memory_space<vmem>>, %arg5: memref<256x128xf32, #tpu.memory_space<vmem>>, %arg6: memref<256x128xf32, #tpu.memory_space<vmem>>) attributes {dimension_semantics = [#tpu.dimension_semantics<parallel>, #tpu.dimension_semantics<parallel>], iteration_bounds = array<i64: 2, 1>, scalar_prefetch = 0 : i64, scratch_operands = 0 : i64, tpu.core_type = #tpu.core_type<tc>, window_params = [{transform_indices = @transform_0, window_bounds = array<i64: 256, 256>}, {transform_indices = @transform_1, window_bounds = array<i64: 256, 128>}, {transform_indices = @transform_2, window_bounds = array<i64: 1, 128>}, {transform_indices = @transform_3, window_bounds = array<i64: 256, 128>}, {transform_indices = @transform_4, window_bounds = array<i64: 256, 128>}]} {
    %c0 = arith.constant 0 : index
    %c0_0 = arith.constant 0 : index
    %0 = vector.load %arg2[%c0, %c0_0] : memref<256x256xbf16, #tpu.memory_space<vmem>>, vector<256x256xbf16>
    %c0_1 = arith.constant 0 : index
    %c0_2 = arith.constant 0 : index
    %1 = vector.load %arg3[%c0_1, %c0_2] : memref<256x128xbf16, #tpu.memory_space<vmem>>, vector<256x128xbf16>
    %cst = arith.constant dense<0.000000e+00> : vector<256x128xf32>
    %2 = tpu.matmul %0, %1, %cst {dimension_numbers = #tpu.dot_dimension_numbers<[1], [0], [0], [1], [0, 0, 1, 1], [], []>} : vector<256x256xbf16>, vector<256x128xbf16>, vector<256x128xf32> -> vector<256x128xf32>
    %c0_3 = arith.constant 0 : index
    %c0_4 = arith.constant 0 : index
    %3 = vector.load %arg4[%c0_3, %c0_4] : memref<1x128xf32, #tpu.memory_space<vmem>>, vector<1x128xf32>
    %4 = vector.broadcast %3 : vector<1x128xf32> to vector<256x128xf32>
    %5 = arith.addf %2, %4 : vector<256x128xf32>
    %c0_5 = arith.constant 0 : index
    %c0_6 = arith.constant 0 : index
    %6 = vector.load %arg5[%c0_5, %c0_6] : memref<256x128xf32, #tpu.memory_space<vmem>>, vector<256x128xf32>
    %7 = arith.addf %5, %6 : vector<256x128xf32>
    %c0_7 = arith.constant 0 : index
    %c0_8 = arith.constant 0 : index
    %8 = vector.load %arg6[%c0_7, %c0_8] : memref<256x128xf32, #tpu.memory_space<vmem>>, vector<256x128xf32>
    tpu.vector_store %arg6[%c0_7, %c0_8], %7 {strides = array<i32>} : memref<256x128xf32, #tpu.memory_space<vmem>>, vector<256x128xf32>,
    return
  }
  func.func @transform_0(%arg0: i32, %arg1: i32) -> (i32, i32) {
    %c0_i32 = arith.constant 0 : i32
    %c0_i32_0 = arith.constant 0 : i32
    return %arg0, %c0_i32 : i32, i32
  }
  func.func @transform_1(%arg0: i32, %arg1: i32) -> (i32, i32) {
    %c0_i32 = arith.constant 0 : i32
    %c0_i32_0 = arith.constant 0 : i32
    return %c0_i32, %arg1 : i32, i32
  }
  func.func @transform_2(%arg0: i32, %arg1: i32) -> (i32, i32) {
    %c0_i32 = arith.constant 0 : i32
    %c0_i32_0 = arith.constant 0 : i32
    return %c0_i32, %arg1 : i32, i32
  }
  func.func @transform_3(%arg0: i32, %arg1: i32) -> (i32, i32) {
    %c0_i32 = arith.constant 0 : i32
    return %arg0, %arg1 : i32, i32
  }
  func.func @transform_4(%arg0: i32, %arg1: i32) -> (i32, i32) {
    %c0_i32 = arith.constant 0 : i32
    return %arg0, %arg1 : i32, i32
  }
}

module attributes {stable_mosaic.version = 11 : i64} {
  func.func @_head_nll_kernel(%arg0: i32, %arg1: memref<256x128xf32, #tpu.memory_space<vmem>>, %arg2: memref<128x128xbf16, #tpu.memory_space<vmem>>, %arg3: memref<1x128xf32, #tpu.memory_space<vmem>>, %arg4: memref<128x128xbf16, #tpu.memory_space<vmem>>, %arg5: memref<1x128xf32, #tpu.memory_space<vmem>>, %arg6: memref<128x128xbf16, #tpu.memory_space<vmem>>, %arg7: memref<1x128xf32, #tpu.memory_space<vmem>>, %arg8: memref<256x128xf32, #tpu.memory_space<vmem>>, %arg9: memref<1x1xf32, #tpu.memory_space<smem>>) attributes {dimension_semantics = [#tpu.dimension_semantics<arbitrary>], iteration_bounds = array<i64: 2>, scalar_prefetch = 0 : i64, scratch_operands = 0 : i64, tpu.core_type = #tpu.core_type<tc>, window_params = [{transform_indices = @transform_0, window_bounds = array<i64: 256, 128>}, {pipeline_mode = #tpu.pipeline_mode<synchronous>, transform_indices = @transform_1, window_bounds = array<i64: 128, 128>}, {pipeline_mode = #tpu.pipeline_mode<synchronous>, transform_indices = @transform_2, window_bounds = array<i64: 1, 128>}, {pipeline_mode = #tpu.pipeline_mode<synchronous>, transform_indices = @transform_3, window_bounds = array<i64: 128, 128>}, {pipeline_mode = #tpu.pipeline_mode<synchronous>, transform_indices = @transform_4, window_bounds = array<i64: 1, 128>}, {pipeline_mode = #tpu.pipeline_mode<synchronous>, transform_indices = @transform_5, window_bounds = array<i64: 128, 128>}, {pipeline_mode = #tpu.pipeline_mode<synchronous>, transform_indices = @transform_6, window_bounds = array<i64: 1, 128>}, {transform_indices = @transform_7, window_bounds = array<i64: 256, 128>}, {transform_indices = @transform_8, window_bounds = array<i64: 1, 1>}]} {
    %c0_i32 = arith.constant 0 : i32
    %0 = arith.cmpi eq, %arg0, %c0_i32 : i32
    %1 = arith.extui %0 : i1 to i32
    %c0_i32_0 = arith.constant 0 : i32
    %2 = arith.cmpi ne, %1, %c0_i32_0 : i32
    scf.if %2 {
      %cst_28 = arith.constant 0.000000e+00 : f32
      %c0_29 = arith.constant 0 : index
      %c0_30 = arith.constant 0 : index
      %54 = memref.load %arg9[%c0_29, %c0_30] : memref<1x1xf32, #tpu.memory_space<smem>>
      memref.store %cst_28, %arg9[%c0_29, %c0_30] : memref<1x1xf32, #tpu.memory_space<smem>>
    } else {
    }
    %c0 = arith.constant 0 : index
    %c0_1 = arith.constant 0 : index
    %3 = vector.load %arg1[%c0, %c0_1] : memref<256x128xf32, #tpu.memory_space<vmem>>, vector<256x128xf32>
    %4 = arith.truncf %3 : vector<256x128xf32> to vector<256x128xbf16>
    %c0_2 = arith.constant 0 : index
    %c0_3 = arith.constant 0 : index
    %5 = vector.load %arg2[%c0_2, %c0_3] : memref<128x128xbf16, #tpu.memory_space<vmem>>, vector<128x128xbf16>
    %cst = arith.constant dense<0.000000e+00> : vector<256x128xf32>
    %6 = tpu.matmul %4, %5, %cst {dimension_numbers = #tpu.dot_dimension_numbers<[1], [0], [0], [1], [0, 0, 1, 1], [], []>} : vector<256x128xbf16>, vector<128x128xbf16>, vector<256x128xf32> -> vector<256x128xf32>
    %c0_4 = arith.constant 0 : index
    %c0_5 = arith.constant 0 : index
    %7 = vector.load %arg3[%c0_4, %c0_5] : memref<1x128xf32, #tpu.memory_space<vmem>>, vector<1x128xf32>
    %8 = vector.broadcast %7 : vector<1x128xf32> to vector<256x128xf32>
    %9 = arith.addf %6, %8 : vector<256x128xf32>
    %cst_6 = arith.constant 0.000000e+00 : f32
    %10 = vector.broadcast %cst_6 : f32 to vector<256x128xf32>
    %11 = arith.maximumf %9, %10 : vector<256x128xf32>
    %12 = arith.truncf %11 : vector<256x128xf32> to vector<256x128xbf16>
    %c0_7 = arith.constant 0 : index
    %c0_8 = arith.constant 0 : index
    %13 = vector.load %arg4[%c0_7, %c0_8] : memref<128x128xbf16, #tpu.memory_space<vmem>>, vector<128x128xbf16>
    %cst_9 = arith.constant dense<0.000000e+00> : vector<256x128xf32>
    %14 = tpu.matmul %12, %13, %cst_9 {dimension_numbers = #tpu.dot_dimension_numbers<[1], [0], [0], [1], [0, 0, 1, 1], [], []>} : vector<256x128xbf16>, vector<128x128xbf16>, vector<256x128xf32> -> vector<256x128xf32>
    %c0_10 = arith.constant 0 : index
    %c0_11 = arith.constant 0 : index
    %15 = vector.load %arg5[%c0_10, %c0_11] : memref<1x128xf32, #tpu.memory_space<vmem>>, vector<1x128xf32>
    %16 = vector.broadcast %15 : vector<1x128xf32> to vector<256x128xf32>
    %17 = arith.addf %14, %16 : vector<256x128xf32>
    %c0_12 = arith.constant 0 : index
    %c0_13 = arith.constant 0 : index
    %18 = vector.load %arg6[%c0_12, %c0_13] : memref<128x128xbf16, #tpu.memory_space<vmem>>, vector<128x128xbf16>
    %cst_14 = arith.constant dense<0.000000e+00> : vector<256x128xf32>
    %19 = tpu.matmul %12, %18, %cst_14 {dimension_numbers = #tpu.dot_dimension_numbers<[1], [0], [0], [1], [0, 0, 1, 1], [], []>} : vector<256x128xbf16>, vector<128x128xbf16>, vector<256x128xf32> -> vector<256x128xf32>
    %c0_15 = arith.constant 0 : index
    %c0_16 = arith.constant 0 : index
    %20 = vector.load %arg7[%c0_15, %c0_16] : memref<1x128xf32, #tpu.memory_space<vmem>>, vector<1x128xf32>
    %21 = vector.broadcast %20 : vector<1x128xf32> to vector<256x128xf32>
    %22 = arith.addf %19, %21 : vector<256x128xf32>
    %c0_17 = arith.constant 0 : index
    %c0_18 = arith.constant 0 : index
    %23 = vector.load %arg8[%c0_17, %c0_18] : memref<256x128xf32, #tpu.memory_space<vmem>>, vector<256x128xf32>
    %24 = tpu.iota {dimensions = array<i32: 1>} : vector<256x128xi32>
    %25 = tpu.iota {dimensions = array<i32: 0>} : vector<256x128xi32>
    %c256_i32 = arith.constant 256 : i32
    %26 = arith.muli %arg0, %c256_i32 : i32
    %27 = vector.broadcast %26 : i32 to vector<256x128xi32>
    %28 = arith.addi %25, %27 : vector<256x128xi32>
    %c10_i32 = arith.constant 10 : i32
    %29 = vector.broadcast %c10_i32 : i32 to vector<256x128xi32>
    %30 = arith.cmpi slt, %24, %29 : vector<256x128xi32>
    %c512_i32 = arith.constant 512 : i32
    %31 = vector.broadcast %c512_i32 : i32 to vector<256x128xi32>
    %32 = arith.cmpi slt, %28, %31 : vector<256x128xi32>
    %33 = arith.andi %30, %32 : vector<256x128xi1>
    %34 = arith.subf %23, %17 : vector<256x128xf32>
    %cst_19 = arith.constant 0.000000e+00 : f32
    %35 = vector.broadcast %cst_19 : f32 to vector<256x128xf32>
    %36 = arith.subf %35, %22 : vector<256x128xf32>
    %37 = math.exp %36 : vector<256x128xf32>
    %38 = arith.mulf %34, %37 : vector<256x128xf32>
    %cst_20 = arith.constant 5.000000e-01 : f32
    %39 = vector.broadcast %cst_20 : f32 to vector<256x128xf32>
    %40 = arith.mulf %39, %38 : vector<256x128xf32>
    %41 = arith.mulf %40, %38 : vector<256x128xf32>
    %42 = arith.addf %22, %41 : vector<256x128xf32>
    %cst_21 = arith.constant 0.918938517 : f32
    %43 = vector.broadcast %cst_21 : f32 to vector<256x128xf32>
    %44 = arith.addf %42, %43 : vector<256x128xf32>
    %c0_22 = arith.constant 0 : index
    %c0_23 = arith.constant 0 : index
    %45 = memref.load %arg9[%c0_22, %c0_23] : memref<1x1xf32, #tpu.memory_space<smem>>
    %cst_24 = arith.constant 0.000000e+00 : f32
    %46 = vector.broadcast %cst_24 : f32 to vector<256x128xf32>
    %47 = arith.select %33, %44, %46 : vector<256x128xi1>, vector<256x128xf32>
    %48 = vector.shape_cast %47 : vector<256x128xf32> to vector<1x256x128xf32>
    %cst_25 = arith.constant dense<0.000000e+00> : vector<1xf32>
    %49 = vector.multi_reduction <add>, %48, %cst_25 [1, 2] : vector<1x256x128xf32> to vector<1xf32>
    %50 = vector.shape_cast %49 : vector<1xf32> to vector<1x1x1xf32>
    %51 = vector.extract %50[0, 0, 0] : f32 from vector<1x1x1xf32>
    %52 = arith.addf %45, %51 : f32
    %c0_26 = arith.constant 0 : index
    %c0_27 = arith.constant 0 : index
    %53 = memref.load %arg9[%c0_26, %c0_27] : memref<1x1xf32, #tpu.memory_space<smem>>
    memref.store %52, %arg9[%c0_26, %c0_27] : memref<1x1xf32, #tpu.memory_space<smem>>
    return
  }
  func.func @transform_0(%arg0: i32) -> (i32, i32) {
    %c0_i32 = arith.constant 0 : i32
    %c0_i32_0 = arith.constant 0 : i32
    return %arg0, %c0_i32 : i32, i32
  }
  func.func @transform_1(%arg0: i32) -> (i32, i32) {
    %c0_i32 = arith.constant 0 : i32
    %c0_i32_0 = arith.constant 0 : i32
    %c0_i32_1 = arith.constant 0 : i32
    return %c0_i32, %c0_i32_0 : i32, i32
  }
  func.func @transform_2(%arg0: i32) -> (i32, i32) {
    %c0_i32 = arith.constant 0 : i32
    %c0_i32_0 = arith.constant 0 : i32
    %c0_i32_1 = arith.constant 0 : i32
    return %c0_i32, %c0_i32_0 : i32, i32
  }
  func.func @transform_3(%arg0: i32) -> (i32, i32) {
    %c0_i32 = arith.constant 0 : i32
    %c0_i32_0 = arith.constant 0 : i32
    %c0_i32_1 = arith.constant 0 : i32
    return %c0_i32, %c0_i32_0 : i32, i32
  }
  func.func @transform_4(%arg0: i32) -> (i32, i32) {
    %c0_i32 = arith.constant 0 : i32
    %c0_i32_0 = arith.constant 0 : i32
    %c0_i32_1 = arith.constant 0 : i32
    return %c0_i32, %c0_i32_0 : i32, i32
  }
  func.func @transform_5(%arg0: i32) -> (i32, i32) {
    %c0_i32 = arith.constant 0 : i32
    %c0_i32_0 = arith.constant 0 : i32
    %c0_i32_1 = arith.constant 0 : i32
    return %c0_i32, %c0_i32_0 : i32, i32
  }
  func.func @transform_6(%arg0: i32) -> (i32, i32) {
    %c0_i32 = arith.constant 0 : i32
    %c0_i32_0 = arith.constant 0 : i32
    %c0_i32_1 = arith.constant 0 : i32
    return %c0_i32, %c0_i32_0 : i32, i32
  }
  func.func @transform_7(%arg0: i32) -> (i32, i32) {
    %c0_i32 = arith.constant 0 : i32
    %c0_i32_0 = arith.constant 0 : i32
    return %arg0, %c0_i32 : i32, i32
  }
  func.func @transform_8(%arg0: i32) -> (i32, i32) {
    %c0_i32 = arith.constant 0 : i32
    %c0_i32_0 = arith.constant 0 : i32
    %c0_i32_1 = arith.constant 0 : i32
    return %c0_i32, %c0_i32_0 : i32, i32
  }
}

</mosaic_0001>

<llo_original>
// kernel: _lambda_.6
$region0: #{_lambda_.6}
  #allocation0 [shape = 'u32[]', space=smem, size = 0x4, offset = 0x4, fixed_abs, tag = 'smem constant byte address 0x4 - core index']
  #allocation1 [shape = 'u32[144,128]{1,0:T(1,128)}', space=vmem, size = 0x12000, scoped, tag = 'internal scratch']
  %s0 = inlined_call_operand.vmem [shape: bf16[512,128], index: 0, kind: input, shape index: {}]
  %s1 = inlined_call_operand.vmem [shape: bf16[128,128], index: 1, kind: input, shape index: {}]
  %s2 = inlined_call_operand.vmem [shape: f32[1,128], index: 2, kind: input, shape index: {}]
  %s3 = inlined_call_operand.vmem [shape: f32[512,128], index: 3, kind: output, shape index: {}]
  %s4 = sld [smem:[#allocation0]]
  $region45: #{_lambda_.6} parent=0
    _
  %s6 = ssub.s32 1, %s4
  %s7 = scalar_select 0, %s6, %s4
  loop: start=0, step=1, limit=4
  $region2: #{_lambda_.6} parent=0 // loop_pre_header
    _
  $region3: #{_lambda_.6} parent=0 // loop_header
    %s9 = sphi 0, %s13
    %p10 = scmp.ge.s32.totalorder %s9, 4
    %s16 = sphi 0, %s28
    %s17 = sphi 0, %s24
    %s18 = sphi 0, %s16
    %s19 = sphi 0, %s17
    %s20 = sphi 0, %s18
    %s21 = sphi 0, %s19
    %s31 = sphi 0, %s33
    %s34 = sphi 0, %s31
    %s35 = sphi 0, %s34
    %s51 = sphi 0, %s35
    %s57 = sphi 0, %s59
    %s60 = sphi 0, %s57
    %s61 = sphi 0, %s60
    %s77 = sphi 0, %s61
    %s83 = sphi 0, %s85
    %s86 = sphi 0, %s83
    %s87 = sphi 0, %s86
    %s103 = sphi 0, %s87
    %s111 = sphi 0, %s113
    %s114 = sphi 0, %s111
    %s115 = sphi 0, %s114
    %s131 = sphi 0, %s115
  $region4: #{_lambda_.6} parent=0 // loop_header_branch
    %12 = sbr.rel (%p10) target = $region8
  $region5: #{_lambda_.6} parent=0 // loop_body
    %s14 = ssub.s32 %s9, 1
    %s15 = ssub.s32 %s9, 2
    %s22 = sadd.s32 1, %s17
    %p23 = scmp.ge.s32.totalorder %s22, 1
    %s24 = scalar_select %p23, 0, %s22
    %s25 = sadd.s32 1, %s16
    %s26 = scalar_select %p23, %s25, %s16
    %p27 = scmp.ge.s32.totalorder %s26, 2
    %s28 = scalar_select %p27, 0, %s26
    %s29 = ssub.s32 %s16, %s28
    %p30 = scmp.eq.s32.totalorder %s29, 0
    %s32 = sadd.s32 %s31, 1
    %s33 = scalar_select %p30, %s31, %s32
    %p36 = pneg %p30
    %p37 = scmp.eq.s32.totalorder %s9, 1
    %p38 = por %p36, %p37
    %p39 = scmp.ne.s32.totalorder %s31, %s34
    %p40 = scmp.eq.s32.totalorder %s9, 0
    %p41 = por %p39, %p40
    %p42 = scmp.ne.s32.totalorder %s31, %s34
    %p43 = scmp.eq.s32.totalorder %s14, 1
    %p44 = por %p42, %p43
    %p45 = scmp.ne.s32.totalorder %s34, %s35
    %p46 = scmp.eq.s32.totalorder %s14, 0
    %p47 = por %p45, %p46
    %p48 = scmp.ne.s32.totalorder %s34, %s35
    %p49 = scmp.eq.s32.totalorder %s15, 1
    %p50 = por %p48, %p49
    %p52 = scmp.ne.s32.totalorder %s35, %s51
    %p53 = scmp.eq.s32.totalorder %s15, 0
    %p54 = por %p52, %p53
    %s55 = ssub.s32 %s17, %s24
    %p56 = scmp.eq.s32.totalorder %s55, 0
    %s58 = sadd.s32 %s57, 1
    %s59 = scalar_select %p56, %s57, %s58
    %p62 = pneg %p56
    %p63 = scmp.eq.s32.totalorder %s9, 1
    %p64 = por %p62, %p63
    %p65 = scmp.ne.s32.totalorder %s57, %s60
    %p66 = scmp.eq.s32.totalorder %s9, 0
    %p67 = por %p65, %p66
    %p68 = scmp.ne.s32.totalorder %s57, %s60
    %p69 = scmp.eq.s32.totalorder %s14, 1
    %p70 = por %p68, %p69
    %p71 = scmp.ne.s32.totalorder %s60, %s61
    %p72 = scmp.eq.s32.totalorder %s14, 0
    %p73 = por %p71, %p72
    %p74 = scmp.ne.s32.totalorder %s60, %s61
    %p75 = scmp.eq.s32.totalorder %s15, 1
    %p76 = por %p74, %p75
    %p78 = scmp.ne.s32.totalorder %s61, %s77
    %p79 = scmp.eq.s32.totalorder %s15, 0
    %p80 = por %p78, %p79
    %s81 = ssub.s32 %s17, %s24
    %p82 = scmp.eq.s32.totalorder %s81, 0
    %s84 = sadd.s32 %s83, 1
    %s85 = scalar_select %p82, %s83, %s84
    %p88 = pneg %p82
    %p89 = scmp.eq.s32.totalorder %s9, 1
    %p90 = por %p88, %p89
    %p91 = scmp.ne.s32.totalorder %s83, %s86
    %p92 = scmp.eq.s32.totalorder %s9, 0
    %p93 = por %p91, %p92
    %p94 = scmp.ne.s32.totalorder %s83, %s86
    %p95 = scmp.eq.s32.totalorder %s14, 1
    %p96 = por %p94, %p95
    %p97 = scmp.ne.s32.totalorder %s86, %s87
    %p98 = scmp.eq.s32.totalorder %s14, 0
    %p99 = por %p97, %p98
    %p100 = scmp.ne.s32.totalorder %s86, %s87
    %p101 = scmp.eq.s32.totalorder %s15, 1
    %p102 = por %p100, %p101
    %p104 = scmp.ne.s32.totalorder %s87, %s103
    %p105 = scmp.eq.s32.totalorder %s15, 0
    %p106 = por %p104, %p105
    %s107 = ssub.s32 %s16, %s28
    %s108 = ssub.s32 %s17, %s24
    %s109 = sor.u32 %s107, %s108
    %p110 = scmp.eq.s32.totalorder %s109, 0
    %s112 = sadd.s32 %s111, 1
    %s113 = scalar_select %p110, %s111, %s112
    %p116 = pneg %p110
    %p117 = scmp.eq.s32.totalorder %s9, 1
    %p118 = por %p116, %p117
    %p119 = scmp.ne.s32.totalorder %s111, %s114
    %p120 = scmp.eq.s32.totalorder %s9, 0
    %p121 = por %p119, %p120
    %p122 = scmp.ne.s32.totalorder %s111, %s114
    %p123 = scmp.eq.s32.totalorder %s14, 1
    %p124 = por %p122, %p123
    %p125 = scmp.ne.s32.totalorder %s114, %s115
    %p126 = scmp.eq.s32.totalorder %s14, 0
    %p127 = por %p125, %p126
    %p128 = scmp.ne.s32.totalorder %s114, %s115
    %p129 = scmp.eq.s32.totalorder %s15, 1
    %p130 = por %p128, %p129
    %p132 = scmp.ne.s32.totalorder %s115, %s131
    %p133 = scmp.eq.s32.totalorder %s15, 0
    %p134 = por %p132, %p133
    %p135 = scmp.le.s32.totalorder 1, %s9
    %p136 = scmp.lt.s32.totalorder %s9, 3
    %p137 = pnand %p135, %p136
    %p138 = pneg %p137
    // Predicated region
    $region9: #{_lambda_.6} parent=5 // pred_check
      _
    $region10: #{_lambda_.6} parent=5 // pred_check_branch
      %140 = sbr.rel (%p137) target = $region12
    $region11: #{_lambda_.6} parent=5 // pred_region
      %s141 = ssub.s32 %s9, 1
      // Predicated region
      $region13: #{_lambda_.6} parent=11 // pred_check
        %p142 = pneg %p73
      $region14: #{_lambda_.6} parent=11 // pred_check_branch
        %144 = sbr.rel (%p142) target = $region16
      $region15: #{_lambda_.6} parent=11 // pred_region
        %p145 = scmp.lt.s32.totalorder %s19, 0
        %s146 = scalar_select %p145, %s19, 0
        %s147 = smul.addr %s146, 4
        %s148 = scalar_lea.vmem %s1, %s147
      $region16: #{_lambda_.6} parent=11 // pred_fallthru
        _
      // Predicated region
      $region17: #{_lambda_.6} parent=11 // pred_check
        %p149 = pneg %p99
      $region18: #{_lambda_.6} parent=11 // pred_check_branch
        %151 = sbr.rel (%p149) target = $region20
      $region19: #{_lambda_.6} parent=11 // pred_region
        %p152 = scmp.lt.s32.totalorder %s19, 0
        %s153 = scalar_select %p152, %s19, 0
        %s154 = scalar_lea.vmem %s2, %s153
      $region20: #{_lambda_.6} parent=11 // pred_fallthru
        _
    $region12: #{_lambda_.6} parent=5 // pred_fallthru
      _
    %p155 = scmp.lt.s32.totalorder %s9, 2
    // Predicated region
    $region21: #{_lambda_.6} parent=5 // pred_check
      %p156 = pneg %p155
    $region22: #{_lambda_.6} parent=5 // pred_check_branch
      %158 = sbr.rel (%p156) target = $region24
    $region23: #{_lambda_.6} parent=5 // pred_region
      // Predicated region
      $region25: #{_lambda_.6} parent=23 // pred_check
        %p159 = pneg %p41
      $region26: #{_lambda_.6} parent=23 // pred_check_branch
        %161 = sbr.rel (%p159) target = $region28
      $region27: #{_lambda_.6} parent=23 // pred_region
        %s162 = smul.u32 32, %s16
        %p163 = scmp.lt.s32.totalorder %s162, 63
        %s164 = scalar_select %p163, %s162, 63
        %s165 = smul.addr %s164, 4
        %s166 = scalar_lea.vmem %s0, %s165
        %s167 = smul.u32 32, %s16
      $region28: #{_lambda_.6} parent=23 // pred_fallthru
        _
    $region24: #{_lambda_.6} parent=5 // pred_fallthru
      _
    %p168 = scmp.le.s32.totalorder 1, %s9
    %p169 = scmp.lt.s32.totalorder %s9, 3
    %p170 = pnand %p168, %p169
    %p171 = pneg %p170
    // Predicated region
    $region29: #{_lambda_.6} parent=5 // pred_check
      _
    $region30: #{_lambda_.6} parent=5 // pred_check_branch
      %173 = sbr.rel (%p170) target = $region32
    $region31: #{_lambda_.6} parent=5 // pred_region
      %s174 = ssub.s32 %s9, 1
      %s175 = smul.u32 32, %s18
      %p176 = scmp.lt.s32.totalorder %s175, 63
      %s177 = scalar_select %p176, %s175, 63
      %s178 = smul.addr %s177, 4
      %s179 = scalar_lea.vmem %s0, %s178
      %p180 = pneg %p47
      %p181 = pneg %p44
      %p182 = scmp.lt.s32.totalorder %s19, 0
      %s183 = scalar_select %p182, %s19, 0
      %s184 = smul.addr %s183, 4
      %s185 = scalar_lea.vmem %s1, %s184
      %p186 = pneg %p73
      %p187 = pneg %p70
      %p188 = scmp.lt.s32.totalorder %s19, 0
      %s189 = scalar_select %p188, %s19, 0
      %s190 = scalar_lea.vmem %s2, %s189
      %p191 = pneg %p99
      %p192 = pneg %p96
      %p193 = pneg %p127
      %p194 = pneg %p124
      %s195 = smul.u32 32, %s18
      %p196 = scmp.lt.s32.totalorder %s195, 63
      %s197 = scalar_select %p196, %s195, 63
      %p198 = scmp.lt.s32.totalorder %s19, 0
      %s199 = scalar_select %p198, %s19, 0
      %s200 = sadd.s32 %s199, %s197
      %s201 = smul.addr %s200, 8
      %s202 = scalar_lea.vmem %s3, %s201
      %s203 = smul.u32 32, %s18
      %p204 = scmp.lt.s32.totalorder %s203, 63
      %s205 = scalar_select %p204, %s203, 63
      %s206 = smul.addr %s205, 4
      %s207 = scalar_lea.vmem %s0, %s206
      %s208 = smul.u32 32, %s18
      %p209 = scmp.lt.s32.totalorder %s19, 0
      %s210 = scalar_select %p209, %s19, 0
      %s211 = smul.addr %s210, 4
      %s212 = scalar_lea.vmem %s1, %s211
      %p213 = scmp.lt.s32.totalorder %s19, 0
      %s214 = scalar_select %p213, %s19, 0
      %s215 = scalar_lea.vmem %s2, %s214
      %s216 = smul.u32 32, %s18
      %p217 = scmp.lt.s32.totalorder %s216, 63
      %s218 = scalar_select %p217, %s216, 63
      %p219 = scmp.lt.s32.totalorder %s19, 0
      %s220 = scalar_select %p219, %s19, 0
      %s221 = sadd.s32 %s220, %s218
      %s222 = smul.addr %s221, 8
      %s223 = scalar_lea.vmem %s3, %s222
      %s224 = smul.u32 32, %s18
      %v226 = vld [vmem:[%s207] sm:$0xf]
      %v227 = vld [vmem:[%s207 + $0x4] sm:$0xf]
      %v228 = vld [vmem:[%s207 + $0x8] sm:$0xf]
      %v229 = vld [vmem:[%s207 + $0xc] sm:$0xf]
      %v230 = vld [vmem:[%s207 + $0x10] sm:$0xf]
      %v231 = vld [vmem:[%s207 + $0x14] sm:$0xf]
      %v232 = vld [vmem:[%s207 + $0x18] sm:$0xf]
      %v233 = vld [vmem:[%s207 + $0x1c] sm:$0xf]
      %v234 = vld [vmem:[%s207 + $0x20] sm:$0xf]
      %v235 = vld [vmem:[%s207 + $0x24] sm:$0xf]
      %v236 = vld [vmem:[%s207 + $0x28] sm:$0xf]
      %v237 = vld [vmem:[%s207 + $0x2c] sm:$0xf]
      %v238 = vld [vmem:[%s207 + $0x30] sm:$0xf]
      %v239 = vld [vmem:[%s207 + $0x34] sm:$0xf]
      %v240 = vld [vmem:[%s207 + $0x38] sm:$0xf]
      %v241 = vld [vmem:[%s207 + $0x3c] sm:$0xf]
      %v242 = vld [vmem:[%s207 + $0x40] sm:$0xf]
      %v243 = vld [vmem:[%s207 + $0x44] sm:$0xf]
      %v244 = vld [vmem:[%s207 + $0x48] sm:$0xf]
      %v245 = vld [vmem:[%s207 + $0x4c] sm:$0xf]
      %v246 = vld [vmem:[%s207 + $0x50] sm:$0xf]
      %v247 = vld [vmem:[%s207 + $0x54] sm:$0xf]
      %v248 = vld [vmem:[%s207 + $0x58] sm:$0xf]
      %v249 = vld [vmem:[%s207 + $0x5c] sm:$0xf]
      %v250 = vld [vmem:[%s207 + $0x60] sm:$0xf]
      %v251 = vld [vmem:[%s207 + $0x64] sm:$0xf]
      %v252 = vld [vmem:[%s207 + $0x68] sm:$0xf]
      %v253 = vld [vmem:[%s207 + $0x6c] sm:$0xf]
      %v254 = vld [vmem:[%s207 + $0x70] sm:$0xf]
      %v255 = vld [vmem:[%s207 + $0x74] sm:$0xf]
      %v256 = vld [vmem:[%s207 + $0x78] sm:$0xf]
      %v257 = vld [vmem:[%s207 + $0x7c] sm:$0xf]
      %v258 = vld [vmem:[%s212] sm:$0xf]
      %v259 = vld [vmem:[%s212 + $0x4] sm:$0xf]
      %v260 = vld [vmem:[%s212 + $0x8] sm:$0xf]
      %v261 = vld [vmem:[%s212 + $0xc] sm:$0xf]
      %v262 = vld [vmem:[%s212 + $0x10] sm:$0xf]
      %v263 = vld [vmem:[%s212 + $0x14] sm:$0xf]
      %v264 = vld [vmem:[%s212 + $0x18] sm:$0xf]
      %v265 = vld [vmem:[%s212 + $0x1c] sm:$0xf]
      %v266 = vld [vmem:[%s212 + $0x20] sm:$0xf]
      %v267 = vld [vmem:[%s212 + $0x24] sm:$0xf]
      %v268 = vld [vmem:[%s212 + $0x28] sm:$0xf]
      %v269 = vld [vmem:[%s212 + $0x2c] sm:$0xf]
      %v270 = vld [vmem:[%s212 + $0x30] sm:$0xf]
      %v271 = vld [vmem:[%s212 + $0x34] sm:$0xf]
      %v272 = vld [vmem:[%s212 + $0x38] sm:$0xf]
      %v273 = vld [vmem:[%s212 + $0x3c] sm:$0xf]
      %v274 = vld [vmem:[%s215] sm:$0x1]
      %v276 = vlaneseq
      %v277 = vshrl.u32 %v276, 7
      %v278 = vsub.s32 0, %v277
      %v279 = vrot.slane %v274, %v278
      %v313 = vunpack.c.l.b16 %v226
      %v314 = vunpack.c.l.b16 %v227
      %v315 = vunpack.c.l.b16 %v228
      %v316 = vunpack.c.l.b16 %v229
      %v317 = vunpack.c.l.b16 %v230
      %v318 = vunpack.c.l.b16 %v231
      %v319 = vunpack.c.l.b16 %v232
      %v320 = vunpack.c.l.b16 %v233
      %v321 = vunpack.c.l.b16 %v234
      %v322 = vunpack.c.l.b16 %v235
      %v323 = vunpack.c.l.b16 %v236
      %v324 = vunpack.c.l.b16 %v237
      %v325 = vunpack.c.l.b16 %v238
      %v326 = vunpack.c.l.b16 %v239
      %v327 = vunpack.c.l.b16 %v240
      %v328 = vunpack.c.l.b16 %v241
      %v329 = vunpack.c.l.b16 %v242
      %v330 = vunpack.c.l.b16 %v243
      %v331 = vunpack.c.l.b16 %v244
      %v332 = vunpack.c.l.b16 %v245
      %v333 = vunpack.c.l.b16 %v246
      %v334 = vunpack.c.l.b16 %v247
      %v335 = vunpack.c.l.b16 %v248
      %v336 = vunpack.c.l.b16 %v249
      %v337 = vunpack.c.l.b16 %v250
      %v338 = vunpack.c.l.b16 %v251
      %v339 = vunpack.c.l.b16 %v252
      %v340 = vunpack.c.l.b16 %v253
      %v341 = vunpack.c.l.b16 %v254
      %v342 = vunpack.c.l.b16 %v255
      %v343 = vunpack.c.l.b16 %v256
      %v344 = vunpack.c.l.b16 %v257
      %v345 = vpack.c.b16 %v314, %v313
      %v346 = vpack.c.b16 %v316, %v315
      %v347 = vpack.c.b16 %v318, %v317
      %v348 = vpack.c.b16 %v320, %v319
      %v349 = vpack.c.b16 %v322, %v321
      %v350 = vpack.c.b16 %v324, %v323
      %v351 = vpack.c.b16 %v326, %v325
      %v352 = vpack.c.b16 %v328, %v327
      %v353 = vpack.c.b16 %v330, %v329
      %v354 = vpack.c.b16 %v332, %v331
      %v355 = vpack.c.b16 %v334, %v333
      %v356 = vpack.c.b16 %v336, %v335
      %v357 = vpack.c.b16 %v338, %v337
      %v358 = vpack.c.b16 %v340, %v339
      %v359 = vpack.c.b16 %v342, %v341
      %v360 = vpack.c.b16 %v344, %v343
      %v393 = vunpack.c.l.b16 %v258
      %v394 = vunpack.c.l.b16 %v259
      %v395 = vunpack.c.l.b16 %v260
      %v396 = vunpack.c.l.b16 %v261
      %v397 = vunpack.c.l.b16 %v262
      %v398 = vunpack.c.l.b16 %v263
      %v399 = vunpack.c.l.b16 %v264
      %v400 = vunpack.c.l.b16 %v265
      %v401 = vunpack.c.l.b16 %v266
      %v402 = vunpack.c.l.b16 %v267
      %v403 = vunpack.c.l.b16 %v268
      %v404 = vunpack.c.l.b16 %v269
      %v405 = vunpack.c.l.b16 %v270
      %v406 = vunpack.c.l.b16 %v271
      %v407 = vunpack.c.l.b16 %v272
      %v408 = vunpack.c.l.b16 %v273
      %v409 = vpack.c.b16 %v394, %v393
      %v410 = vpack.c.b16 %v396, %v395
      %v411 = vpack.c.b16 %v398, %v397
      %v412 = vpack.c.b16 %v400, %v399
      %v413 = vpack.c.b16 %v402, %v401
      %v414 = vpack.c.b16 %v404, %v403
      %v415 = vpack.c.b16 %v406, %v405
      %v416 = vpack.c.b16 %v408, %v407
      %425 = vmatprep.subr.bf16.mxu0 0
      %426 = vmatpush1.bf16.msra.mxu0 %v409
      %427 = vmatprep.subr.bf16.mxu0 0
      %428 = vmatpush1.bf16.msra.mxu0 %v410
      %429 = vmatprep.subr.bf16.mxu0 0
      %430 = vmatpush1.bf16.msra.mxu0 %v411
      %431 = vmatprep.subr.bf16.mxu0 0
      %432 = vmatpush1.bf16.msra.mxu0 %v412
      %433 = vmatprep.subr.bf16.mxu0 0
      %434 = vmatpush1.bf16.msra.mxu0 %v413
      %435 = vmatprep.subr.bf16.mxu0 0
      %436 = vmatpush1.bf16.msra.mxu0 %v414
      %437 = vmatprep.subr.bf16.mxu0 0
      %438 = vmatpush1.bf16.msra.mxu0 %v415
      %439 = vmatprep.subr.bf16.mxu0 0
      %440 = vmatpush1.bf16.msra.mxu0 %v416
      %441 = vmatprep.subr.bf16.mxu0 0
      %442 = vmatpush1.bf16.msra.mxu0 0
      %443 = vmatprep.subr.bf16.mxu0 0
      %444 = vmatpush1.bf16.msra.mxu0 0
      %445 = vmatprep.subr.bf16.mxu0 0
      %446 = vmatpush1.bf16.msra.mxu0 0
      %447 = vmatprep.subr.bf16.mxu0 0
      %448 = vmatpush1.bf16.msra.mxu0 0
      %449 = vmatprep.subr.bf16.mxu0 0
      %450 = vmatpush1.bf16.msra.mxu0 0
      %451 = vmatprep.subr.bf16.mxu0 0
      %452 = vmatpush1.bf16.msra.mxu0 0
      %453 = vmatprep.subr.bf16.mxu0 0
      %454 = vmatpush1.bf16.msra.mxu0 0
      %455 = vmatprep.subr.bf16.mxu0 0
      %456 = vmatpush1.bf16.msra.mxu0 0
      %457 = vmatprep.mubr.bf16.mxu0 0
      %458 = vmatmul.mubr.bf16.gmra.mrb[0].mxu0 %v345
      %v459 = vpop.f32.mrb[0].mxu0
      %v460 = vadd.f32 %v279, %v459
      %v461 = vpop.f32.mrb[0].mxu0
      %v462 = vpop.f32.mrb[0].mxu0
      %v463 = vadd.f32 %v279, %v462
      %v464 = vpop.f32.mrb[0].mxu0
      %465 = vmatprep.mubr.bf16.mxu0 0
      %466 = vmatmul.mubr.bf16.gmra.mrb[0].mxu0 %v346
      %v467 = vpop.f32.mrb[0].mxu0
      %v468 = vadd.f32 %v279, %v467
      %v469 = vpop.f32.mrb[0].mxu0
      %v470 = vpop.f32.mrb[0].mxu0
      %v471 = vadd.f32 %v279, %v470
      %v472 = vpop.f32.mrb[0].mxu0
      %473 = vmatprep.mubr.bf16.mxu0 0
      %474 = vmatmul.mubr.bf16.gmra.mrb[0].mxu0 %v347
      %v475 = vpop.f32.mrb[0].mxu0
      %v476 = vadd.f32 %v279, %v475
      %v477 = vpop.f32.mrb[0].mxu0
      %v478 = vpop.f32.mrb[0].mxu0
      %v479 = vadd.f32 %v279, %v478
      %v480 = vpop.f32.mrb[0].mxu0
      %481 = vmatprep.mubr.bf16.mxu0 0
      %482 = vmatmul.mubr.bf16.gmra.mrb[0].mxu0 %v348
      %v483 = vpop.f32.mrb[0].mxu0
      %v484 = vadd.f32 %v279, %v483
      %v485 = vpop.f32.mrb[0].mxu0
      %v486 = vpop.f32.mrb[0].mxu0
      %v487 = vadd.f32 %v279, %v486
      %v488 = vpop.f32.mrb[0].mxu0
      %489 = vmatprep.mubr.bf16.mxu0 0
      %490 = vmatmul.mubr.bf16.gmra.mrb[0].mxu0 %v349
      %v491 = vpop.f32.mrb[0].mxu0
      %v492 = vadd.f32 %v279, %v491
      %v493 = vpop.f32.mrb[0].mxu0
      %v494 = vpop.f32.mrb[0].mxu0
      %v495 = vadd.f32 %v279, %v494
      %v496 = vpop.f32.mrb[0].mxu0
      %497 = vmatprep.mubr.bf16.mxu0 0
      %498 = vmatmul.mubr.bf16.gmra.mrb[0].mxu0 %v350
      %v499 = vpop.f32.mrb[0].mxu0
      %v500 = vadd.f32 %v279, %v499
      %v501 = vpop.f32.mrb[0].mxu0
      %v502 = vpop.f32.mrb[0].mxu0
      %v503 = vadd.f32 %v279, %v502
      %v504 = vpop.f32.mrb[0].mxu0
      %505 = vmatprep.mubr.bf16.mxu0 0
      %506 = vmatmul.mubr.bf16.gmra.mrb[0].mxu0 %v351
      %v507 = vpop.f32.mrb[0].mxu0
      %v508 = vadd.f32 %v279, %v507
      %v509 = vpop.f32.mrb[0].mxu0
      %v510 = vpop.f32.mrb[0].mxu0
      %v511 = vadd.f32 %v279, %v510
      %v512 = vpop.f32.mrb[0].mxu0
      %513 = vmatprep.mubr.bf16.mxu0 0
      %514 = vmatmul.mubr.bf16.gmra.mrb[0].mxu0 %v352
      %v515 = vpop.f32.mrb[0].mxu0
      %v516 = vadd.f32 %v279, %v515
      %v517 = vpop.f32.mrb[0].mxu0
      %v518 = vpop.f32.mrb[0].mxu0
      %v519 = vadd.f32 %v279, %v518
      %v520 = vpop.f32.mrb[0].mxu0
      %521 = vmatprep.mubr.bf16.mxu0 0
      %522 = vmatmul.mubr.bf16.gmra.mrb[0].mxu0 %v353
      %v523 = vpop.f32.mrb[0].mxu0
      %v524 = vadd.f32 %v279, %v523
      %v525 = vpop.f32.mrb[0].mxu0
      %v526 = vpop.f32.mrb[0].mxu0
      %v527 = vadd.f32 %v279, %v526
      %v528 = vpop.f32.mrb[0].mxu0
      %529 = vmatprep.mubr.bf16.mxu0 0
      %530 = vmatmul.mubr.bf16.gmra.mrb[0].mxu0 %v354
      %v531 = vpop.f32.mrb[0].mxu0
      %v532 = vadd.f32 %v279, %v531
      %v533 = vpop.f32.mrb[0].mxu0
      %v534 = vpop.f32.mrb[0].mxu0
      %v535 = vadd.f32 %v279, %v534
      %v536 = vpop.f32.mrb[0].mxu0
      %537 = vmatprep.mubr.bf16.mxu0 0
      %538 = vmatmul.mubr.bf16.gmra.mrb[0].mxu0 %v355
      %v539 = vpop.f32.mrb[0].mxu0
      %v540 = vadd.f32 %v279, %v539
      %v541 = vpop.f32.mrb[0].mxu0
      %v542 = vpop.f32.mrb[0].mxu0
      %v543 = vadd.f32 %v279, %v542
      %v544 = vpop.f32.mrb[0].mxu0
      %545 = vmatprep.mubr.bf16.mxu0 0
      %546 = vmatmul.mubr.bf16.gmra.mrb[0].mxu0 %v356
      %v547 = vpop.f32.mrb[0].mxu0
      %v548 = vadd.f32 %v279, %v547
      %v549 = vpop.f32.mrb[0].mxu0
      %v550 = vpop.f32.mrb[0].mxu0
      %v551 = vadd.f32 %v279, %v550
      %v552 = vpop.f32.mrb[0].mxu0
      %553 = vmatprep.mubr.bf16.mxu0 0
      %554 = vmatmul.mubr.bf16.gmra.mrb[0].mxu0 %v357
      %v555 = vpop.f32.mrb[0].mxu0
      %v556 = vadd.f32 %v279, %v555
      %v557 = vpop.f32.mrb[0].mxu0
      %v558 = vpop.f32.mrb[0].mxu0
      %v559 = vadd.f32 %v279, %v558
      %v560 = vpop.f32.mrb[0].mxu0
      %561 = vmatprep.mubr.bf16.mxu0 0
      %562 = vmatmul.mubr.bf16.gmra.mrb[0].mxu0 %v358
      %v563 = vpop.f32.mrb[0].mxu0
      %v564 = vadd.f32 %v279, %v563
      %v565 = vpop.f32.mrb[0].mxu0
      %v566 = vpop.f32.mrb[0].mxu0
      %v567 = vadd.f32 %v279, %v566
      %v568 = vpop.f32.mrb[0].mxu0
      %569 = vmatprep.mubr.bf16.mxu0 0
      %570 = vmatmul.mubr.bf16.gmra.mrb[0].mxu0 %v359
      %v571 = vpop.f32.mrb[0].mxu0
      %v572 = vadd.f32 %v279, %v571
      %v573 = vpop.f32.mrb[0].mxu0
      %v574 = vpop.f32.mrb[0].mxu0
      %v575 = vadd.f32 %v279, %v574
      %v576 = vpop.f32.mrb[0].mxu0
      %577 = vmatprep.mubr.bf16.mxu0 0
      %578 = vmatmul.mubr.bf16.gmra.mrb[0].mxu0 %v360
      %v579 = vpop.f32.mrb[0].mxu0
      %v580 = vadd.f32 %v279, %v579
      %v581 = vpop.f32.mrb[0].mxu0
      %v582 = vpop.f32.mrb[0].mxu0
      %v583 = vadd.f32 %v279, %v582
      %v584 = vpop.f32.mrb[0].mxu0
      %585 = vdwg.mxu0
      %v586 = vmax.f32 %v460, 0.0
      %v587 = vmax.f32 %v463, 0.0
      %v588 = vmax.f32 %v468, 0.0
      %v589 = vmax.f32 %v471, 0.0
      %v590 = vmax.f32 %v476, 0.0
      %v591 = vmax.f32 %v479, 0.0
      %v592 = vmax.f32 %v484, 0.0
      %v593 = vmax.f32 %v487, 0.0
      %v594 = vmax.f32 %v492, 0.0
      %v595 = vmax.f32 %v495, 0.0
      %v596 = vmax.f32 %v500, 0.0
      %v597 = vmax.f32 %v503, 0.0
      %v598 = vmax.f32 %v508, 0.0
      %v599 = vmax.f32 %v511, 0.0
      %v600 = vmax.f32 %v516, 0.0
      %v601 = vmax.f32 %v519, 0.0
      %v602 = vmax.f32 %v524, 0.0
      %v603 = vmax.f32 %v527, 0.0
      %v604 = vmax.f32 %v532, 0.0
      %v605 = vmax.f32 %v535, 0.0
      %v606 = vmax.f32 %v540, 0.0
      %v607 = vmax.f32 %v543, 0.0
      %v608 = vmax.f32 %v548, 0.0
      %v609 = vmax.f32 %v551, 0.0
      %v610 = vmax.f32 %v556, 0.0
      %v611 = vmax.f32 %v559, 0.0
      %v612 = vmax.f32 %v564, 0.0
      %v613 = vmax.f32 %v567, 0.0
      %v614 = vmax.f32 %v572, 0.0
      %v615 = vmax.f32 %v575, 0.0
      %v616 = vmax.f32 %v580, 0.0
      %v617 = vmax.f32 %v583, 0.0
      %618 = vst [vmem:[%s223] sm:$0xff] %v586
      %619 = vst [vmem:[%s223 + $0x8] sm:$0xff] %v587
      %620 = vst [vmem:[%s223 + $0x10] sm:$0xff] %v588
      %621 = vst [vmem:[%s223 + $0x18] sm:$0xff] %v589
      %622 = vst [vmem:[%s223 + $0x20] sm:$0xff] %v590
      %623 = vst [vmem:[%s223 + $0x28] sm:$0xff] %v591
      %624 = vst [vmem:[%s223 + $0x30] sm:$0xff] %v592
      %625 = vst [vmem:[%s223 + $0x38] sm:$0xff] %v593
      %626 = vst [vmem:[%s223 + $0x40] sm:$0xff] %v594
      %627 = vst [vmem:[%s223 + $0x48] sm:$0xff] %v595
      %628 = vst [vmem:[%s223 + $0x50] sm:$0xff] %v596
      %629 = vst [vmem:[%s223 + $0x58] sm:$0xff] %v597
      %630 = vst [vmem:[%s223 + $0x60] sm:$0xff] %v598
      %631 = vst [vmem:[%s223 + $0x68] sm:$0xff] %v599
      %632 = vst [vmem:[%s223 + $0x70] sm:$0xff] %v600
      %633 = vst [vmem:[%s223 + $0x78] sm:$0xff] %v601
      %634 = vst [vmem:[%s223 + $0x80] sm:$0xff] %v602
      %635 = vst [vmem:[%s223 + $0x88] sm:$0xff] %v603
      %636 = vst [vmem:[%s223 + $0x90] sm:$0xff] %v604
      %637 = vst [vmem:[%s223 + $0x98] sm:$0xff] %v605
      %638 = vst [vmem:[%s223 + $0xa0] sm:$0xff] %v606
      %639 = vst [vmem:[%s223 + $0xa8] sm:$0xff] %v607
      %640 = vst [vmem:[%s223 + $0xb0] sm:$0xff] %v608
      %641 = vst [vmem:[%s223 + $0xb8] sm:$0xff] %v609
      %642 = vst [vmem:[%s223 + $0xc0] sm:$0xff] %v610
      %643 = vst [vmem:[%s223 + $0xc8] sm:$0xff] %v611
      %644 = vst [vmem:[%s223 + $0xd0] sm:$0xff] %v612
      %645 = vst [vmem:[%s223 + $0xd8] sm:$0xff] %v613
      %646 = vst [vmem:[%s223 + $0xe0] sm:$0xff] %v614
      %647 = vst [vmem:[%s223 + $0xe8] sm:$0xff] %v615
      %648 = vst [vmem:[%s223 + $0xf0] sm:$0xff] %v616
      %649 = vst [vmem:[%s223 + $0xf8] sm:$0xff] %v617
      %s650 = smul.u32 32, %s18
      %p651 = scmp.lt.s32.totalorder %s650, 63
      %s652 = scalar_select %p651, %s650, 63
      %p653 = scmp.lt.s32.totalorder %s19, 0
      %s654 = scalar_select %p653, %s19, 0
      %s655 = sadd.s32 %s654, %s652
      %s656 = smul.addr %s655, 8
      %s657 = scalar_lea.vmem %s3, %s656
      // Predicated region
      $region33: #{_lambda_.6} parent=31 // pred_check
        %p658 = pneg %p124
      $region34: #{_lambda_.6} parent=31 // pred_check_branch
        %660 = sbr.rel (%p658) target = $region36
      $region35: #{_lambda_.6} parent=31 // pred_region
        %s661 = smul.u32 32, %s18
      $region36: #{_lambda_.6} parent=31 // pred_fallthru
        _
    $region32: #{_lambda_.6} parent=5 // pred_fallthru
      _
    %p662 = scmp.le.s32.totalorder 2, %s9
    // Predicated region
    $region37: #{_lambda_.6} parent=5 // pred_check
      %p663 = pneg %p662
    $region38: #{_lambda_.6} parent=5 // pred_check_branch
      %665 = sbr.rel (%p663) target = $region40
    $region39: #{_lambda_.6} parent=5 // pred_region
      %s666 = ssub.s32 %s9, 2
      // Predicated region
      $region41: #{_lambda_.6} parent=39 // pred_check
        %p667 = pneg %p130
      $region42: #{_lambda_.6} parent=39 // pred_check_branch
        %669 = sbr.rel (%p667) target = $region44
      $region43: #{_lambda_.6} parent=39 // pred_region
        %s670 = smul.u32 32, %s20
        %p671 = scmp.lt.s32.totalorder %s670, 63
        %s672 = scalar_select %p671, %s670, 63
        %p673 = scmp.lt.s32.totalorder %s21, 0
        %s674 = scalar_select %p673, %s21, 0
        %s675 = sadd.s32 %s674, %s672
        %s676 = smul.addr %s675, 8
        %s677 = scalar_lea.vmem %s3, %s676
      $region44: #{_lambda_.6} parent=39 // pred_fallthru
        _
    $region40: #{_lambda_.6} parent=5 // pred_fallthru
      _
  $region6: #{_lambda_.6} parent=0 // loop_footer
    %s13 = sadd.s32 1, %s9
  $region7: #{_lambda_.6} parent=0 // loop_footer_branch
    %8 = sbr.rel target = $region3
  $region8: #{_lambda_.6} parent=0 // loop_exit
    _

// kernel: _lambda_.7
$region0: #{_lambda_.7}
  #allocation0 [shape = 'u32[]', space=smem, size = 0x4, offset = 0x4, fixed_abs, tag = 'smem constant byte address 0x4 - core index']
  #allocation1 [shape = 'u32[144,128]{1,0:T(1,128)}', space=vmem, size = 0x12000, scoped, tag = 'internal scratch']
  %s0 = inlined_call_operand.vmem [shape: bf16[512,256], index: 0, kind: input, shape index: {}]
  %s1 = inlined_call_operand.vmem [shape: bf16[256,128], index: 1, kind: input, shape index: {}]
  %s2 = inlined_call_operand.vmem [shape: f32[1,128], index: 2, kind: input, shape index: {}]
  %s3 = inlined_call_operand.vmem [shape: f32[512,128], index: 3, kind: output, shape index: {}]
  %s4 = sld [smem:[#allocation0]]
  $region45: #{_lambda_.7} parent=0
    _
  %s6 = ssub.s32 1, %s4
  %s7 = scalar_select 0, %s6, %s4
  loop: start=0, step=1, limit=4
  $region2: #{_lambda_.7} parent=0 // loop_pre_header
    _
  $region3: #{_lambda_.7} parent=0 // loop_header
    %s9 = sphi 0, %s13
    %p10 = scmp.ge.s32.totalorder %s9, 4
    %s16 = sphi 0, %s28
    %s17 = sphi 0, %s24
    %s18 = sphi 0, %s16
    %s19 = sphi 0, %s17
    %s20 = sphi 0, %s18
    %s21 = sphi 0, %s19
    %s31 = sphi 0, %s33
    %s34 = sphi 0, %s31
    %s35 = sphi 0, %s34
    %s51 = sphi 0, %s35
    %s57 = sphi 0, %s59
    %s60 = sphi 0, %s57
    %s61 = sphi 0, %s60
    %s77 = sphi 0, %s61
    %s83 = sphi 0, %s85
    %s86 = sphi 0, %s83
    %s87 = sphi 0, %s86
    %s103 = sphi 0, %s87
    %s111 = sphi 0, %s113
    %s114 = sphi 0, %s111
    %s115 = sphi 0, %s114
    %s131 = sphi 0, %s115
  $region4: #{_lambda_.7} parent=0 // loop_header_branch
    %12 = sbr.rel (%p10) target = $region8
  $region5: #{_lambda_.7} parent=0 // loop_body
    %s14 = ssub.s32 %s9, 1
    %s15 = ssub.s32 %s9, 2
    %s22 = sadd.s32 1, %s17
    %p23 = scmp.ge.s32.totalorder %s22, 1
    %s24 = scalar_select %p23, 0, %s22
    %s25 = sadd.s32 1, %s16
    %s26 = scalar_select %p23, %s25, %s16
    %p27 = scmp.ge.s32.totalorder %s26, 2
    %s28 = scalar_select %p27, 0, %s26
    %s29 = ssub.s32 %s16, %s28
    %p30 = scmp.eq.s32.totalorder %s29, 0
    %s32 = sadd.s32 %s31, 1
    %s33 = scalar_select %p30, %s31, %s32
    %p36 = pneg %p30
    %p37 = scmp.eq.s32.totalorder %s9, 1
    %p38 = por %p36, %p37
    %p39 = scmp.ne.s32.totalorder %s31, %s34
    %p40 = scmp.eq.s32.totalorder %s9, 0
    %p41 = por %p39, %p40
    %p42 = scmp.ne.s32.totalorder %s31, %s34
    %p43 = scmp.eq.s32.totalorder %s14, 1
    %p44 = por %p42, %p43
    %p45 = scmp.ne.s32.totalorder %s34, %s35
    %p46 = scmp.eq.s32.totalorder %s14, 0
    %p47 = por %p45, %p46
    %p48 = scmp.ne.s32.totalorder %s34, %s35
    %p49 = scmp.eq.s32.totalorder %s15, 1
    %p50 = por %p48, %p49
    %p52 = scmp.ne.s32.totalorder %s35, %s51
    %p53 = scmp.eq.s32.totalorder %s15, 0
    %p54 = por %p52, %p53
    %s55 = ssub.s32 %s17, %s24
    %p56 = scmp.eq.s32.totalorder %s55, 0
    %s58 = sadd.s32 %s57, 1
    %s59 = scalar_select %p56, %s57, %s58
    %p62 = pneg %p56
    %p63 = scmp.eq.s32.totalorder %s9, 1
    %p64 = por %p62, %p63
    %p65 = scmp.ne.s32.totalorder %s57, %s60
    %p66 = scmp.eq.s32.totalorder %s9, 0
    %p67 = por %p65, %p66
    %p68 = scmp.ne.s32.totalorder %s57, %s60
    %p69 = scmp.eq.s32.totalorder %s14, 1
    %p70 = por %p68, %p69
    %p71 = scmp.ne.s32.totalorder %s60, %s61
    %p72 = scmp.eq.s32.totalorder %s14, 0
    %p73 = por %p71, %p72
    %p74 = scmp.ne.s32.totalorder %s60, %s61
    %p75 = scmp.eq.s32.totalorder %s15, 1
    %p76 = por %p74, %p75
    %p78 = scmp.ne.s32.totalorder %s61, %s77
    %p79 = scmp.eq.s32.totalorder %s15, 0
    %p80 = por %p78, %p79
    %s81 = ssub.s32 %s17, %s24
    %p82 = scmp.eq.s32.totalorder %s81, 0
    %s84 = sadd.s32 %s83, 1
    %s85 = scalar_select %p82, %s83, %s84
    %p88 = pneg %p82
    %p89 = scmp.eq.s32.totalorder %s9, 1
    %p90 = por %p88, %p89
    %p91 = scmp.ne.s32.totalorder %s83, %s86
    %p92 = scmp.eq.s32.totalorder %s9, 0
    %p93 = por %p91, %p92
    %p94 = scmp.ne.s32.totalorder %s83, %s86
    %p95 = scmp.eq.s32.totalorder %s14, 1
    %p96 = por %p94, %p95
    %p97 = scmp.ne.s32.totalorder %s86, %s87
    %p98 = scmp.eq.s32.totalorder %s14, 0
    %p99 = por %p97, %p98
    %p100 = scmp.ne.s32.totalorder %s86, %s87
    %p101 = scmp.eq.s32.totalorder %s15, 1
    %p102 = por %p100, %p101
    %p104 = scmp.ne.s32.totalorder %s87, %s103
    %p105 = scmp.eq.s32.totalorder %s15, 0
    %p106 = por %p104, %p105
    %s107 = ssub.s32 %s16, %s28
    %s108 = ssub.s32 %s17, %s24
    %s109 = sor.u32 %s107, %s108
    %p110 = scmp.eq.s32.totalorder %s109, 0
    %s112 = sadd.s32 %s111, 1
    %s113 = scalar_select %p110, %s111, %s112
    %p116 = pneg %p110
    %p117 = scmp.eq.s32.totalorder %s9, 1
    %p118 = por %p116, %p117
    %p119 = scmp.ne.s32.totalorder %s111, %s114
    %p120 = scmp.eq.s32.totalorder %s9, 0
    %p121 = por %p119, %p120
    %p122 = scmp.ne.s32.totalorder %s111, %s114
    %p123 = scmp.eq.s32.totalorder %s14, 1
    %p124 = por %p122, %p123
    %p125 = scmp.ne.s32.totalorder %s114, %s115
    %p126 = scmp.eq.s32.totalorder %s14, 0
    %p127 = por %p125, %p126
    %p128 = scmp.ne.s32.totalorder %s114, %s115
    %p129 = scmp.eq.s32.totalorder %s15, 1
    %p130 = por %p128, %p129
    %p132 = scmp.ne.s32.totalorder %s115, %s131
    %p133 = scmp.eq.s32.totalorder %s15, 0
    %p134 = por %p132, %p133
    %p135 = scmp.le.s32.totalorder 1, %s9
    %p136 = scmp.lt.s32.totalorder %s9, 3
    %p137 = pnand %p135, %p136
    %p138 = pneg %p137
    // Predicated region
    $region9: #{_lambda_.7} parent=5 // pred_check
      _
    $region10: #{_lambda_.7} parent=5 // pred_check_branch
      %140 = sbr.rel (%p137) target = $region12
    $region11: #{_lambda_.7} parent=5 // pred_region
      %s141 = ssub.s32 %s9, 1
      // Predicated region
      $region13: #{_lambda_.7} parent=11 // pred_check
        %p142 = pneg %p73
      $region14: #{_lambda_.7} parent=11 // pred_check_branch
        %144 = sbr.rel (%p142) target = $region16
      $region15: #{_lambda_.7} parent=11 // pred_region
        %p145 = scmp.lt.s32.totalorder %s19, 0
        %s146 = scalar_select %p145, %s19, 0
        %s147 = smul.addr %s146, 4
        %s148 = scalar_lea.vmem %s1, %s147
      $region16: #{_lambda_.7} parent=11 // pred_fallthru
        _
      // Predicated region
      $region17: #{_lambda_.7} parent=11 // pred_check
        %p149 = pneg %p99
      $region18: #{_lambda_.7} parent=11 // pred_check_branch
        %151 = sbr.rel (%p149) target = $region20
      $region19: #{_lambda_.7} parent=11 // pred_region
        %p152 = scmp.lt.s32.totalorder %s19, 0
        %s153 = scalar_select %p152, %s19, 0
        %s154 = scalar_lea.vmem %s2, %s153
      $region20: #{_lambda_.7} parent=11 // pred_fallthru
        _
    $region12: #{_lambda_.7} parent=5 // pred_fallthru
      _
    %p155 = scmp.lt.s32.totalorder %s9, 2
    // Predicated region
    $region21: #{_lambda_.7} parent=5 // pred_check
      %p156 = pneg %p155
    $region22: #{_lambda_.7} parent=5 // pred_check_branch
      %158 = sbr.rel (%p156) target = $region24
    $region23: #{_lambda_.7} parent=5 // pred_region
      // Predicated region
      $region25: #{_lambda_.7} parent=23 // pred_check
        %p159 = pneg %p41
      $region26: #{_lambda_.7} parent=23 // pred_check_branch
        %161 = sbr.rel (%p159) target = $region28
      $region27: #{_lambda_.7} parent=23 // pred_region
        %s162 = smul.u32 32, %s16
        %p163 = scmp.lt.s32.totalorder %s162, 63
        %s164 = scalar_select %p163, %s162, 63
        %s165 = smul.addr %s164, 2
        %s166 = smul.addr %s165, 4
        %s167 = scalar_lea.vmem %s0, %s166
        %s168 = smul.u32 32, %s16
      $region28: #{_lambda_.7} parent=23 // pred_fallthru
        _
    $region24: #{_lambda_.7} parent=5 // pred_fallthru
      _
    %p169 = scmp.le.s32.totalorder 1, %s9
    %p170 = scmp.lt.s32.totalorder %s9, 3
    %p171 = pnand %p169, %p170
    %p172 = pneg %p171
    // Predicated region
    $region29: #{_lambda_.7} parent=5 // pred_check
      _
    $region30: #{_lambda_.7} parent=5 // pred_check_branch
      %174 = sbr.rel (%p171) target = $region32
    $region31: #{_lambda_.7} parent=5 // pred_region
      %s175 = ssub.s32 %s9, 1
      %s176 = smul.u32 32, %s18
      %p177 = scmp.lt.s32.totalorder %s176, 63
      %s178 = scalar_select %p177, %s176, 63
      %s179 = smul.addr %s178, 2
      %s180 = smul.addr %s179, 4
      %s181 = scalar_lea.vmem %s0, %s180
      %p182 = pneg %p47
      %p183 = pneg %p44
      %p184 = scmp.lt.s32.totalorder %s19, 0
      %s185 = scalar_select %p184, %s19, 0
      %s186 = smul.addr %s185, 4
      %s187 = scalar_lea.vmem %s1, %s186
      %p188 = pneg %p73
      %p189 = pneg %p70
      %p190 = scmp.lt.s32.totalorder %s19, 0
      %s191 = scalar_select %p190, %s19, 0
      %s192 = scalar_lea.vmem %s2, %s191
      %p193 = pneg %p99
      %p194 = pneg %p96
      %p195 = pneg %p127
      %p196 = pneg %p124
      %s197 = smul.u32 32, %s18
      %p198 = scmp.lt.s32.totalorder %s197, 63
      %s199 = scalar_select %p198, %s197, 63
      %p200 = scmp.lt.s32.totalorder %s19, 0
      %s201 = scalar_select %p200, %s19, 0
      %s202 = sadd.s32 %s201, %s199
      %s203 = smul.addr %s202, 8
      %s204 = scalar_lea.vmem %s3, %s203
      %s205 = smul.u32 32, %s18
      %p206 = scmp.lt.s32.totalorder %s205, 63
      %s207 = scalar_select %p206, %s205, 63
      %s208 = smul.addr %s207, 2
      %s209 = smul.addr %s208, 4
      %s210 = scalar_lea.vmem %s0, %s209
      %s211 = smul.u32 32, %s18
      %p212 = scmp.lt.s32.totalorder %s19, 0
      %s213 = scalar_select %p212, %s19, 0
      %s214 = smul.addr %s213, 4
      %s215 = scalar_lea.vmem %s1, %s214
      %p216 = scmp.lt.s32.totalorder %s19, 0
      %s217 = scalar_select %p216, %s19, 0
      %s218 = scalar_lea.vmem %s2, %s217
      %s219 = smul.u32 32, %s18
      %p220 = scmp.lt.s32.totalorder %s219, 63
      %s221 = scalar_select %p220, %s219, 63
      %p222 = scmp.lt.s32.totalorder %s19, 0
      %s223 = scalar_select %p222, %s19, 0
      %s224 = sadd.s32 %s223, %s221
      %s225 = smul.addr %s224, 8
      %s226 = scalar_lea.vmem %s3, %s225
      %s227 = smul.u32 32, %s18
      %v229 = vld [vmem:[%s210] sm:$0xff]
      %v230 = vld [vmem:[%s210 + $0x8] sm:$0xff]
      %v231 = vld [vmem:[%s210 + $0x10] sm:$0xff]
      %v232 = vld [vmem:[%s210 + $0x18] sm:$0xff]
      %v233 = vld [vmem:[%s210 + $0x20] sm:$0xff]
      %v234 = vld [vmem:[%s210 + $0x28] sm:$0xff]
      %v235 = vld [vmem:[%s210 + $0x30] sm:$0xff]
      %v236 = vld [vmem:[%s210 + $0x38] sm:$0xff]
      %v237 = vld [vmem:[%s210 + $0x40] sm:$0xff]
      %v238 = vld [vmem:[%s210 + $0x48] sm:$0xff]
      %v239 = vld [vmem:[%s210 + $0x50] sm:$0xff]
      %v240 = vld [vmem:[%s210 + $0x58] sm:$0xff]
      %v241 = vld [vmem:[%s210 + $0x60] sm:$0xff]
      %v242 = vld [vmem:[%s210 + $0x68] sm:$0xff]
      %v243 = vld [vmem:[%s210 + $0x70] sm:$0xff]
      %v244 = vld [vmem:[%s210 + $0x78] sm:$0xff]
      %v245 = vld [vmem:[%s210 + $0x80] sm:$0xff]
      %v246 = vld [vmem:[%s210 + $0x88] sm:$0xff]
      %v247 = vld [vmem:[%s210 + $0x90] sm:$0xff]
      %v248 = vld [vmem:[%s210 + $0x98] sm:$0xff]
      %v249 = vld [vmem:[%s210 + $0xa0] sm:$0xff]
      %v250 = vld [vmem:[%s210 + $0xa8] sm:$0xff]
      %v251 = vld [vmem:[%s210 + $0xb0] sm:$0xff]
      %v252 = vld [vmem:[%s210 + $0xb8] sm:$0xff]
      %v253 = vld [vmem:[%s210 + $0xc0] sm:$0xff]
      %v254 = vld [vmem:[%s210 + $0xc8] sm:$0xff]
      %v255 = vld [vmem:[%s210 + $0xd0] sm:$0xff]
      %v256 = vld [vmem:[%s210 + $0xd8] sm:$0xff]
      %v257 = vld [vmem:[%s210 + $0xe0] sm:$0xff]
      %v258 = vld [vmem:[%s210 + $0xe8] sm:$0xff]
      %v259 = vld [vmem:[%s210 + $0xf0] sm:$0xff]
      %v260 = vld [vmem:[%s210 + $0xf8] sm:$0xff]
      %v261 = vld [vmem:[%s215] sm:$0xf]
      %v262 = vld [vmem:[%s215 + $0x4] sm:$0xf]
      %v263 = vld [vmem:[%s215 + $0x8] sm:$0xf]
      %v264 = vld [vmem:[%s215 + $0xc] sm:$0xf]
      %v265 = vld [vmem:[%s215 + $0x10] sm:$0xf]
      %v266 = vld [vmem:[%s215 + $0x14] sm:$0xf]
      %v267 = vld [vmem:[%s215 + $0x18] sm:$0xf]
      %v268 = vld [vmem:[%s215 + $0x1c] sm:$0xf]
      %v269 = vld [vmem:[%s215 + $0x20] sm:$0xf]
      %v270 = vld [vmem:[%s215 + $0x24] sm:$0xf]
      %v271 = vld [vmem:[%s215 + $0x28] sm:$0xf]
      %v272 = vld [vmem:[%s215 + $0x2c] sm:$0xf]
      %v273 = vld [vmem:[%s215 + $0x30] sm:$0xf]
      %v274 = vld [vmem:[%s215 + $0x34] sm:$0xf]
      %v275 = vld [vmem:[%s215 + $0x38] sm:$0xf]
      %v276 = vld [vmem:[%s215 + $0x3c] sm:$0xf]
      %v277 = vld [vmem:[%s215 + $0x40] sm:$0xf]
      %v278 = vld [vmem:[%s215 + $0x44] sm:$0xf]
      %v279 = vld [vmem:[%s215 + $0x48] sm:$0xf]
      %v280 = vld [vmem:[%s215 + $0x4c] sm:$0xf]
      %v281 = vld [vmem:[%s215 + $0x50] sm:$0xf]
      %v282 = vld [vmem:[%s215 + $0x54] sm:$0xf]
      %v283 = vld [vmem:[%s215 + $0x58] sm:$0xf]
      %v284 = vld [vmem:[%s215 + $0x5c] sm:$0xf]
      %v285 = vld [vmem:[%s215 + $0x60] sm:$0xf]
      %v286 = vld [vmem:[%s215 + $0x64] sm:$0xf]
      %v287 = vld [vmem:[%s215 + $0x68] sm:$0xf]
      %v288 = vld [vmem:[%s215 + $0x6c] sm:$0xf]
      %v289 = vld [vmem:[%s215 + $0x70] sm:$0xf]
      %v290 = vld [vmem:[%s215 + $0x74] sm:$0xf]
      %v291 = vld [vmem:[%s215 + $0x78] sm:$0xf]
      %v292 = vld [vmem:[%s215 + $0x7c] sm:$0xf]
      %v293 = vld [vmem:[%s218] sm:$0x1]
      %v295 = vlaneseq
      %v296 = vshrl.u32 %v295, 7
      %v297 = vsub.s32 0, %v296
      %v298 = vrot.slane %v293, %v297
      %v332 = vunpack.c.l.b16 %v229
      %v333 = vunpack.c.h.b16 %v229
      %v334 = vunpack.c.l.b16 %v230
      %v335 = vunpack.c.h.b16 %v230
      %v336 = vunpack.c.l.b16 %v231
      %v337 = vunpack.c.h.b16 %v231
      %v338 = vunpack.c.l.b16 %v232
      %v339 = vunpack.c.h.b16 %v232
      %v340 = vunpack.c.l.b16 %v233
      %v341 = vunpack.c.h.b16 %v233
      %v342 = vunpack.c.l.b16 %v234
      %v343 = vunpack.c.h.b16 %v234
      %v344 = vunpack.c.l.b16 %v235
      %v345 = vunpack.c.h.b16 %v235
      %v346 = vunpack.c.l.b16 %v236
      %v347 = vunpack.c.h.b16 %v236
      %v348 = vunpack.c.l.b16 %v237
      %v349 = vunpack.c.h.b16 %v237
      %v350 = vunpack.c.l.b16 %v238
      %v351 = vunpack.c.h.b16 %v238
      %v352 = vunpack.c.l.b16 %v239
      %v353 = vunpack.c.h.b16 %v239
      %v354 = vunpack.c.l.b16 %v240
      %v355 = vunpack.c.h.b16 %v240
      %v356 = vunpack.c.l.b16 %v241
      %v357 = vunpack.c.h.b16 %v241
      %v358 = vunpack.c.l.b16 %v242
      %v359 = vunpack.c.h.b16 %v242
      %v360 = vunpack.c.l.b16 %v243
      %v361 = vunpack.c.h.b16 %v243
      %v362 = vunpack.c.l.b16 %v244
      %v363 = vunpack.c.h.b16 %v244
      %v364 = vunpack.c.l.b16 %v245
      %v365 = vunpack.c.h.b16 %v245
      %v366 = vunpack.c.l.b16 %v246
      %v367 = vunpack.c.h.b16 %v246
      %v368 = vunpack.c.l.b16 %v247
      %v369 = vunpack.c.h.b16 %v247
      %v370 = vunpack.c.l.b16 %v248
      %v371 = vunpack.c.h.b16 %v248
      %v372 = vunpack.c.l.b16 %v249
      %v373 = vunpack.c.h.b16 %v249
      %v374 = vunpack.c.l.b16 %v250
      %v375 = vunpack.c.h.b16 %v250
      %v376 = vunpack.c.l.b16 %v251
      %v377 = vunpack.c.h.b16 %v251
      %v378 = vunpack.c.l.b16 %v252
      %v379 = vunpack.c.h.b16 %v252
      %v380 = vunpack.c.l.b16 %v253
      %v381 = vunpack.c.h.b16 %v253
      %v382 = vunpack.c.l.b16 %v254
      %v383 = vunpack.c.h.b16 %v254
      %v384 = vunpack.c.l.b16 %v255
      %v385 = vunpack.c.h.b16 %v255
      %v386 = vunpack.c.l.b16 %v256
      %v387 = vunpack.c.h.b16 %v256
      %v388 = vunpack.c.l.b16 %v257
      %v389 = vunpack.c.h.b16 %v257
      %v390 = vunpack.c.l.b16 %v258
      %v391 = vunpack.c.h.b16 %v258
      %v392 = vunpack.c.l.b16 %v259
      %v393 = vunpack.c.h.b16 %v259
      %v394 = vunpack.c.l.b16 %v260
      %v395 = vunpack.c.h.b16 %v260
      %v396 = vpack.c.b16 %v334, %v332
      %v397 = vpack.c.b16 %v335, %v333
      %v398 = vpack.c.b16 %v338, %v336
      %v399 = vpack.c.b16 %v339, %v337
      %v400 = vpack.c.b16 %v342, %v340
      %v401 = vpack.c.b16 %v343, %v341
      %v402 = vpack.c.b16 %v346, %v344
      %v403 = vpack.c.b16 %v347, %v345
      %v404 = vpack.c.b16 %v350, %v348
      %v405 = vpack.c.b16 %v351, %v349
      %v406 = vpack.c.b16 %v354, %v352
      %v407 = vpack.c.b16 %v355, %v353
      %v408 = vpack.c.b16 %v358, %v356
      %v409 = vpack.c.b16 %v359, %v357
      %v410 = vpack.c.b16 %v362, %v360
      %v411 = vpack.c.b16 %v363, %v361
      %v412 = vpack.c.b16 %v366, %v364
      %v413 = vpack.c.b16 %v367, %v365
      %v414 = vpack.c.b16 %v370, %v368
      %v415 = vpack.c.b16 %v371, %v369
      %v416 = vpack.c.b16 %v374, %v372
      %v417 = vpack.c.b16 %v375, %v373
      %v418 = vpack.c.b16 %v378, %v376
      %v419 = vpack.c.b16 %v379, %v377
      %v420 = vpack.c.b16 %v382, %v380
      %v421 = vpack.c.b16 %v383, %v381
      %v422 = vpack.c.b16 %v386, %v384
      %v423 = vpack.c.b16 %v387, %v385
      %v424 = vpack.c.b16 %v390, %v388
      %v425 = vpack.c.b16 %v391, %v389
      %v426 = vpack.c.b16 %v394, %v392
      %v427 = vpack.c.b16 %v395, %v393
      %v492 = vunpack.c.l.b16 %v261
      %v493 = vunpack.c.l.b16 %v262
      %v494 = vunpack.c.l.b16 %v263
      %v495 = vunpack.c.l.b16 %v264
      %v496 = vunpack.c.l.b16 %v265
      %v497 = vunpack.c.l.b16 %v266
      %v498 = vunpack.c.l.b16 %v267
      %v499 = vunpack.c.l.b16 %v268
      %v500 = vunpack.c.l.b16 %v269
      %v501 = vunpack.c.l.b16 %v270
      %v502 = vunpack.c.l.b16 %v271
      %v503 = vunpack.c.l.b16 %v272
      %v504 = vunpack.c.l.b16 %v273
      %v505 = vunpack.c.l.b16 %v274
      %v506 = vunpack.c.l.b16 %v275
      %v507 = vunpack.c.l.b16 %v276
      %v508 = vunpack.c.l.b16 %v277
      %v509 = vunpack.c.l.b16 %v278
      %v510 = vunpack.c.l.b16 %v279
      %v511 = vunpack.c.l.b16 %v280
      %v512 = vunpack.c.l.b16 %v281
      %v513 = vunpack.c.l.b16 %v282
      %v514 = vunpack.c.l.b16 %v283
      %v515 = vunpack.c.l.b16 %v284
      %v516 = vunpack.c.l.b16 %v285
      %v517 = vunpack.c.l.b16 %v286
      %v518 = vunpack.c.l.b16 %v287
      %v519 = vunpack.c.l.b16 %v288
      %v520 = vunpack.c.l.b16 %v289
      %v521 = vunpack.c.l.b16 %v290
      %v522 = vunpack.c.l.b16 %v291
      %v523 = vunpack.c.l.b16 %v292
      %v524 = vpack.c.b16 %v493, %v492
      %v525 = vpack.c.b16 %v495, %v494
      %v526 = vpack.c.b16 %v497, %v496
      %v527 = vpack.c.b16 %v499, %v498
      %v528 = vpack.c.b16 %v501, %v500
      %v529 = vpack.c.b16 %v503, %v502
      %v530 = vpack.c.b16 %v505, %v504
      %v531 = vpack.c.b16 %v507, %v506
      %v532 = vpack.c.b16 %v509, %v508
      %v533 = vpack.c.b16 %v511, %v510
      %v534 = vpack.c.b16 %v513, %v512
      %v535 = vpack.c.b16 %v515, %v514
      %v536 = vpack.c.b16 %v517, %v516
      %v537 = vpack.c.b16 %v519, %v518
      %v538 = vpack.c.b16 %v521, %v520
      %v539 = vpack.c.b16 %v523, %v522
      %556 = vmatprep.subr.bf16.mxu0 0
      %557 = vmatpush1.bf16.msra.mxu0 %v524
      %558 = vmatprep.subr.bf16.mxu0 0
      %559 = vmatpush1.bf16.msra.mxu0 %v525
      %560 = vmatprep.subr.bf16.mxu0 0
      %561 = vmatpush1.bf16.msra.mxu0 %v526
      %562 = vmatprep.subr.bf16.mxu0 0
      %563 = vmatpush1.bf16.msra.mxu0 %v527
      %564 = vmatprep.subr.bf16.mxu0 0
      %565 = vmatpush1.bf16.msra.mxu0 %v528
      %566 = vmatprep.subr.bf16.mxu0 0
      %567 = vmatpush1.bf16.msra.mxu0 %v529
      %568 = vmatprep.subr.bf16.mxu0 0
      %569 = vmatpush1.bf16.msra.mxu0 %v530
      %570 = vmatprep.subr.bf16.mxu0 0
      %571 = vmatpush1.bf16.msra.mxu0 %v531
      %572 = vmatprep.subr.bf16.mxu0 0
      %573 = vmatpush1.bf16.msra.mxu0 %v532
      %574 = vmatprep.subr.bf16.mxu0 0
      %575 = vmatpush1.bf16.msra.mxu0 %v533
      %576 = vmatprep.subr.bf16.mxu0 0
      %577 = vmatpush1.bf16.msra.mxu0 %v534
      %578 = vmatprep.subr.bf16.mxu0 0
      %579 = vmatpush1.bf16.msra.mxu0 %v535
      %580 = vmatprep.subr.bf16.mxu0 0
      %581 = vmatpush1.bf16.msra.mxu0 %v536
      %582 = vmatprep.subr.bf16.mxu0 0
      %583 = vmatpush1.bf16.msra.mxu0 %v537
      %584 = vmatprep.subr.bf16.mxu0 0
      %585 = vmatpush1.bf16.msra.mxu0 %v538
      %586 = vmatprep.subr.bf16.mxu0 0
      %587 = vmatpush1.bf16.msra.mxu0 %v539
      %588 = vmatprep.mubr.bf16.mxu0 %v397
      %589 = vmatmul.mubr.bf16.gmra.mrb[0].mxu0 %v396
      %v590 = vpop.f32.mrb[0].mxu0
      %v591 = vadd.f32 %v298, %v590
      %v592 = vpop.f32.mrb[0].mxu0
      %v593 = vpop.f32.mrb[0].mxu0
      %v594 = vadd.f32 %v298, %v593
      %v595 = vpop.f32.mrb[0].mxu0
      %596 = vmatprep.mubr.bf16.mxu0 %v399
      %597 = vmatmul.mubr.bf16.gmra.mrb[0].mxu0 %v398
      %v598 = vpop.f32.mrb[0].mxu0
      %v599 = vadd.f32 %v298, %v598
      %v600 = vpop.f32.mrb[0].mxu0
      %v601 = vpop.f32.mrb[0].mxu0
      %v602 = vadd.f32 %v298, %v601
      %v603 = vpop.f32.mrb[0].mxu0
      %604 = vmatprep.mubr.bf16.mxu0 %v401
      %605 = vmatmul.mubr.bf16.gmra.mrb[0].mxu0 %v400
      %v606 = vpop.f32.mrb[0].mxu0
      %v607 = vadd.f32 %v298, %v606
      %v608 = vpop.f32.mrb[0].mxu0
      %v609 = vpop.f32.mrb[0].mxu0
      %v610 = vadd.f32 %v298, %v609
      %v611 = vpop.f32.mrb[0].mxu0
      %612 = vmatprep.mubr.bf16.mxu0 %v403
      %613 = vmatmul.mubr.bf16.gmra.mrb[0].mxu0 %v402
      %v614 = vpop.f32.mrb[0].mxu0
      %v615 = vadd.f32 %v298, %v614
      %v616 = vpop.f32.mrb[0].mxu0
      %v617 = vpop.f32.mrb[0].mxu0
      %v618 = vadd.f32 %v298, %v617
      %v619 = vpop.f32.mrb[0].mxu0
      %620 = vmatprep.mubr.bf16.mxu0 %v405
      %621 = vmatmul.mubr.bf16.gmra.mrb[0].mxu0 %v404
      %v622 = vpop.f32.mrb[0].mxu0
      %v623 = vadd.f32 %v298, %v622
      %v624 = vpop.f32.mrb[0].mxu0
      %v625 = vpop.f32.mrb[0].mxu0
      %v626 = vadd.f32 %v298, %v625
      %v627 = vpop.f32.mrb[0].mxu0
      %628 = vmatprep.mubr.bf16.mxu0 %v407
      %629 = vmatmul.mubr.bf16.gmra.mrb[0].mxu0 %v406
      %v630 = vpop.f32.mrb[0].mxu0
      %v631 = vadd.f32 %v298, %v630
      %v632 = vpop.f32.mrb[0].mxu0
      %v633 = vpop.f32.mrb[0].mxu0
      %v634 = vadd.f32 %v298, %v633
      %v635 = vpop.f32.mrb[0].mxu0
      %636 = vmatprep.mubr.bf16.mxu0 %v409
      %637 = vmatmul.mubr.bf16.gmra.mrb[0].mxu0 %v408
      %v638 = vpop.f32.mrb[0].mxu0
      %v639 = vadd.f32 %v298, %v638
      %v640 = vpop.f32.mrb[0].mxu0
      %v641 = vpop.f32.mrb[0].mxu0
      %v642 = vadd.f32 %v298, %v641
      %v643 = vpop.f32.mrb[0].mxu0
      %644 = vmatprep.mubr.bf16.mxu0 %v411
      %645 = vmatmul.mubr.bf16.gmra.mrb[0].mxu0 %v410
      %v646 = vpop.f32.mrb[0].mxu0
      %v647 = vadd.f32 %v298, %v646
      %v648 = vpop.f32.mrb[0].mxu0
      %v649 = vpop.f32.mrb[0].mxu0
      %v650 = vadd.f32 %v298, %v649
      %v651 = vpop.f32.mrb[0].mxu0
      %652 = vmatprep.mubr.bf16.mxu0 %v413
      %653 = vmatmul.mubr.bf16.gmra.mrb[0].mxu0 %v412
      %v654 = vpop.f32.mrb[0].mxu0
      %v655 = vadd.f32 %v298, %v654
      %v656 = vpop.f32.mrb[0].mxu0
      %v657 = vpop.f32.mrb[0].mxu0
      %v658 = vadd.f32 %v298, %v657
      %v659 = vpop.f32.mrb[0].mxu0
      %660 = vmatprep.mubr.bf16.mxu0 %v415
      %661 = vmatmul.mubr.bf16.gmra.mrb[0].mxu0 %v414
      %v662 = vpop.f32.mrb[0].mxu0
      %v663 = vadd.f32 %v298, %v662
      %v664 = vpop.f32.mrb[0].mxu0
      %v665 = vpop.f32.mrb[0].mxu0
      %v666 = vadd.f32 %v298, %v665
      %v667 = vpop.f32.mrb[0].mxu0
      %668 = vmatprep.mubr.bf16.mxu0 %v417
      %669 = vmatmul.mubr.bf16.gmra.mrb[0].mxu0 %v416
      %v670 = vpop.f32.mrb[0].mxu0
      %v671 = vadd.f32 %v298, %v670
      %v672 = vpop.f32.mrb[0].mxu0
      %v673 = vpop.f32.mrb[0].mxu0
      %v674 = vadd.f32 %v298, %v673
      %v675 = vpop.f32.mrb[0].mxu0
      %676 = vmatprep.mubr.bf16.mxu0 %v419
      %677 = vmatmul.mubr.bf16.gmra.mrb[0].mxu0 %v418
      %v678 = vpop.f32.mrb[0].mxu0
      %v679 = vadd.f32 %v298, %v678
      %v680 = vpop.f32.mrb[0].mxu0
      %v681 = vpop.f32.mrb[0].mxu0
      %v682 = vadd.f32 %v298, %v681
      %v683 = vpop.f32.mrb[0].mxu0
      %684 = vmatprep.mubr.bf16.mxu0 %v421
      %685 = vmatmul.mubr.bf16.gmra.mrb[0].mxu0 %v420
      %v686 = vpop.f32.mrb[0].mxu0
      %v687 = vadd.f32 %v298, %v686
      %v688 = vpop.f32.mrb[0].mxu0
      %v689 = vpop.f32.mrb[0].mxu0
      %v690 = vadd.f32 %v298, %v689
      %v691 = vpop.f32.mrb[0].mxu0
      %692 = vmatprep.mubr.bf16.mxu0 %v423
      %693 = vmatmul.mubr.bf16.gmra.mrb[0].mxu0 %v422
      %v694 = vpop.f32.mrb[0].mxu0
      %v695 = vadd.f32 %v298, %v694
      %v696 = vpop.f32.mrb[0].mxu0
      %v697 = vpop.f32.mrb[0].mxu0
      %v698 = vadd.f32 %v298, %v697
      %v699 = vpop.f32.mrb[0].mxu0
      %700 = vmatprep.mubr.bf16.mxu0 %v425
      %701 = vmatmul.mubr.bf16.gmra.mrb[0].mxu0 %v424
      %v702 = vpop.f32.mrb[0].mxu0
      %v703 = vadd.f32 %v298, %v702
      %v704 = vpop.f32.mrb[0].mxu0
      %v705 = vpop.f32.mrb[0].mxu0
      %v706 = vadd.f32 %v298, %v705
      %v707 = vpop.f32.mrb[0].mxu0
      %708 = vmatprep.mubr.bf16.mxu0 %v427
      %709 = vmatmul.mubr.bf16.gmra.mrb[0].mxu0 %v426
      %v710 = vpop.f32.mrb[0].mxu0
      %v711 = vadd.f32 %v298, %v710
      %v712 = vpop.f32.mrb[0].mxu0
      %v713 = vpop.f32.mrb[0].mxu0
      %v714 = vadd.f32 %v298, %v713
      %v715 = vpop.f32.mrb[0].mxu0
      %716 = vdwg.mxu0
      %v717 = vmax.f32 %v591, 0.0
      %v718 = vmax.f32 %v594, 0.0
      %v719 = vmax.f32 %v599, 0.0
      %v720 = vmax.f32 %v602, 0.0
      %v721 = vmax.f32 %v607, 0.0
      %v722 = vmax.f32 %v610, 0.0
      %v723 = vmax.f32 %v615, 0.0
      %v724 = vmax.f32 %v618, 0.0
      %v725 = vmax.f32 %v623, 0.0
      %v726 = vmax.f32 %v626, 0.0
      %v727 = vmax.f32 %v631, 0.0
      %v728 = vmax.f32 %v634, 0.0
      %v729 = vmax.f32 %v639, 0.0
      %v730 = vmax.f32 %v642, 0.0
      %v731 = vmax.f32 %v647, 0.0
      %v732 = vmax.f32 %v650, 0.0
      %v733 = vmax.f32 %v655, 0.0
      %v734 = vmax.f32 %v658, 0.0
      %v735 = vmax.f32 %v663, 0.0
      %v736 = vmax.f32 %v666, 0.0
      %v737 = vmax.f32 %v671, 0.0
      %v738 = vmax.f32 %v674, 0.0
      %v739 = vmax.f32 %v679, 0.0
      %v740 = vmax.f32 %v682, 0.0
      %v741 = vmax.f32 %v687, 0.0
      %v742 = vmax.f32 %v690, 0.0
      %v743 = vmax.f32 %v695, 0.0
      %v744 = vmax.f32 %v698, 0.0
      %v745 = vmax.f32 %v703, 0.0
      %v746 = vmax.f32 %v706, 0.0
      %v747 = vmax.f32 %v711, 0.0
      %v748 = vmax.f32 %v714, 0.0
      %749 = vst [vmem:[%s226] sm:$0xff] %v717
      %750 = vst [vmem:[%s226 + $0x8] sm:$0xff] %v718
      %751 = vst [vmem:[%s226 + $0x10] sm:$0xff] %v719
      %752 = vst [vmem:[%s226 + $0x18] sm:$0xff] %v720
      %753 = vst [vmem:[%s226 + $0x20] sm:$0xff] %v721
      %754 = vst [vmem:[%s226 + $0x28] sm:$0xff] %v722
      %755 = vst [vmem:[%s226 + $0x30] sm:$0xff] %v723
      %756 = vst [vmem:[%s226 + $0x38] sm:$0xff] %v724
      %757 = vst [vmem:[%s226 + $0x40] sm:$0xff] %v725
      %758 = vst [vmem:[%s226 + $0x48] sm:$0xff] %v726
      %759 = vst [vmem:[%s226 + $0x50] sm:$0xff] %v727
      %760 = vst [vmem:[%s226 + $0x58] sm:$0xff] %v728
      %761 = vst [vmem:[%s226 + $0x60] sm:$0xff] %v729
      %762 = vst [vmem:[%s226 + $0x68] sm:$0xff] %v730
      %763 = vst [vmem:[%s226 + $0x70] sm:$0xff] %v731
      %764 = vst [vmem:[%s226 + $0x78] sm:$0xff] %v732
      %765 = vst [vmem:[%s226 + $0x80] sm:$0xff] %v733
      %766 = vst [vmem:[%s226 + $0x88] sm:$0xff] %v734
      %767 = vst [vmem:[%s226 + $0x90] sm:$0xff] %v735
      %768 = vst [vmem:[%s226 + $0x98] sm:$0xff] %v736
      %769 = vst [vmem:[%s226 + $0xa0] sm:$0xff] %v737
      %770 = vst [vmem:[%s226 + $0xa8] sm:$0xff] %v738
      %771 = vst [vmem:[%s226 + $0xb0] sm:$0xff] %v739
      %772 = vst [vmem:[%s226 + $0xb8] sm:$0xff] %v740
      %773 = vst [vmem:[%s226 + $0xc0] sm:$0xff] %v741
      %774 = vst [vmem:[%s226 + $0xc8] sm:$0xff] %v742
      %775 = vst [vmem:[%s226 + $0xd0] sm:$0xff] %v743
      %776 = vst [vmem:[%s226 + $0xd8] sm:$0xff] %v744
      %777 = vst [vmem:[%s226 + $0xe0] sm:$0xff] %v745
      %778 = vst [vmem:[%s226 + $0xe8] sm:$0xff] %v746
      %779 = vst [vmem:[%s226 + $0xf0] sm:$0xff] %v747
      %780 = vst [vmem:[%s226 + $0xf8] sm:$0xff] %v748
      %s781 = smul.u32 32, %s18
      %p782 = scmp.lt.s32.totalorder %s781, 63
      %s783 = scalar_select %p782, %s781, 63
      %p784 = scmp.lt.s32.totalorder %s19, 0
      %s785 = scalar_select %p784, %s19, 0
      %s786 = sadd.s32 %s785, %s783
      %s787 = smul.addr %s786, 8
      %s788 = scalar_lea.vmem %s3, %s787
      // Predicated region
      $region33: #{_lambda_.7} parent=31 // pred_check
        %p789 = pneg %p124
      $region34: #{_lambda_.7} parent=31 // pred_check_branch
        %791 = sbr.rel (%p789) target = $region36
      $region35: #{_lambda_.7} parent=31 // pred_region
        %s792 = smul.u32 32, %s18
      $region36: #{_lambda_.7} parent=31 // pred_fallthru
        _
    $region32: #{_lambda_.7} parent=5 // pred_fallthru
      _
    %p793 = scmp.le.s32.totalorder 2, %s9
    // Predicated region
    $region37: #{_lambda_.7} parent=5 // pred_check
      %p794 = pneg %p793
    $region38: #{_lambda_.7} parent=5 // pred_check_branch
      %796 = sbr.rel (%p794) target = $region40
    $region39: #{_lambda_.7} parent=5 // pred_region
      %s797 = ssub.s32 %s9, 2
      // Predicated region
      $region41: #{_lambda_.7} parent=39 // pred_check
        %p798 = pneg %p130
      $region42: #{_lambda_.7} parent=39 // pred_check_branch
        %800 = sbr.rel (%p798) target = $region44
      $region43: #{_lambda_.7} parent=39 // pred_region
        %s801 = smul.u32 32, %s20
        %p802 = scmp.lt.s32.totalorder %s801, 63
        %s803 = scalar_select %p802, %s801, 63
        %p804 = scmp.lt.s32.totalorder %s21, 0
        %s805 = scalar_select %p804, %s21, 0
        %s806 = sadd.s32 %s805, %s803
        %s807 = smul.addr %s806, 8
        %s808 = scalar_lea.vmem %s3, %s807
      $region44: #{_lambda_.7} parent=39 // pred_fallthru
        _
    $region40: #{_lambda_.7} parent=5 // pred_fallthru
      _
  $region6: #{_lambda_.7} parent=0 // loop_footer
    %s13 = sadd.s32 1, %s9
  $region7: #{_lambda_.7} parent=0 // loop_footer_branch
    %8 = sbr.rel target = $region3
  $region8: #{_lambda_.7} parent=0 // loop_exit
    _

// kernel: _lambda_.8
$region0: #{_lambda_.8}
  #allocation0 [shape = 'u32[]', space=smem, size = 0x4, offset = 0x4, fixed_abs, tag = 'smem constant byte address 0x4 - core index']
  #allocation1 [shape = 'u32[144,128]{1,0:T(1,128)}', space=vmem, size = 0x12000, scoped, tag = 'internal scratch']
  %s0 = inlined_call_operand.vmem [shape: bf16[512,256], index: 0, kind: input, shape index: {}]
  %s1 = inlined_call_operand.vmem [shape: bf16[256,128], index: 1, kind: input, shape index: {}]
  %s2 = inlined_call_operand.vmem [shape: f32[1,128], index: 2, kind: input, shape index: {}]
  %s3 = inlined_call_operand.vmem [shape: f32[512,128], index: 3, kind: input, shape index: {}]
  %s4 = inlined_call_operand.vmem [shape: f32[512,128], index: 4, kind: output, shape index: {}]
  %s5 = sld [smem:[#allocation0]]
  $region49: #{_lambda_.8} parent=0
    _
  %s7 = ssub.s32 1, %s5
  %s8 = scalar_select 0, %s7, %s5
  loop: start=0, step=1, limit=4
  $region2: #{_lambda_.8} parent=0 // loop_pre_header
    _
  $region3: #{_lambda_.8} parent=0 // loop_header
    %s10 = sphi 0, %s14
    %p11 = scmp.ge.s32.totalorder %s10, 4
    %s17 = sphi 0, %s29
    %s18 = sphi 0, %s25
    %s19 = sphi 0, %s17
    %s20 = sphi 0, %s18
    %s21 = sphi 0, %s19
    %s22 = sphi 0, %s20
    %s32 = sphi 0, %s34
    %s35 = sphi 0, %s32
    %s36 = sphi 0, %s35
    %s52 = sphi 0, %s36
    %s58 = sphi 0, %s60
    %s61 = sphi 0, %s58
    %s62 = sphi 0, %s61
    %s78 = sphi 0, %s62
    %s84 = sphi 0, %s86
    %s87 = sphi 0, %s84
    %s88 = sphi 0, %s87
    %s104 = sphi 0, %s88
    %s112 = sphi 0, %s114
    %s115 = sphi 0, %s112
    %s116 = sphi 0, %s115
    %s132 = sphi 0, %s116
    %s140 = sphi 0, %s142
    %s143 = sphi 0, %s140
    %s144 = sphi 0, %s143
    %s160 = sphi 0, %s144
  $region4: #{_lambda_.8} parent=0 // loop_header_branch
    %13 = sbr.rel (%p11) target = $region8
  $region5: #{_lambda_.8} parent=0 // loop_body
    %s15 = ssub.s32 %s10, 1
    %s16 = ssub.s32 %s10, 2
    %s23 = sadd.s32 1, %s18
    %p24 = scmp.ge.s32.totalorder %s23, 1
    %s25 = scalar_select %p24, 0, %s23
    %s26 = sadd.s32 1, %s17
    %s27 = scalar_select %p24, %s26, %s17
    %p28 = scmp.ge.s32.totalorder %s27, 2
    %s29 = scalar_select %p28, 0, %s27
    %s30 = ssub.s32 %s17, %s29
    %p31 = scmp.eq.s32.totalorder %s30, 0
    %s33 = sadd.s32 %s32, 1
    %s34 = scalar_select %p31, %s32, %s33
    %p37 = pneg %p31
    %p38 = scmp.eq.s32.totalorder %s10, 1
    %p39 = por %p37, %p38
    %p40 = scmp.ne.s32.totalorder %s32, %s35
    %p41 = scmp.eq.s32.totalorder %s10, 0
    %p42 = por %p40, %p41
    %p43 = scmp.ne.s32.totalorder %s32, %s35
    %p44 = scmp.eq.s32.totalorder %s15, 1
    %p45 = por %p43, %p44
    %p46 = scmp.ne.s32.totalorder %s35, %s36
    %p47 = scmp.eq.s32.totalorder %s15, 0
    %p48 = por %p46, %p47
    %p49 = scmp.ne.s32.totalorder %s35, %s36
    %p50 = scmp.eq.s32.totalorder %s16, 1
    %p51 = por %p49, %p50
    %p53 = scmp.ne.s32.totalorder %s36, %s52
    %p54 = scmp.eq.s32.totalorder %s16, 0
    %p55 = por %p53, %p54
    %s56 = ssub.s32 %s18, %s25
    %p57 = scmp.eq.s32.totalorder %s56, 0
    %s59 = sadd.s32 %s58, 1
    %s60 = scalar_select %p57, %s58, %s59
    %p63 = pneg %p57
    %p64 = scmp.eq.s32.totalorder %s10, 1
    %p65 = por %p63, %p64
    %p66 = scmp.ne.s32.totalorder %s58, %s61
    %p67 = scmp.eq.s32.totalorder %s10, 0
    %p68 = por %p66, %p67
    %p69 = scmp.ne.s32.totalorder %s58, %s61
    %p70 = scmp.eq.s32.totalorder %s15, 1
    %p71 = por %p69, %p70
    %p72 = scmp.ne.s32.totalorder %s61, %s62
    %p73 = scmp.eq.s32.totalorder %s15, 0
    %p74 = por %p72, %p73
    %p75 = scmp.ne.s32.totalorder %s61, %s62
    %p76 = scmp.eq.s32.totalorder %s16, 1
    %p77 = por %p75, %p76
    %p79 = scmp.ne.s32.totalorder %s62, %s78
    %p80 = scmp.eq.s32.totalorder %s16, 0
    %p81 = por %p79, %p80
    %s82 = ssub.s32 %s18, %s25
    %p83 = scmp.eq.s32.totalorder %s82, 0
    %s85 = sadd.s32 %s84, 1
    %s86 = scalar_select %p83, %s84, %s85
    %p89 = pneg %p83
    %p90 = scmp.eq.s32.totalorder %s10, 1
    %p91 = por %p89, %p90
    %p92 = scmp.ne.s32.totalorder %s84, %s87
    %p93 = scmp.eq.s32.totalorder %s10, 0
    %p94 = por %p92, %p93
    %p95 = scmp.ne.s32.totalorder %s84, %s87
    %p96 = scmp.eq.s32.totalorder %s15, 1
    %p97 = por %p95, %p96
    %p98 = scmp.ne.s32.totalorder %s87, %s88
    %p99 = scmp.eq.s32.totalorder %s15, 0
    %p100 = por %p98, %p99
    %p101 = scmp.ne.s32.totalorder %s87, %s88
    %p102 = scmp.eq.s32.totalorder %s16, 1
    %p103 = por %p101, %p102
    %p105 = scmp.ne.s32.totalorder %s88, %s104
    %p106 = scmp.eq.s32.totalorder %s16, 0
    %p107 = por %p105, %p106
    %s108 = ssub.s32 %s17, %s29
    %s109 = ssub.s32 %s18, %s25
    %s110 = sor.u32 %s108, %s109
    %p111 = scmp.eq.s32.totalorder %s110, 0
    %s113 = sadd.s32 %s112, 1
    %s114 = scalar_select %p111, %s112, %s113
    %p117 = pneg %p111
    %p118 = scmp.eq.s32.totalorder %s10, 1
    %p119 = por %p117, %p118
    %p120 = scmp.ne.s32.totalorder %s112, %s115
    %p121 = scmp.eq.s32.totalorder %s10, 0
    %p122 = por %p120, %p121
    %p123 = scmp.ne.s32.totalorder %s112, %s115
    %p124 = scmp.eq.s32.totalorder %s15, 1
    %p125 = por %p123, %p124
    %p126 = scmp.ne.s32.totalorder %s115, %s116
    %p127 = scmp.eq.s32.totalorder %s15, 0
    %p128 = por %p126, %p127
    %p129 = scmp.ne.s32.totalorder %s115, %s116
    %p130 = scmp.eq.s32.totalorder %s16, 1
    %p131 = por %p129, %p130
    %p133 = scmp.ne.s32.totalorder %s116, %s132
    %p134 = scmp.eq.s32.totalorder %s16, 0
    %p135 = por %p133, %p134
    %s136 = ssub.s32 %s17, %s29
    %s137 = ssub.s32 %s18, %s25
    %s138 = sor.u32 %s136, %s137
    %p139 = scmp.eq.s32.totalorder %s138, 0
    %s141 = sadd.s32 %s140, 1
    %s142 = scalar_select %p139, %s140, %s141
    %p145 = pneg %p139
    %p146 = scmp.eq.s32.totalorder %s10, 1
    %p147 = por %p145, %p146
    %p148 = scmp.ne.s32.totalorder %s140, %s143
    %p149 = scmp.eq.s32.totalorder %s10, 0
    %p150 = por %p148, %p149
    %p151 = scmp.ne.s32.totalorder %s140, %s143
    %p152 = scmp.eq.s32.totalorder %s15, 1
    %p153 = por %p151, %p152
    %p154 = scmp.ne.s32.totalorder %s143, %s144
    %p155 = scmp.eq.s32.totalorder %s15, 0
    %p156 = por %p154, %p155
    %p157 = scmp.ne.s32.totalorder %s143, %s144
    %p158 = scmp.eq.s32.totalorder %s16, 1
    %p159 = por %p157, %p158
    %p161 = scmp.ne.s32.totalorder %s144, %s160
    %p162 = scmp.eq.s32.totalorder %s16, 0
    %p163 = por %p161, %p162
    %p164 = scmp.le.s32.totalorder 1, %s10
    %p165 = scmp.lt.s32.totalorder %s10, 3
    %p166 = pnand %p164, %p165
    %p167 = pneg %p166
    // Predicated region
    $region9: #{_lambda_.8} parent=5 // pred_check
      _
    $region10: #{_lambda_.8} parent=5 // pred_check_branch
      %169 = sbr.rel (%p166) target = $region12
    $region11: #{_lambda_.8} parent=5 // pred_region
      %s170 = ssub.s32 %s10, 1
      // Predicated region
      $region13: #{_lambda_.8} parent=11 // pred_check
        %p171 = pneg %p74
      $region14: #{_lambda_.8} parent=11 // pred_check_branch
        %173 = sbr.rel (%p171) target = $region16
      $region15: #{_lambda_.8} parent=11 // pred_region
        %p174 = scmp.lt.s32.totalorder %s20, 0
        %s175 = scalar_select %p174, %s20, 0
        %s176 = smul.addr %s175, 4
        %s177 = scalar_lea.vmem %s1, %s176
      $region16: #{_lambda_.8} parent=11 // pred_fallthru
        _
      // Predicated region
      $region17: #{_lambda_.8} parent=11 // pred_check
        %p178 = pneg %p100
      $region18: #{_lambda_.8} parent=11 // pred_check_branch
        %180 = sbr.rel (%p178) target = $region20
      $region19: #{_lambda_.8} parent=11 // pred_region
        %p181 = scmp.lt.s32.totalorder %s20, 0
        %s182 = scalar_select %p181, %s20, 0
        %s183 = scalar_lea.vmem %s2, %s182
      $region20: #{_lambda_.8} parent=11 // pred_fallthru
        _
    $region12: #{_lambda_.8} parent=5 // pred_fallthru
      _
    %p184 = scmp.lt.s32.totalorder %s10, 2
    // Predicated region
    $region21: #{_lambda_.8} parent=5 // pred_check
      %p185 = pneg %p184
    $region22: #{_lambda_.8} parent=5 // pred_check_branch
      %187 = sbr.rel (%p185) target = $region24
    $region23: #{_lambda_.8} parent=5 // pred_region
      // Predicated region
      $region25: #{_lambda_.8} parent=23 // pred_check
        %p188 = pneg %p42
      $region26: #{_lambda_.8} parent=23 // pred_check_branch
        %190 = sbr.rel (%p188) target = $region28
      $region27: #{_lambda_.8} parent=23 // pred_region
        %s191 = smul.u32 32, %s17
        %p192 = scmp.lt.s32.totalorder %s191, 63
        %s193 = scalar_select %p192, %s191, 63
        %s194 = smul.addr %s193, 2
        %s195 = smul.addr %s194, 4
        %s196 = scalar_lea.vmem %s0, %s195
        %s197 = smul.u32 32, %s17
      $region28: #{_lambda_.8} parent=23 // pred_fallthru
        _
      // Predicated region
      $region29: #{_lambda_.8} parent=23 // pred_check
        %p198 = pneg %p122
      $region30: #{_lambda_.8} parent=23 // pred_check_branch
        %200 = sbr.rel (%p198) target = $region32
      $region31: #{_lambda_.8} parent=23 // pred_region
        %s201 = smul.u32 32, %s17
        %p202 = scmp.lt.s32.totalorder %s201, 63
        %s203 = scalar_select %p202, %s201, 63
        %p204 = scmp.lt.s32.totalorder %s18, 0
        %s205 = scalar_select %p204, %s18, 0
        %s206 = sadd.s32 %s205, %s203
        %s207 = smul.addr %s206, 8
        %s208 = scalar_lea.vmem %s3, %s207
        %s209 = smul.u32 32, %s17
      $region32: #{_lambda_.8} parent=23 // pred_fallthru
        _
    $region24: #{_lambda_.8} parent=5 // pred_fallthru
      _
    %p210 = scmp.le.s32.totalorder 1, %s10
    %p211 = scmp.lt.s32.totalorder %s10, 3
    %p212 = pnand %p210, %p211
    %p213 = pneg %p212
    // Predicated region
    $region33: #{_lambda_.8} parent=5 // pred_check
      _
    $region34: #{_lambda_.8} parent=5 // pred_check_branch
      %215 = sbr.rel (%p212) target = $region36
    $region35: #{_lambda_.8} parent=5 // pred_region
      %s216 = ssub.s32 %s10, 1
      %s217 = smul.u32 32, %s19
      %p218 = scmp.lt.s32.totalorder %s217, 63
      %s219 = scalar_select %p218, %s217, 63
      %s220 = smul.addr %s219, 2
      %s221 = smul.addr %s220, 4
      %s222 = scalar_lea.vmem %s0, %s221
      %p223 = pneg %p48
      %p224 = pneg %p45
      %p225 = scmp.lt.s32.totalorder %s20, 0
      %s226 = scalar_select %p225, %s20, 0
      %s227 = smul.addr %s226, 4
      %s228 = scalar_lea.vmem %s1, %s227
      %p229 = pneg %p74
      %p230 = pneg %p71
      %p231 = scmp.lt.s32.totalorder %s20, 0
      %s232 = scalar_select %p231, %s20, 0
      %s233 = scalar_lea.vmem %s2, %s232
      %p234 = pneg %p100
      %p235 = pneg %p97
      %s236 = smul.u32 32, %s19
      %p237 = scmp.lt.s32.totalorder %s236, 63
      %s238 = scalar_select %p237, %s236, 63
      %p239 = scmp.lt.s32.totalorder %s20, 0
      %s240 = scalar_select %p239, %s20, 0
      %s241 = sadd.s32 %s240, %s238
      %s242 = smul.addr %s241, 8
      %s243 = scalar_lea.vmem %s3, %s242
      %p244 = pneg %p128
      %p245 = pneg %p125
      %p246 = pneg %p156
      %p247 = pneg %p153
      %s248 = smul.u32 32, %s19
      %p249 = scmp.lt.s32.totalorder %s248, 63
      %s250 = scalar_select %p249, %s248, 63
      %p251 = scmp.lt.s32.totalorder %s20, 0
      %s252 = scalar_select %p251, %s20, 0
      %s253 = sadd.s32 %s252, %s250
      %s254 = smul.addr %s253, 8
      %s255 = scalar_lea.vmem %s4, %s254
      %s256 = smul.u32 32, %s19
      %p257 = scmp.lt.s32.totalorder %s256, 63
      %s258 = scalar_select %p257, %s256, 63
      %s259 = smul.addr %s258, 2
      %s260 = smul.addr %s259, 4
      %s261 = scalar_lea.vmem %s0, %s260
      %s262 = smul.u32 32, %s19
      %p263 = scmp.lt.s32.totalorder %s20, 0
      %s264 = scalar_select %p263, %s20, 0
      %s265 = smul.addr %s264, 4
      %s266 = scalar_lea.vmem %s1, %s265
      %p267 = scmp.lt.s32.totalorder %s20, 0
      %s268 = scalar_select %p267, %s20, 0
      %s269 = scalar_lea.vmem %s2, %s268
      %s270 = smul.u32 32, %s19
      %p271 = scmp.lt.s32.totalorder %s270, 63
      %s272 = scalar_select %p271, %s270, 63
      %p273 = scmp.lt.s32.totalorder %s20, 0
      %s274 = scalar_select %p273, %s20, 0
      %s275 = sadd.s32 %s274, %s272
      %s276 = smul.addr %s275, 8
      %s277 = scalar_lea.vmem %s3, %s276
      %s278 = smul.u32 32, %s19
      %s279 = smul.u32 32, %s19
      %p280 = scmp.lt.s32.totalorder %s279, 63
      %s281 = scalar_select %p280, %s279, 63
      %p282 = scmp.lt.s32.totalorder %s20, 0
      %s283 = scalar_select %p282, %s20, 0
      %s284 = sadd.s32 %s283, %s281
      %s285 = smul.addr %s284, 8
      %s286 = scalar_lea.vmem %s4, %s285
      %s287 = smul.u32 32, %s19
      %v289 = vld [vmem:[%s261] sm:$0xff]
      %v290 = vld [vmem:[%s261 + $0x8] sm:$0xff]
      %v291 = vld [vmem:[%s261 + $0x10] sm:$0xff]
      %v292 = vld [vmem:[%s261 + $0x18] sm:$0xff]
      %v293 = vld [vmem:[%s261 + $0x20] sm:$0xff]
      %v294 = vld [vmem:[%s261 + $0x28] sm:$0xff]
      %v295 = vld [vmem:[%s261 + $0x30] sm:$0xff]
      %v296 = vld [vmem:[%s261 + $0x38] sm:$0xff]
      %v297 = vld [vmem:[%s261 + $0x40] sm:$0xff]
      %v298 = vld [vmem:[%s261 + $0x48] sm:$0xff]
      %v299 = vld [vmem:[%s261 + $0x50] sm:$0xff]
      %v300 = vld [vmem:[%s261 + $0x58] sm:$0xff]
      %v301 = vld [vmem:[%s261 + $0x60] sm:$0xff]
      %v302 = vld [vmem:[%s261 + $0x68] sm:$0xff]
      %v303 = vld [vmem:[%s261 + $0x70] sm:$0xff]
      %v304 = vld [vmem:[%s261 + $0x78] sm:$0xff]
      %v305 = vld [vmem:[%s261 + $0x80] sm:$0xff]
      %v306 = vld [vmem:[%s261 + $0x88] sm:$0xff]
      %v307 = vld [vmem:[%s261 + $0x90] sm:$0xff]
      %v308 = vld [vmem:[%s261 + $0x98] sm:$0xff]
      %v309 = vld [vmem:[%s261 + $0xa0] sm:$0xff]
      %v310 = vld [vmem:[%s261 + $0xa8] sm:$0xff]
      %v311 = vld [vmem:[%s261 + $0xb0] sm:$0xff]
      %v312 = vld [vmem:[%s261 + $0xb8] sm:$0xff]
      %v313 = vld [vmem:[%s261 + $0xc0] sm:$0xff]
      %v314 = vld [vmem:[%s261 + $0xc8] sm:$0xff]
      %v315 = vld [vmem:[%s261 + $0xd0] sm:$0xff]
      %v316 = vld [vmem:[%s261 + $0xd8] sm:$0xff]
      %v317 = vld [vmem:[%s261 + $0xe0] sm:$0xff]
      %v318 = vld [vmem:[%s261 + $0xe8] sm:$0xff]
      %v319 = vld [vmem:[%s261 + $0xf0] sm:$0xff]
      %v320 = vld [vmem:[%s261 + $0xf8] sm:$0xff]
      %v321 = vld [vmem:[%s266] sm:$0xf]
      %v322 = vld [vmem:[%s266 + $0x4] sm:$0xf]
      %v323 = vld [vmem:[%s266 + $0x8] sm:$0xf]
      %v324 = vld [vmem:[%s266 + $0xc] sm:$0xf]
      %v325 = vld [vmem:[%s266 + $0x10] sm:$0xf]
      %v326 = vld [vmem:[%s266 + $0x14] sm:$0xf]
      %v327 = vld [vmem:[%s266 + $0x18] sm:$0xf]
      %v328 = vld [vmem:[%s266 + $0x1c] sm:$0xf]
      %v329 = vld [vmem:[%s266 + $0x20] sm:$0xf]
      %v330 = vld [vmem:[%s266 + $0x24] sm:$0xf]
      %v331 = vld [vmem:[%s266 + $0x28] sm:$0xf]
      %v332 = vld [vmem:[%s266 + $0x2c] sm:$0xf]
      %v333 = vld [vmem:[%s266 + $0x30] sm:$0xf]
      %v334 = vld [vmem:[%s266 + $0x34] sm:$0xf]
      %v335 = vld [vmem:[%s266 + $0x38] sm:$0xf]
      %v336 = vld [vmem:[%s266 + $0x3c] sm:$0xf]
      %v337 = vld [vmem:[%s266 + $0x40] sm:$0xf]
      %v338 = vld [vmem:[%s266 + $0x44] sm:$0xf]
      %v339 = vld [vmem:[%s266 + $0x48] sm:$0xf]
      %v340 = vld [vmem:[%s266 + $0x4c] sm:$0xf]
      %v341 = vld [vmem:[%s266 + $0x50] sm:$0xf]
      %v342 = vld [vmem:[%s266 + $0x54] sm:$0xf]
      %v343 = vld [vmem:[%s266 + $0x58] sm:$0xf]
      %v344 = vld [vmem:[%s266 + $0x5c] sm:$0xf]
      %v345 = vld [vmem:[%s266 + $0x60] sm:$0xf]
      %v346 = vld [vmem:[%s266 + $0x64] sm:$0xf]
      %v347 = vld [vmem:[%s266 + $0x68] sm:$0xf]
      %v348 = vld [vmem:[%s266 + $0x6c] sm:$0xf]
      %v349 = vld [vmem:[%s266 + $0x70] sm:$0xf]
      %v350 = vld [vmem:[%s266 + $0x74] sm:$0xf]
      %v351 = vld [vmem:[%s266 + $0x78] sm:$0xf]
      %v352 = vld [vmem:[%s266 + $0x7c] sm:$0xf]
      %v353 = vld [vmem:[%s269] sm:$0x1]
      %v355 = vlaneseq
      %v356 = vshrl.u32 %v355, 7
      %v357 = vsub.s32 0, %v356
      %v358 = vrot.slane %v353, %v357
      %v392 = vunpack.c.l.b16 %v289
      %v393 = vunpack.c.h.b16 %v289
      %v394 = vunpack.c.l.b16 %v290
      %v395 = vunpack.c.h.b16 %v290
      %v396 = vunpack.c.l.b16 %v291
      %v397 = vunpack.c.h.b16 %v291
      %v398 = vunpack.c.l.b16 %v292
      %v399 = vunpack.c.h.b16 %v292
      %v400 = vunpack.c.l.b16 %v293
      %v401 = vunpack.c.h.b16 %v293
      %v402 = vunpack.c.l.b16 %v294
      %v403 = vunpack.c.h.b16 %v294
      %v404 = vunpack.c.l.b16 %v295
      %v405 = vunpack.c.h.b16 %v295
      %v406 = vunpack.c.l.b16 %v296
      %v407 = vunpack.c.h.b16 %v296
      %v408 = vunpack.c.l.b16 %v297
      %v409 = vunpack.c.h.b16 %v297
      %v410 = vunpack.c.l.b16 %v298
      %v411 = vunpack.c.h.b16 %v298
      %v412 = vunpack.c.l.b16 %v299
      %v413 = vunpack.c.h.b16 %v299
      %v414 = vunpack.c.l.b16 %v300
      %v415 = vunpack.c.h.b16 %v300
      %v416 = vunpack.c.l.b16 %v301
      %v417 = vunpack.c.h.b16 %v301
      %v418 = vunpack.c.l.b16 %v302
      %v419 = vunpack.c.h.b16 %v302
      %v420 = vunpack.c.l.b16 %v303
      %v421 = vunpack.c.h.b16 %v303
      %v422 = vunpack.c.l.b16 %v304
      %v423 = vunpack.c.h.b16 %v304
      %v424 = vunpack.c.l.b16 %v305
      %v425 = vunpack.c.h.b16 %v305
      %v426 = vunpack.c.l.b16 %v306
      %v427 = vunpack.c.h.b16 %v306
      %v428 = vunpack.c.l.b16 %v307
      %v429 = vunpack.c.h.b16 %v307
      %v430 = vunpack.c.l.b16 %v308
      %v431 = vunpack.c.h.b16 %v308
      %v432 = vunpack.c.l.b16 %v309
      %v433 = vunpack.c.h.b16 %v309
      %v434 = vunpack.c.l.b16 %v310
      %v435 = vunpack.c.h.b16 %v310
      %v436 = vunpack.c.l.b16 %v311
      %v437 = vunpack.c.h.b16 %v311
      %v438 = vunpack.c.l.b16 %v312
      %v439 = vunpack.c.h.b16 %v312
      %v440 = vunpack.c.l.b16 %v313
      %v441 = vunpack.c.h.b16 %v313
      %v442 = vunpack.c.l.b16 %v314
      %v443 = vunpack.c.h.b16 %v314
      %v444 = vunpack.c.l.b16 %v315
      %v445 = vunpack.c.h.b16 %v315
      %v446 = vunpack.c.l.b16 %v316
      %v447 = vunpack.c.h.b16 %v316
      %v448 = vunpack.c.l.b16 %v317
      %v449 = vunpack.c.h.b16 %v317
      %v450 = vunpack.c.l.b16 %v318
      %v451 = vunpack.c.h.b16 %v318
      %v452 = vunpack.c.l.b16 %v319
      %v453 = vunpack.c.h.b16 %v319
      %v454 = vunpack.c.l.b16 %v320
      %v455 = vunpack.c.h.b16 %v320
      %v456 = vpack.c.b16 %v394, %v392
      %v457 = vpack.c.b16 %v395, %v393
      %v458 = vpack.c.b16 %v398, %v396
      %v459 = vpack.c.b16 %v399, %v397
      %v460 = vpack.c.b16 %v402, %v400
      %v461 = vpack.c.b16 %v403, %v401
      %v462 = vpack.c.b16 %v406, %v404
      %v463 = vpack.c.b16 %v407, %v405
      %v464 = vpack.c.b16 %v410, %v408
      %v465 = vpack.c.b16 %v411, %v409
      %v466 = vpack.c.b16 %v414, %v412
      %v467 = vpack.c.b16 %v415, %v413
      %v468 = vpack.c.b16 %v418, %v416
      %v469 = vpack.c.b16 %v419, %v417
      %v470 = vpack.c.b16 %v422, %v420
      %v471 = vpack.c.b16 %v423, %v421
      %v472 = vpack.c.b16 %v426, %v424
      %v473 = vpack.c.b16 %v427, %v425
      %v474 = vpack.c.b16 %v430, %v428
      %v475 = vpack.c.b16 %v431, %v429
      %v476 = vpack.c.b16 %v434, %v432
      %v477 = vpack.c.b16 %v435, %v433
      %v478 = vpack.c.b16 %v438, %v436
      %v479 = vpack.c.b16 %v439, %v437
      %v480 = vpack.c.b16 %v442, %v440
      %v481 = vpack.c.b16 %v443, %v441
      %v482 = vpack.c.b16 %v446, %v444
      %v483 = vpack.c.b16 %v447, %v445
      %v484 = vpack.c.b16 %v450, %v448
      %v485 = vpack.c.b16 %v451, %v449
      %v486 = vpack.c.b16 %v454, %v452
      %v487 = vpack.c.b16 %v455, %v453
      %v552 = vunpack.c.l.b16 %v321
      %v553 = vunpack.c.l.b16 %v322
      %v554 = vunpack.c.l.b16 %v323
      %v555 = vunpack.c.l.b16 %v324
      %v556 = vunpack.c.l.b16 %v325
      %v557 = vunpack.c.l.b16 %v326
      %v558 = vunpack.c.l.b16 %v327
      %v559 = vunpack.c.l.b16 %v328
      %v560 = vunpack.c.l.b16 %v329
      %v561 = vunpack.c.l.b16 %v330
      %v562 = vunpack.c.l.b16 %v331
      %v563 = vunpack.c.l.b16 %v332
      %v564 = vunpack.c.l.b16 %v333
      %v565 = vunpack.c.l.b16 %v334
      %v566 = vunpack.c.l.b16 %v335
      %v567 = vunpack.c.l.b16 %v336
      %v568 = vunpack.c.l.b16 %v337
      %v569 = vunpack.c.l.b16 %v338
      %v570 = vunpack.c.l.b16 %v339
      %v571 = vunpack.c.l.b16 %v340
      %v572 = vunpack.c.l.b16 %v341
      %v573 = vunpack.c.l.b16 %v342
      %v574 = vunpack.c.l.b16 %v343
      %v575 = vunpack.c.l.b16 %v344
      %v576 = vunpack.c.l.b16 %v345
      %v577 = vunpack.c.l.b16 %v346
      %v578 = vunpack.c.l.b16 %v347
      %v579 = vunpack.c.l.b16 %v348
      %v580 = vunpack.c.l.b16 %v349
      %v581 = vunpack.c.l.b16 %v350
      %v582 = vunpack.c.l.b16 %v351
      %v583 = vunpack.c.l.b16 %v352
      %v584 = vpack.c.b16 %v553, %v552
      %v585 = vpack.c.b16 %v555, %v554
      %v586 = vpack.c.b16 %v557, %v556
      %v587 = vpack.c.b16 %v559, %v558
      %v588 = vpack.c.b16 %v561, %v560
      %v589 = vpack.c.b16 %v563, %v562
      %v590 = vpack.c.b16 %v565, %v564
      %v591 = vpack.c.b16 %v567, %v566
      %v592 = vpack.c.b16 %v569, %v568
      %v593 = vpack.c.b16 %v571, %v570
      %v594 = vpack.c.b16 %v573, %v572
      %v595 = vpack.c.b16 %v575, %v574
      %v596 = vpack.c.b16 %v577, %v576
      %v597 = vpack.c.b16 %v579, %v578
      %v598 = vpack.c.b16 %v581, %v580
      %v599 = vpack.c.b16 %v583, %v582
      %616 = vmatprep.subr.bf16.mxu0 0
      %617 = vmatpush1.bf16.msra.mxu0 %v584
      %618 = vmatprep.subr.bf16.mxu0 0
      %619 = vmatpush1.bf16.msra.mxu0 %v585
      %620 = vmatprep.subr.bf16.mxu0 0
      %621 = vmatpush1.bf16.msra.mxu0 %v586
      %622 = vmatprep.subr.bf16.mxu0 0
      %623 = vmatpush1.bf16.msra.mxu0 %v587
      %624 = vmatprep.subr.bf16.mxu0 0
      %625 = vmatpush1.bf16.msra.mxu0 %v588
      %626 = vmatprep.subr.bf16.mxu0 0
      %627 = vmatpush1.bf16.msra.mxu0 %v589
      %628 = vmatprep.subr.bf16.mxu0 0
      %629 = vmatpush1.bf16.msra.mxu0 %v590
      %630 = vmatprep.subr.bf16.mxu0 0
      %631 = vmatpush1.bf16.msra.mxu0 %v591
      %632 = vmatprep.subr.bf16.mxu0 0
      %633 = vmatpush1.bf16.msra.mxu0 %v592
      %634 = vmatprep.subr.bf16.mxu0 0
      %635 = vmatpush1.bf16.msra.mxu0 %v593
      %636 = vmatprep.subr.bf16.mxu0 0
      %637 = vmatpush1.bf16.msra.mxu0 %v594
      %638 = vmatprep.subr.bf16.mxu0 0
      %639 = vmatpush1.bf16.msra.mxu0 %v595
      %640 = vmatprep.subr.bf16.mxu0 0
      %641 = vmatpush1.bf16.msra.mxu0 %v596
      %642 = vmatprep.subr.bf16.mxu0 0
      %643 = vmatpush1.bf16.msra.mxu0 %v597
      %644 = vmatprep.subr.bf16.mxu0 0
      %645 = vmatpush1.bf16.msra.mxu0 %v598
      %646 = vmatprep.subr.bf16.mxu0 0
      %647 = vmatpush1.bf16.msra.mxu0 %v599
      %648 = vmatprep.mubr.bf16.mxu0 %v457
      %649 = vmatmul.mubr.bf16.gmra.mrb[0].mxu0 %v456
      %v650 = vpop.f32.mrb[0].mxu0
      %v651 = vadd.f32 %v358, %v650
      %v652 = vpop.f32.mrb[0].mxu0
      %v653 = vpop.f32.mrb[0].mxu0
      %v654 = vadd.f32 %v358, %v653
      %v655 = vpop.f32.mrb[0].mxu0
      %656 = vmatprep.mubr.bf16.mxu0 %v459
      %657 = vmatmul.mubr.bf16.gmra.mrb[0].mxu0 %v458
      %v658 = vpop.f32.mrb[0].mxu0
      %v659 = vadd.f32 %v358, %v658
      %v660 = vpop.f32.mrb[0].mxu0
      %v661 = vpop.f32.mrb[0].mxu0
      %v662 = vadd.f32 %v358, %v661
      %v663 = vpop.f32.mrb[0].mxu0
      %664 = vmatprep.mubr.bf16.mxu0 %v461
      %665 = vmatmul.mubr.bf16.gmra.mrb[0].mxu0 %v460
      %v666 = vpop.f32.mrb[0].mxu0
      %v667 = vadd.f32 %v358, %v666
      %v668 = vpop.f32.mrb[0].mxu0
      %v669 = vpop.f32.mrb[0].mxu0
      %v670 = vadd.f32 %v358, %v669
      %v671 = vpop.f32.mrb[0].mxu0
      %672 = vmatprep.mubr.bf16.mxu0 %v463
      %673 = vmatmul.mubr.bf16.gmra.mrb[0].mxu0 %v462
      %v674 = vpop.f32.mrb[0].mxu0
      %v675 = vadd.f32 %v358, %v674
      %v676 = vpop.f32.mrb[0].mxu0
      %v677 = vpop.f32.mrb[0].mxu0
      %v678 = vadd.f32 %v358, %v677
      %v679 = vpop.f32.mrb[0].mxu0
      %680 = vmatprep.mubr.bf16.mxu0 %v465
      %681 = vmatmul.mubr.bf16.gmra.mrb[0].mxu0 %v464
      %v682 = vpop.f32.mrb[0].mxu0
      %v683 = vadd.f32 %v358, %v682
      %v684 = vpop.f32.mrb[0].mxu0
      %v685 = vpop.f32.mrb[0].mxu0
      %v686 = vadd.f32 %v358, %v685
      %v687 = vpop.f32.mrb[0].mxu0
      %688 = vmatprep.mubr.bf16.mxu0 %v467
      %689 = vmatmul.mubr.bf16.gmra.mrb[0].mxu0 %v466
      %v690 = vpop.f32.mrb[0].mxu0
      %v691 = vadd.f32 %v358, %v690
      %v692 = vpop.f32.mrb[0].mxu0
      %v693 = vpop.f32.mrb[0].mxu0
      %v694 = vadd.f32 %v358, %v693
      %v695 = vpop.f32.mrb[0].mxu0
      %696 = vmatprep.mubr.bf16.mxu0 %v469
      %697 = vmatmul.mubr.bf16.gmra.mrb[0].mxu0 %v468
      %v698 = vpop.f32.mrb[0].mxu0
      %v699 = vadd.f32 %v358, %v698
      %v700 = vpop.f32.mrb[0].mxu0
      %v701 = vpop.f32.mrb[0].mxu0
      %v702 = vadd.f32 %v358, %v701
      %v703 = vpop.f32.mrb[0].mxu0
      %704 = vmatprep.mubr.bf16.mxu0 %v471
      %705 = vmatmul.mubr.bf16.gmra.mrb[0].mxu0 %v470
      %v706 = vpop.f32.mrb[0].mxu0
      %v707 = vadd.f32 %v358, %v706
      %v708 = vpop.f32.mrb[0].mxu0
      %v709 = vpop.f32.mrb[0].mxu0
      %v710 = vadd.f32 %v358, %v709
      %v711 = vpop.f32.mrb[0].mxu0
      %712 = vmatprep.mubr.bf16.mxu0 %v473
      %713 = vmatmul.mubr.bf16.gmra.mrb[0].mxu0 %v472
      %v714 = vpop.f32.mrb[0].mxu0
      %v715 = vadd.f32 %v358, %v714
      %v716 = vpop.f32.mrb[0].mxu0
      %v717 = vpop.f32.mrb[0].mxu0
      %v718 = vadd.f32 %v358, %v717
      %v719 = vpop.f32.mrb[0].mxu0
      %720 = vmatprep.mubr.bf16.mxu0 %v475
      %721 = vmatmul.mubr.bf16.gmra.mrb[0].mxu0 %v474
      %v722 = vpop.f32.mrb[0].mxu0
      %v723 = vadd.f32 %v358, %v722
      %v724 = vpop.f32.mrb[0].mxu0
      %v725 = vpop.f32.mrb[0].mxu0
      %v726 = vadd.f32 %v358, %v725
      %v727 = vpop.f32.mrb[0].mxu0
      %728 = vmatprep.mubr.bf16.mxu0 %v477
      %729 = vmatmul.mubr.bf16.gmra.mrb[0].mxu0 %v476
      %v730 = vpop.f32.mrb[0].mxu0
      %v731 = vadd.f32 %v358, %v730
      %v732 = vpop.f32.mrb[0].mxu0
      %v733 = vpop.f32.mrb[0].mxu0
      %v734 = vadd.f32 %v358, %v733
      %v735 = vpop.f32.mrb[0].mxu0
      %736 = vmatprep.mubr.bf16.mxu0 %v479
      %737 = vmatmul.mubr.bf16.gmra.mrb[0].mxu0 %v478
      %v738 = vpop.f32.mrb[0].mxu0
      %v739 = vadd.f32 %v358, %v738
      %v740 = vpop.f32.mrb[0].mxu0
      %v741 = vpop.f32.mrb[0].mxu0
      %v742 = vadd.f32 %v358, %v741
      %v743 = vpop.f32.mrb[0].mxu0
      %744 = vmatprep.mubr.bf16.mxu0 %v481
      %745 = vmatmul.mubr.bf16.gmra.mrb[0].mxu0 %v480
      %v746 = vpop.f32.mrb[0].mxu0
      %v747 = vadd.f32 %v358, %v746
      %v748 = vpop.f32.mrb[0].mxu0
      %v749 = vpop.f32.mrb[0].mxu0
      %v750 = vadd.f32 %v358, %v749
      %v751 = vpop.f32.mrb[0].mxu0
      %752 = vmatprep.mubr.bf16.mxu0 %v483
      %753 = vmatmul.mubr.bf16.gmra.mrb[0].mxu0 %v482
      %v754 = vpop.f32.mrb[0].mxu0
      %v755 = vadd.f32 %v358, %v754
      %v756 = vpop.f32.mrb[0].mxu0
      %v757 = vpop.f32.mrb[0].mxu0
      %v758 = vadd.f32 %v358, %v757
      %v759 = vpop.f32.mrb[0].mxu0
      %760 = vmatprep.mubr.bf16.mxu0 %v485
      %761 = vmatmul.mubr.bf16.gmra.mrb[0].mxu0 %v484
      %v762 = vpop.f32.mrb[0].mxu0
      %v763 = vadd.f32 %v358, %v762
      %v764 = vpop.f32.mrb[0].mxu0
      %v765 = vpop.f32.mrb[0].mxu0
      %v766 = vadd.f32 %v358, %v765
      %v767 = vpop.f32.mrb[0].mxu0
      %768 = vmatprep.mubr.bf16.mxu0 %v487
      %769 = vmatmul.mubr.bf16.gmra.mrb[0].mxu0 %v486
      %v770 = vpop.f32.mrb[0].mxu0
      %v771 = vadd.f32 %v358, %v770
      %v772 = vpop.f32.mrb[0].mxu0
      %v773 = vpop.f32.mrb[0].mxu0
      %v774 = vadd.f32 %v358, %v773
      %v775 = vpop.f32.mrb[0].mxu0
      %776 = vdwg.mxu0
      %v777 = vld [vmem:[%s277] sm:$0xff]
      %v778 = vld [vmem:[%s277 + $0x8] sm:$0xff]
      %v779 = vld [vmem:[%s277 + $0x10] sm:$0xff]
      %v780 = vld [vmem:[%s277 + $0x18] sm:$0xff]
      %v781 = vld [vmem:[%s277 + $0x20] sm:$0xff]
      %v782 = vld [vmem:[%s277 + $0x28] sm:$0xff]
      %v783 = vld [vmem:[%s277 + $0x30] sm:$0xff]
      %v784 = vld [vmem:[%s277 + $0x38] sm:$0xff]
      %v785 = vld [vmem:[%s277 + $0x40] sm:$0xff]
      %v786 = vld [vmem:[%s277 + $0x48] sm:$0xff]
      %v787 = vld [vmem:[%s277 + $0x50] sm:$0xff]
      %v788 = vld [vmem:[%s277 + $0x58] sm:$0xff]
      %v789 = vld [vmem:[%s277 + $0x60] sm:$0xff]
      %v790 = vld [vmem:[%s277 + $0x68] sm:$0xff]
      %v791 = vld [vmem:[%s277 + $0x70] sm:$0xff]
      %v792 = vld [vmem:[%s277 + $0x78] sm:$0xff]
      %v793 = vld [vmem:[%s277 + $0x80] sm:$0xff]
      %v794 = vld [vmem:[%s277 + $0x88] sm:$0xff]
      %v795 = vld [vmem:[%s277 + $0x90] sm:$0xff]
      %v796 = vld [vmem:[%s277 + $0x98] sm:$0xff]
      %v797 = vld [vmem:[%s277 + $0xa0] sm:$0xff]
      %v798 = vld [vmem:[%s277 + $0xa8] sm:$0xff]
      %v799 = vld [vmem:[%s277 + $0xb0] sm:$0xff]
      %v800 = vld [vmem:[%s277 + $0xb8] sm:$0xff]
      %v801 = vld [vmem:[%s277 + $0xc0] sm:$0xff]
      %v802 = vld [vmem:[%s277 + $0xc8] sm:$0xff]
      %v803 = vld [vmem:[%s277 + $0xd0] sm:$0xff]
      %v804 = vld [vmem:[%s277 + $0xd8] sm:$0xff]
      %v805 = vld [vmem:[%s277 + $0xe0] sm:$0xff]
      %v806 = vld [vmem:[%s277 + $0xe8] sm:$0xff]
      %v807 = vld [vmem:[%s277 + $0xf0] sm:$0xff]
      %v808 = vld [vmem:[%s277 + $0xf8] sm:$0xff]
      %v809 = vadd.f32 %v651, %v777
      %v810 = vadd.f32 %v654, %v778
      %v811 = vadd.f32 %v659, %v779
      %v812 = vadd.f32 %v662, %v780
      %v813 = vadd.f32 %v667, %v781
      %v814 = vadd.f32 %v670, %v782
      %v815 = vadd.f32 %v675, %v783
      %v816 = vadd.f32 %v678, %v784
      %v817 = vadd.f32 %v683, %v785
      %v818 = vadd.f32 %v686, %v786
      %v819 = vadd.f32 %v691, %v787
      %v820 = vadd.f32 %v694, %v788
      %v821 = vadd.f32 %v699, %v789
      %v822 = vadd.f32 %v702, %v790
      %v823 = vadd.f32 %v707, %v791
      %v824 = vadd.f32 %v710, %v792
      %v825 = vadd.f32 %v715, %v793
      %v826 = vadd.f32 %v718, %v794
      %v827 = vadd.f32 %v723, %v795
      %v828 = vadd.f32 %v726, %v796
      %v829 = vadd.f32 %v731, %v797
      %v830 = vadd.f32 %v734, %v798
      %v831 = vadd.f32 %v739, %v799
      %v832 = vadd.f32 %v742, %v800
      %v833 = vadd.f32 %v747, %v801
      %v834 = vadd.f32 %v750, %v802
      %v835 = vadd.f32 %v755, %v803
      %v836 = vadd.f32 %v758, %v804
      %v837 = vadd.f32 %v763, %v805
      %v838 = vadd.f32 %v766, %v806
      %v839 = vadd.f32 %v771, %v807
      %v840 = vadd.f32 %v774, %v808
      %841 = vst [vmem:[%s286] sm:$0xff] %v809
      %842 = vst [vmem:[%s286 + $0x8] sm:$0xff] %v810
      %843 = vst [vmem:[%s286 + $0x10] sm:$0xff] %v811
      %844 = vst [vmem:[%s286 + $0x18] sm:$0xff] %v812
      %845 = vst [vmem:[%s286 + $0x20] sm:$0xff] %v813
      %846 = vst [vmem:[%s286 + $0x28] sm:$0xff] %v814
      %847 = vst [vmem:[%s286 + $0x30] sm:$0xff] %v815
      %848 = vst [vmem:[%s286 + $0x38] sm:$0xff] %v816
      %849 = vst [vmem:[%s286 + $0x40] sm:$0xff] %v817
      %850 = vst [vmem:[%s286 + $0x48] sm:$0xff] %v818
      %851 = vst [vmem:[%s286 + $0x50] sm:$0xff] %v819
      %852 = vst [vmem:[%s286 + $0x58] sm:$0xff] %v820
      %853 = vst [vmem:[%s286 + $0x60] sm:$0xff] %v821
      %854 = vst [vmem:[%s286 + $0x68] sm:$0xff] %v822
      %855 = vst [vmem:[%s286 + $0x70] sm:$0xff] %v823
      %856 = vst [vmem:[%s286 + $0x78] sm:$0xff] %v824
      %857 = vst [vmem:[%s286 + $0x80] sm:$0xff] %v825
      %858 = vst [vmem:[%s286 + $0x88] sm:$0xff] %v826
      %859 = vst [vmem:[%s286 + $0x90] sm:$0xff] %v827
      %860 = vst [vmem:[%s286 + $0x98] sm:$0xff] %v828
      %861 = vst [vmem:[%s286 + $0xa0] sm:$0xff] %v829
      %862 = vst [vmem:[%s286 + $0xa8] sm:$0xff] %v830
      %863 = vst [vmem:[%s286 + $0xb0] sm:$0xff] %v831
      %864 = vst [vmem:[%s286 + $0xb8] sm:$0xff] %v832
      %865 = vst [vmem:[%s286 + $0xc0] sm:$0xff] %v833
      %866 = vst [vmem:[%s286 + $0xc8] sm:$0xff] %v834
      %867 = vst [vmem:[%s286 + $0xd0] sm:$0xff] %v835
      %868 = vst [vmem:[%s286 + $0xd8] sm:$0xff] %v836
      %869 = vst [vmem:[%s286 + $0xe0] sm:$0xff] %v837
      %870 = vst [vmem:[%s286 + $0xe8] sm:$0xff] %v838
      %871 = vst [vmem:[%s286 + $0xf0] sm:$0xff] %v839
      %872 = vst [vmem:[%s286 + $0xf8] sm:$0xff] %v840
      %s873 = smul.u32 32, %s19
      %p874 = scmp.lt.s32.totalorder %s873, 63
      %s875 = scalar_select %p874, %s873, 63
      %p876 = scmp.lt.s32.totalorder %s20, 0
      %s877 = scalar_select %p876, %s20, 0
      %s878 = sadd.s32 %s877, %s875
      %s879 = smul.addr %s878, 8
      %s880 = scalar_lea.vmem %s4, %s879
      // Predicated region
      $region37: #{_lambda_.8} parent=35 // pred_check
        %p881 = pneg %p153
      $region38: #{_lambda_.8} parent=35 // pred_check_branch
        %883 = sbr.rel (%p881) target = $region40
      $region39: #{_lambda_.8} parent=35 // pred_region
        %s884 = smul.u32 32, %s19
      $region40: #{_lambda_.8} parent=35 // pred_fallthru
        _
    $region36: #{_lambda_.8} parent=5 // pred_fallthru
      _
    %p885 = scmp.le.s32.totalorder 2, %s10
    // Predicated region
    $region41: #{_lambda_.8} parent=5 // pred_check
      %p886 = pneg %p885
    $region42: #{_lambda_.8} parent=5 // pred_check_branch
      %888 = sbr.rel (%p886) target = $region44
    $region43: #{_lambda_.8} parent=5 // pred_region
      %s889 = ssub.s32 %s10, 2
      // Predicated region
      $region45: #{_lambda_.8} parent=43 // pred_check
        %p890 = pneg %p159
      $region46: #{_lambda_.8} parent=43 // pred_check_branch
        %892 = sbr.rel (%p890) target = $region48
      $region47: #{_lambda_.8} parent=43 // pred_region
        %s893 = smul.u32 32, %s21
        %p894 = scmp.lt.s32.totalorder %s893, 63
        %s895 = scalar_select %p894, %s893, 63
        %p896 = scmp.lt.s32.totalorder %s22, 0
        %s897 = scalar_select %p896, %s22, 0
        %s898 = sadd.s32 %s897, %s895
        %s899 = smul.addr %s898, 8
        %s900 = scalar_lea.vmem %s4, %s899
      $region48: #{_lambda_.8} parent=43 // pred_fallthru
        _
    $region44: #{_lambda_.8} parent=5 // pred_fallthru
      _
  $region6: #{_lambda_.8} parent=0 // loop_footer
    %s14 = sadd.s32 1, %s10
  $region7: #{_lambda_.8} parent=0 // loop_footer_branch
    %9 = sbr.rel target = $region3
  $region8: #{_lambda_.8} parent=0 // loop_exit
    _

// kernel: _lambda_.11
$region0: #{_lambda_.11}
  #allocation0 [shape = 'u32[]', space=smem, size = 0x4, offset = 0x4, fixed_abs, tag = 'smem constant byte address 0x4 - core index']
  #allocation1 [shape = 'u32[144,128]{1,0:T(1,128)}', space=vmem, size = 0x12000, scoped, tag = 'internal scratch']
  %s0 = inlined_call_operand.vmem [shape: f32[512,128], index: 0, kind: input, shape index: {}]
  %s1 = inlined_call_operand.vmem [shape: bf16[128,128], index: 1, kind: input, shape index: {}]
  %s2 = inlined_call_operand.vmem [shape: f32[1,128], index: 2, kind: input, shape index: {}, may-alias: {2,4,6}]
  %s3 = inlined_call_operand.vmem [shape: bf16[128,128], index: 3, kind: input, shape index: {}]
  %s4 = inlined_call_operand.vmem [shape: f32[1,128], index: 4, kind: input, shape index: {}, may-alias: {2,4,6}]
  %s5 = inlined_call_operand.vmem [shape: bf16[128,128], index: 5, kind: input, shape index: {}]
  %s6 = inlined_call_operand.vmem [shape: f32[1,128], index: 6, kind: input, shape index: {}, may-alias: {2,4,6}]
  %s7 = inlined_call_operand.vmem [shape: f32[512,128], index: 7, kind: input, shape index: {}]
  %s8 = inlined_call_operand.hbm [shape: f32[1,1], index: 8, kind: output, shape index: {}]
  %s9 = sld [smem:[#allocation0]]
  $region69: #{_lambda_.11} parent=0
    _
  %s11 = ssub.s32 1, %s9
  %s12 = scalar_select 0, %s11, %s9
  $region1: #{_lambda_.11} parent=0
    #allocation2 [shape = 'u8[512]{0}', space=smem, size = 0x200, scoped, tag = 'output window, operand 0, single buffered']
    #allocation3 [shape = 's32[2]{0}', space=sflag, size = 0x8, scoped, tag = 'scoped memory for _lambda_.11']
    %13 = vsyncpa [#allocation3], 0
    loop: start=0, step=1, limit=4
    $region2: #{_lambda_.11} parent=1 // loop_pre_header
      _
    $region3: #{_lambda_.11} parent=1 // loop_header
      %s15 = sphi 0, %s19
      %p16 = scmp.ge.s32.totalorder %s15, 4
      %s25 = sphi 0, %s27
      %s28 = sphi 0, %s25
      %s29 = sphi 0, %s28
      %s45 = sphi 0, %s29
      %s49 = sphi 0, %s49
      %s51 = sphi 0, %s49
      %s52 = sphi 0, %s51
      %s66 = sphi 0, %s52
      %s70 = sphi 0, %s70
      %s72 = sphi 0, %s70
      %s73 = sphi 0, %s72
      %s87 = sphi 0, %s73
      %s91 = sphi 0, %s91
      %s93 = sphi 0, %s91
      %s94 = sphi 0, %s93
      %s108 = sphi 0, %s94
      %s112 = sphi 0, %s112
      %s114 = sphi 0, %s112
      %s115 = sphi 0, %s114
      %s129 = sphi 0, %s115
      %s133 = sphi 0, %s133
      %s135 = sphi 0, %s133
      %s136 = sphi 0, %s135
      %s150 = sphi 0, %s136
      %s154 = sphi 0, %s154
      %s156 = sphi 0, %s154
      %s157 = sphi 0, %s156
      %s171 = sphi 0, %s157
      %s177 = sphi 0, %s179
      %s180 = sphi 0, %s177
      %s181 = sphi 0, %s180
      %s197 = sphi 0, %s181
      %s201 = sphi 0, %s201
      %s203 = sphi 0, %s201
      %s204 = sphi 0, %s203
      %s218 = sphi 0, %s204
    $region4: #{_lambda_.11} parent=1 // loop_header_branch
      %18 = sbr.rel (%p16) target = $region8
    $region5: #{_lambda_.11} parent=1 // loop_body
      %s20 = ssub.s32 %s15, 1
      %s21 = ssub.s32 %s15, 2
      %s22 = sadd.s32 %s15, 1
      %s23 = ssub.s32 %s15, %s22
      %p24 = scmp.eq.s32.totalorder %s23, 0
      %s26 = sadd.s32 %s25, 1
      %s27 = scalar_select %p24, %s25, %s26
      %p30 = pneg %p24
      %p31 = scmp.eq.s32.totalorder %s15, 1
      %p32 = por %p30, %p31
      %p33 = scmp.ne.s32.totalorder %s25, %s28
      %p34 = scmp.eq.s32.totalorder %s15, 0
      %p35 = por %p33, %p34
      %p36 = scmp.ne.s32.totalorder %s25, %s28
      %p37 = scmp.eq.s32.totalorder %s20, 1
      %p38 = por %p36, %p37
      %p39 = scmp.ne.s32.totalorder %s28, %s29
      %p40 = scmp.eq.s32.totalorder %s20, 0
      %p41 = por %p39, %p40
      %p42 = scmp.ne.s32.totalorder %s28, %s29
      %p43 = scmp.eq.s32.totalorder %s21, 1
      %p44 = por %p42, %p43
      %p46 = scmp.ne.s32.totalorder %s29, %s45
      %p47 = scmp.eq.s32.totalorder %s21, 0
      %p48 = por %p46, %p47
      %s50 = sadd.s32 %s49, 1
      %p53 = scmp.eq.s32.totalorder %s15, 1
      %p54 = scmp.ne.s32.totalorder %s49, %s51
      %p55 = scmp.eq.s32.totalorder %s15, 0
      %p56 = por %p54, %p55
      %p57 = scmp.ne.s32.totalorder %s49, %s51
      %p58 = scmp.eq.s32.totalorder %s20, 1
      %p59 = por %p57, %p58
      %p60 = scmp.ne.s32.totalorder %s51, %s52
      %p61 = scmp.eq.s32.totalorder %s20, 0
      %p62 = por %p60, %p61
      %p63 = scmp.ne.s32.totalorder %s51, %s52
      %p64 = scmp.eq.s32.totalorder %s21, 1
      %p65 = por %p63, %p64
      %p67 = scmp.ne.s32.totalorder %s52, %s66
      %p68 = scmp.eq.s32.totalorder %s21, 0
      %p69 = por %p67, %p68
      %s71 = sadd.s32 %s70, 1
      %p74 = scmp.eq.s32.totalorder %s15, 1
      %p75 = scmp.ne.s32.totalorder %s70, %s72
      %p76 = scmp.eq.s32.totalorder %s15, 0
      %p77 = por %p75, %p76
      %p78 = scmp.ne.s32.totalorder %s70, %s72
      %p79 = scmp.eq.s32.totalorder %s20, 1
      %p80 = por %p78, %p79
      %p81 = scmp.ne.s32.totalorder %s72, %s73
      %p82 = scmp.eq.s32.totalorder %s20, 0
      %p83 = por %p81, %p82
      %p84 = scmp.ne.s32.totalorder %s72, %s73
      %p85 = scmp.eq.s32.totalorder %s21, 1
      %p86 = por %p84, %p85
      %p88 = scmp.ne.s32.totalorder %s73, %s87
      %p89 = scmp.eq.s32.totalorder %s21, 0
      %p90 = por %p88, %p89
      %s92 = sadd.s32 %s91, 1
      %p95 = scmp.eq.s32.totalorder %s15, 1
      %p96 = scmp.ne.s32.totalorder %s91, %s93
      %p97 = scmp.eq.s32.totalorder %s15, 0
      %p98 = por %p96, %p97
      %p99 = scmp.ne.s32.totalorder %s91, %s93
      %p100 = scmp.eq.s32.totalorder %s20, 1
      %p101 = por %p99, %p100
      %p102 = scmp.ne.s32.totalorder %s93, %s94
      %p103 = scmp.eq.s32.totalorder %s20, 0
      %p104 = por %p102, %p103
      %p105 = scmp.ne.s32.totalorder %s93, %s94
      %p106 = scmp.eq.s32.totalorder %s21, 1
      %p107 = por %p105, %p106
      %p109 = scmp.ne.s32.totalorder %s94, %s108
      %p110 = scmp.eq.s32.totalorder %s21, 0
      %p111 = por %p109, %p110
      %s113 = sadd.s32 %s112, 1
      %p116 = scmp.eq.s32.totalorder %s15, 1
      %p117 = scmp.ne.s32.totalorder %s112, %s114
      %p118 = scmp.eq.s32.totalorder %s15, 0
      %p119 = por %p117, %p118
      %p120 = scmp.ne.s32.totalorder %s112, %s114
      %p121 = scmp.eq.s32.totalorder %s20, 1
      %p122 = por %p120, %p121
      %p123 = scmp.ne.s32.totalorder %s114, %s115
      %p124 = scmp.eq.s32.totalorder %s20, 0
      %p125 = por %p123, %p124
      %p126 = scmp.ne.s32.totalorder %s114, %s115
      %p127 = scmp.eq.s32.totalorder %s21, 1
      %p128 = por %p126, %p127
      %p130 = scmp.ne.s32.totalorder %s115, %s129
      %p131 = scmp.eq.s32.totalorder %s21, 0
      %p132 = por %p130, %p131
      %s134 = sadd.s32 %s133, 1
      %p137 = scmp.eq.s32.totalorder %s15, 1
      %p138 = scmp.ne.s32.totalorder %s133, %s135
      %p139 = scmp.eq.s32.totalorder %s15, 0
      %p140 = por %p138, %p139
      %p141 = scmp.ne.s32.totalorder %s133, %s135
      %p142 = scmp.eq.s32.totalorder %s20, 1
      %p143 = por %p141, %p142
      %p144 = scmp.ne.s32.totalorder %s135, %s136
      %p145 = scmp.eq.s32.totalorder %s20, 0
      %p146 = por %p144, %p145
      %p147 = scmp.ne.s32.totalorder %s135, %s136
      %p148 = scmp.eq.s32.totalorder %s21, 1
      %p149 = por %p147, %p148
      %p151 = scmp.ne.s32.totalorder %s136, %s150
      %p152 = scmp.eq.s32.totalorder %s21, 0
      %p153 = por %p151, %p152
      %s155 = sadd.s32 %s154, 1
      %p158 = scmp.eq.s32.totalorder %s15, 1
      %p159 = scmp.ne.s32.totalorder %s154, %s156
      %p160 = scmp.eq.s32.totalorder %s15, 0
      %p161 = por %p159, %p160
      %p162 = scmp.ne.s32.totalorder %s154, %s156
      %p163 = scmp.eq.s32.totalorder %s20, 1
      %p164 = por %p162, %p163
      %p165 = scmp.ne.s32.totalorder %s156, %s157
      %p166 = scmp.eq.s32.totalorder %s20, 0
      %p167 = por %p165, %p166
      %p168 = scmp.ne.s32.totalorder %s156, %s157
      %p169 = scmp.eq.s32.totalorder %s21, 1
      %p170 = por %p168, %p169
      %p172 = scmp.ne.s32.totalorder %s157, %s171
      %p173 = scmp.eq.s32.totalorder %s21, 0
      %p174 = por %p172, %p173
      %s175 = ssub.s32 %s15, %s22
      %p176 = scmp.eq.s32.totalorder %s175, 0
      %s178 = sadd.s32 %s177, 1
      %s179 = scalar_select %p176, %s177, %s178
      %p182 = pneg %p176
      %p183 = scmp.eq.s32.totalorder %s15, 1
      %p184 = por %p182, %p183
      %p185 = scmp.ne.s32.totalorder %s177, %s180
      %p186 = scmp.eq.s32.totalorder %s15, 0
      %p187 = por %p185, %p186
      %p188 = scmp.ne.s32.totalorder %s177, %s180
      %p189 = scmp.eq.s32.totalorder %s20, 1
      %p190 = por %p188, %p189
      %p191 = scmp.ne.s32.totalorder %s180, %s181
      %p192 = scmp.eq.s32.totalorder %s20, 0
      %p193 = por %p191, %p192
      %p194 = scmp.ne.s32.totalorder %s180, %s181
      %p195 = scmp.eq.s32.totalorder %s21, 1
      %p196 = por %p194, %p195
      %p198 = scmp.ne.s32.totalorder %s181, %s197
      %p199 = scmp.eq.s32.totalorder %s21, 0
      %p200 = por %p198, %p199
      %s202 = sadd.s32 %s201, 1
      %p205 = scmp.eq.s32.totalorder %s15, 1
      %p206 = scmp.ne.s32.totalorder %s201, %s203
      %p207 = scmp.eq.s32.totalorder %s15, 0
      %p208 = por %p206, %p207
      %p209 = scmp.ne.s32.totalorder %s201, %s203
      %p210 = scmp.eq.s32.totalorder %s20, 1
      %p211 = por %p209, %p210
      %p212 = scmp.ne.s32.totalorder %s203, %s204
      %p213 = scmp.eq.s32.totalorder %s20, 0
      %p214 = por %p212, %p213
      %p215 = scmp.ne.s32.totalorder %s203, %s204
      %p216 = scmp.eq.s32.totalorder %s21, 1
      %p217 = por %p215, %p216
      %p219 = scmp.ne.s32.totalorder %s204, %s218
      %p220 = scmp.eq.s32.totalorder %s21, 0
      %p221 = por %p219, %p220
      %p222 = scmp.le.s32.totalorder 1, %s15
      %p223 = scmp.lt.s32.totalorder %s15, 3
      %p224 = pnand %p222, %p223
      %p225 = pneg %p224
      // Predicated region
      $region9: #{_lambda_.11} parent=5 // pred_check
        _
      $region10: #{_lambda_.11} parent=5 // pred_check_branch
        %227 = sbr.rel (%p224) target = $region12
      $region11: #{_lambda_.11} parent=5 // pred_region
        %s228 = ssub.s32 %s15, 1
        // Predicated region
        $region13: #{_lambda_.11} parent=11 // pred_check
          %p229 = pneg %p62
        $region14: #{_lambda_.11} parent=11 // pred_check_branch
          %231 = sbr.rel (%p229) target = $region16
        $region15: #{_lambda_.11} parent=11 // pred_region
          _
        $region16: #{_lambda_.11} parent=11 // pred_fallthru
          _
        // Predicated region
        $region17: #{_lambda_.11} parent=11 // pred_check
          %p232 = pneg %p83
        $region18: #{_lambda_.11} parent=11 // pred_check_branch
          %234 = sbr.rel (%p232) target = $region20
        $region19: #{_lambda_.11} parent=11 // pred_region
          _
        $region20: #{_lambda_.11} parent=11 // pred_fallthru
          _
        // Predicated region
        $region21: #{_lambda_.11} parent=11 // pred_check
          %p235 = pneg %p104
        $region22: #{_lambda_.11} parent=11 // pred_check_branch
          %237 = sbr.rel (%p235) target = $region24
        $region23: #{_lambda_.11} parent=11 // pred_region
          _
        $region24: #{_lambda_.11} parent=11 // pred_fallthru
          _
        // Predicated region
        $region25: #{_lambda_.11} parent=11 // pred_check
          %p238 = pneg %p125
        $region26: #{_lambda_.11} parent=11 // pred_check_branch
          %240 = sbr.rel (%p238) target = $region28
        $region27: #{_lambda_.11} parent=11 // pred_region
          _
        $region28: #{_lambda_.11} parent=11 // pred_fallthru
          _
        // Predicated region
        $region29: #{_lambda_.11} parent=11 // pred_check
          %p241 = pneg %p146
        $region30: #{_lambda_.11} parent=11 // pred_check_branch
          %243 = sbr.rel (%p241) target = $region32
        $region31: #{_lambda_.11} parent=11 // pred_region
          _
        $region32: #{_lambda_.11} parent=11 // pred_fallthru
          _
        // Predicated region
        $region33: #{_lambda_.11} parent=11 // pred_check
          %p244 = pneg %p167
        $region34: #{_lambda_.11} parent=11 // pred_check_branch
          %246 = sbr.rel (%p244) target = $region36
        $region35: #{_lambda_.11} parent=11 // pred_region
          _
        $region36: #{_lambda_.11} parent=11 // pred_fallthru
          _
      $region12: #{_lambda_.11} parent=5 // pred_fallthru
        _
      %p247 = scmp.lt.s32.totalorder %s15, 2
      // Predicated region
      $region37: #{_lambda_.11} parent=5 // pred_check
        %p248 = pneg %p247
      $region38: #{_lambda_.11} parent=5 // pred_check_branch
        %250 = sbr.rel (%p248) target = $region40
      $region39: #{_lambda_.11} parent=5 // pred_region
        // Predicated region
        $region41: #{_lambda_.11} parent=39 // pred_check
          %p251 = pneg %p35
        $region42: #{_lambda_.11} parent=39 // pred_check_branch
          %253 = sbr.rel (%p251) target = $region44
        $region43: #{_lambda_.11} parent=39 // pred_region
          %s254 = smul.u32 32, %s15
          %p255 = scmp.lt.s32.totalorder %s254, 63
          %s256 = scalar_select %p255, %s254, 63
          %s257 = smul.addr %s256, 8
          %s258 = scalar_lea.vmem %s0, %s257
          %s259 = smul.u32 32, %s15
        $region44: #{_lambda_.11} parent=39 // pred_fallthru
          _
        // Predicated region
        $region45: #{_lambda_.11} parent=39 // pred_check
          %p260 = pneg %p187
        $region46: #{_lambda_.11} parent=39 // pred_check_branch
          %262 = sbr.rel (%p260) target = $region48
        $region47: #{_lambda_.11} parent=39 // pred_region
          %s263 = smul.u32 32, %s15
          %p264 = scmp.lt.s32.totalorder %s263, 63
          %s265 = scalar_select %p264, %s263, 63
          %s266 = smul.addr %s265, 8
          %s267 = scalar_lea.vmem %s7, %s266
          %s268 = smul.u32 32, %s15
        $region48: #{_lambda_.11} parent=39 // pred_fallthru
          _
      $region40: #{_lambda_.11} parent=5 // pred_fallthru
        _
      %p269 = scmp.le.s32.totalorder 1, %s15
      %p270 = scmp.lt.s32.totalorder %s15, 3
      %p271 = pnand %p269, %p270
      %p272 = pneg %p271
      // Predicated region
      $region49: #{_lambda_.11} parent=5 // pred_check
        _
      $region50: #{_lambda_.11} parent=5 // pred_check_branch
        %274 = sbr.rel (%p271) target = $region52
      $region51: #{_lambda_.11} parent=5 // pred_region
        %s275 = ssub.s32 %s15, 1
        %s276 = smul.u32 32, %s20
        %p277 = scmp.lt.s32.totalorder %s276, 63
        %s278 = scalar_select %p277, %s276, 63
        %s279 = smul.addr %s278, 8
        %s280 = scalar_lea.vmem %s0, %s279
        %p281 = pneg %p41
        %p282 = pneg %p38
        %p283 = pneg %p62
        %p284 = pneg %p59
        %p285 = pneg %p83
        %p286 = pneg %p80
        %p287 = pneg %p104
        %p288 = pneg %p101
        %p289 = pneg %p125
        %p290 = pneg %p122
        %p291 = pneg %p146
        %p292 = pneg %p143
        %p293 = pneg %p167
        %p294 = pneg %p164
        %s295 = smul.u32 32, %s20
        %p296 = scmp.lt.s32.totalorder %s295, 63
        %s297 = scalar_select %p296, %s295, 63
        %s298 = smul.addr %s297, 8
        %s299 = scalar_lea.vmem %s7, %s298
        %p300 = pneg %p193
        %p301 = pneg %p190
        %p302 = pneg %p214
        %p303 = pneg %p211
        %s304 = smul.u32 32, %s20
        %p305 = scmp.lt.s32.totalorder %s304, 63
        %s306 = scalar_select %p305, %s304, 63
        %s307 = smul.addr %s306, 8
        %s308 = scalar_lea.vmem %s0, %s307
        %s309 = smul.u32 32, %s20
        %s310 = smul.u32 32, %s20
        %p311 = scmp.lt.s32.totalorder %s310, 63
        %s312 = scalar_select %p311, %s310, 63
        %s313 = smul.addr %s312, 8
        %s314 = scalar_lea.vmem %s7, %s313
        %s315 = smul.u32 32, %s20
        %p317 = scmp.eq.s32.totalorder %s20, 0
        // Predicated region
        $region53: #{_lambda_.11} parent=51 // pred_check
          %p318 = pneg %p317
        $region54: #{_lambda_.11} parent=51 // pred_check_branch
          %320 = sbr.rel (%p318) target = $region56
        $region55: #{_lambda_.11} parent=51 // pred_region
          %s321 = scalar_lea.smem [#allocation2], 0
          %322 = sst [smem:[%s321]] 0.0
        $region56: #{_lambda_.11} parent=51 // pred_fallthru
          _
        %v323 = vld [vmem:[%s308] sm:$0xff]
        %v324 = vld [vmem:[%s308 + $0x8] sm:$0xff]
        %v325 = vld [vmem:[%s308 + $0x10] sm:$0xff]
        %v326 = vld [vmem:[%s308 + $0x18] sm:$0xff]
        %v327 = vld [vmem:[%s308 + $0x20] sm:$0xff]
        %v328 = vld [vmem:[%s308 + $0x28] sm:$0xff]
        %v329 = vld [vmem:[%s308 + $0x30] sm:$0xff]
        %v330 = vld [vmem:[%s308 + $0x38] sm:$0xff]
        %v331 = vld [vmem:[%s308 + $0x40] sm:$0xff]
        %v332 = vld [vmem:[%s308 + $0x48] sm:$0xff]
        %v333 = vld [vmem:[%s308 + $0x50] sm:$0xff]
        %v334 = vld [vmem:[%s308 + $0x58] sm:$0xff]
        %v335 = vld [vmem:[%s308 + $0x60] sm:$0xff]
        %v336 = vld [vmem:[%s308 + $0x68] sm:$0xff]
        %v337 = vld [vmem:[%s308 + $0x70] sm:$0xff]
        %v338 = vld [vmem:[%s308 + $0x78] sm:$0xff]
        %v339 = vld [vmem:[%s308 + $0x80] sm:$0xff]
        %v340 = vld [vmem:[%s308 + $0x88] sm:$0xff]
        %v341 = vld [vmem:[%s308 + $0x90] sm:$0xff]
        %v342 = vld [vmem:[%s308 + $0x98] sm:$0xff]
        %v343 = vld [vmem:[%s308 + $0xa0] sm:$0xff]
        %v344 = vld [vmem:[%s308 + $0xa8] sm:$0xff]
        %v345 = vld [vmem:[%s308 + $0xb0] sm:$0xff]
        %v346 = vld [vmem:[%s308 + $0xb8] sm:$0xff]
        %v347 = vld [vmem:[%s308 + $0xc0] sm:$0xff]
        %v348 = vld [vmem:[%s308 + $0xc8] sm:$0xff]
        %v349 = vld [vmem:[%s308 + $0xd0] sm:$0xff]
        %v350 = vld [vmem:[%s308 + $0xd8] sm:$0xff]
        %v351 = vld [vmem:[%s308 + $0xe0] sm:$0xff]
        %v352 = vld [vmem:[%s308 + $0xe8] sm:$0xff]
        %v353 = vld [vmem:[%s308 + $0xf0] sm:$0xff]
        %v354 = vld [vmem:[%s308 + $0xf8] sm:$0xff]
        %v355 = vpack.c.bf16 %v324, %v323
        %v356 = vpack.c.bf16 %v326, %v325
        %v357 = vpack.c.bf16 %v328, %v327
        %v358 = vpack.c.bf16 %v330, %v329
        %v359 = vpack.c.bf16 %v332, %v331
        %v360 = vpack.c.bf16 %v334, %v333
        %v361 = vpack.c.bf16 %v336, %v335
        %v362 = vpack.c.bf16 %v338, %v337
        %v363 = vpack.c.bf16 %v340, %v339
        %v364 = vpack.c.bf16 %v342, %v341
        %v365 = vpack.c.bf16 %v344, %v343
        %v366 = vpack.c.bf16 %v346, %v345
        %v367 = vpack.c.bf16 %v348, %v347
        %v368 = vpack.c.bf16 %v350, %v349
        %v369 = vpack.c.bf16 %v352, %v351
        %v370 = vpack.c.bf16 %v354, %v353
        %v371 = vld [vmem:[%s1] sm:$0xf]
        %v372 = vld [vmem:[%s1 + $0x4] sm:$0xf]
        %v373 = vld [vmem:[%s1 + $0x8] sm:$0xf]
        %v374 = vld [vmem:[%s1 + $0xc] sm:$0xf]
        %v375 = vld [vmem:[%s1 + $0x10] sm:$0xf]
        %v376 = vld [vmem:[%s1 + $0x14] sm:$0xf]
        %v377 = vld [vmem:[%s1 + $0x18] sm:$0xf]
        %v378 = vld [vmem:[%s1 + $0x1c] sm:$0xf]
        %v379 = vld [vmem:[%s1 + $0x20] sm:$0xf]
        %v380 = vld [vmem:[%s1 + $0x24] sm:$0xf]
        %v381 = vld [vmem:[%s1 + $0x28] sm:$0xf]
        %v382 = vld [vmem:[%s1 + $0x2c] sm:$0xf]
        %v383 = vld [vmem:[%s1 + $0x30] sm:$0xf]
        %v384 = vld [vmem:[%s1 + $0x34] sm:$0xf]
        %v385 = vld [vmem:[%s1 + $0x38] sm:$0xf]
        %v386 = vld [vmem:[%s1 + $0x3c] sm:$0xf]
        %v387 = vld [vmem:[%s2] sm:$0x1]
        %v389 = vlaneseq
        %v390 = vshrl.u32 %v389, 7
        %v391 = vsub.s32 0, %v390
        %v392 = vrot.slane %v387, %v391
        %v410 = vunpack.c.l.b16 %v371
        %v411 = vunpack.c.l.b16 %v372
        %v412 = vunpack.c.l.b16 %v373
        %v413 = vunpack.c.l.b16 %v374
        %v414 = vunpack.c.l.b16 %v375
        %v415 = vunpack.c.l.b16 %v376
        %v416 = vunpack.c.l.b16 %v377
        %v417 = vunpack.c.l.b16 %v378
        %v418 = vunpack.c.l.b16 %v379
        %v419 = vunpack.c.l.b16 %v380
        %v420 = vunpack.c.l.b16 %v381
        %v421 = vunpack.c.l.b16 %v382
        %v422 = vunpack.c.l.b16 %v383
        %v423 = vunpack.c.l.b16 %v384
        %v424 = vunpack.c.l.b16 %v385
        %v425 = vunpack.c.l.b16 %v386
        %v426 = vpack.c.b16 %v411, %v410
        %v427 = vpack.c.b16 %v413, %v412
        %v428 = vpack.c.b16 %v415, %v414
        %v429 = vpack.c.b16 %v417, %v416
        %v430 = vpack.c.b16 %v419, %v418
        %v431 = vpack.c.b16 %v421, %v420
        %v432 = vpack.c.b16 %v423, %v422
        %v433 = vpack.c.b16 %v425, %v424
        %442 = vmatprep.subr.bf16.mxu0 0
        %443 = vmatpush1.bf16.msra.mxu0 %v426
        %444 = vmatprep.subr.bf16.mxu0 0
        %445 = vmatpush1.bf16.msra.mxu0 %v427
        %446 = vmatprep.subr.bf16.mxu0 0
        %447 = vmatpush1.bf16.msra.mxu0 %v428
        %448 = vmatprep.subr.bf16.mxu0 0
        %449 = vmatpush1.bf16.msra.mxu0 %v429
        %450 = vmatprep.subr.bf16.mxu0 0
        %451 = vmatpush1.bf16.msra.mxu0 %v430
        %452 = vmatprep.subr.bf16.mxu0 0
        %453 = vmatpush1.bf16.msra.mxu0 %v431
        %454 = vmatprep.subr.bf16.mxu0 0
        %455 = vmatpush1.bf16.msra.mxu0 %v432
        %456 = vmatprep.subr.bf16.mxu0 0
        %457 = vmatpush1.bf16.msra.mxu0 %v433
        %458 = vmatprep.subr.bf16.mxu0 0
        %459 = vmatpush1.bf16.msra.mxu0 0
        %460 = vmatprep.subr.bf16.mxu0 0
        %461 = vmatpush1.bf16.msra.mxu0 0
        %462 = vmatprep.subr.bf16.mxu0 0
        %463 = vmatpush1.bf16.msra.mxu0 0
        %464 = vmatprep.subr.bf16.mxu0 0
        %465 = vmatpush1.bf16.msra.mxu0 0
        %466 = vmatprep.subr.bf16.mxu0 0
        %467 = vmatpush1.bf16.msra.mxu0 0
        %468 = vmatprep.subr.bf16.mxu0 0
        %469 = vmatpush1.bf16.msra.mxu0 0
        %470 = vmatprep.subr.bf16.mxu0 0
        %471 = vmatpush1.bf16.msra.mxu0 0
        %472 = vmatprep.subr.bf16.mxu0 0
        %473 = vmatpush1.bf16.msra.mxu0 0
        %474 = vmatprep.mubr.bf16.mxu0 0
        %475 = vmatmul.mubr.bf16.gmra.mrb[0].mxu0 %v355
        %v476 = vpop.f32.mrb[0].mxu0
        %v477 = vadd.f32 %v392, %v476
        %v478 = vpop.f32.mrb[0].mxu0
        %v479 = vpop.f32.mrb[0].mxu0
        %v480 = vadd.f32 %v392, %v479
        %v481 = vpop.f32.mrb[0].mxu0
        %482 = vmatprep.mubr.bf16.mxu0 0
        %483 = vmatmul.mubr.bf16.gmra.mrb[0].mxu0 %v356
        %v484 = vpop.f32.mrb[0].mxu0
        %v485 = vadd.f32 %v392, %v484
        %v486 = vpop.f32.mrb[0].mxu0
        %v487 = vpop.f32.mrb[0].mxu0
        %v488 = vadd.f32 %v392, %v487
        %v489 = vpop.f32.mrb[0].mxu0
        %490 = vmatprep.mubr.bf16.mxu0 0
        %491 = vmatmul.mubr.bf16.gmra.mrb[0].mxu0 %v357
        %v492 = vpop.f32.mrb[0].mxu0
        %v493 = vadd.f32 %v392, %v492
        %v494 = vpop.f32.mrb[0].mxu0
        %v495 = vpop.f32.mrb[0].mxu0
        %v496 = vadd.f32 %v392, %v495
        %v497 = vpop.f32.mrb[0].mxu0
        %498 = vmatprep.mubr.bf16.mxu0 0
        %499 = vmatmul.mubr.bf16.gmra.mrb[0].mxu0 %v358
        %v500 = vpop.f32.mrb[0].mxu0
        %v501 = vadd.f32 %v392, %v500
        %v502 = vpop.f32.mrb[0].mxu0
        %v503 = vpop.f32.mrb[0].mxu0
        %v504 = vadd.f32 %v392, %v503
        %v505 = vpop.f32.mrb[0].mxu0
        %506 = vmatprep.mubr.bf16.mxu0 0
        %507 = vmatmul.mubr.bf16.gmra.mrb[0].mxu0 %v359
        %v508 = vpop.f32.mrb[0].mxu0
        %v509 = vadd.f32 %v392, %v508
        %v510 = vpop.f32.mrb[0].mxu0
        %v511 = vpop.f32.mrb[0].mxu0
        %v512 = vadd.f32 %v392, %v511
        %v513 = vpop.f32.mrb[0].mxu0
        %514 = vmatprep.mubr.bf16.mxu0 0
        %515 = vmatmul.mubr.bf16.gmra.mrb[0].mxu0 %v360
        %v516 = vpop.f32.mrb[0].mxu0
        %v517 = vadd.f32 %v392, %v516
        %v518 = vpop.f32.mrb[0].mxu0
        %v519 = vpop.f32.mrb[0].mxu0
        %v520 = vadd.f32 %v392, %v519
        %v521 = vpop.f32.mrb[0].mxu0
        %522 = vmatprep.mubr.bf16.mxu0 0
        %523 = vmatmul.mubr.bf16.gmra.mrb[0].mxu0 %v361
        %v524 = vpop.f32.mrb[0].mxu0
        %v525 = vadd.f32 %v392, %v524
        %v526 = vpop.f32.mrb[0].mxu0
        %v527 = vpop.f32.mrb[0].mxu0
        %v528 = vadd.f32 %v392, %v527
        %v529 = vpop.f32.mrb[0].mxu0
        %530 = vmatprep.mubr.bf16.mxu0 0
        %531 = vmatmul.mubr.bf16.gmra.mrb[0].mxu0 %v362
        %v532 = vpop.f32.mrb[0].mxu0
        %v533 = vadd.f32 %v392, %v532
        %v534 = vpop.f32.mrb[0].mxu0
        %v535 = vpop.f32.mrb[0].mxu0
        %v536 = vadd.f32 %v392, %v535
        %v537 = vpop.f32.mrb[0].mxu0
        %538 = vmatprep.mubr.bf16.mxu0 0
        %539 = vmatmul.mubr.bf16.gmra.mrb[0].mxu0 %v363
        %v540 = vpop.f32.mrb[0].mxu0
        %v541 = vadd.f32 %v392, %v540
        %v542 = vpop.f32.mrb[0].mxu0
        %v543 = vpop.f32.mrb[0].mxu0
        %v544 = vadd.f32 %v392, %v543
        %v545 = vpop.f32.mrb[0].mxu0
        %546 = vmatprep.mubr.bf16.mxu0 0
        %547 = vmatmul.mubr.bf16.gmra.mrb[0].mxu0 %v364
        %v548 = vpop.f32.mrb[0].mxu0
        %v549 = vadd.f32 %v392, %v548
        %v550 = vpop.f32.mrb[0].mxu0
        %v551 = vpop.f32.mrb[0].mxu0
        %v552 = vadd.f32 %v392, %v551
        %v553 = vpop.f32.mrb[0].mxu0
        %554 = vmatprep.mubr.bf16.mxu0 0
        %555 = vmatmul.mubr.bf16.gmra.mrb[0].mxu0 %v365
        %v556 = vpop.f32.mrb[0].mxu0
        %v557 = vadd.f32 %v392, %v556
        %v558 = vpop.f32.mrb[0].mxu0
        %v559 = vpop.f32.mrb[0].mxu0
        %v560 = vadd.f32 %v392, %v559
        %v561 = vpop.f32.mrb[0].mxu0
        %562 = vmatprep.mubr.bf16.mxu0 0
        %563 = vmatmul.mubr.bf16.gmra.mrb[0].mxu0 %v366
        %v564 = vpop.f32.mrb[0].mxu0
        %v565 = vadd.f32 %v392, %v564
        %v566 = vpop.f32.mrb[0].mxu0
        %v567 = vpop.f32.mrb[0].mxu0
        %v568 = vadd.f32 %v392, %v567
        %v569 = vpop.f32.mrb[0].mxu0
        %570 = vmatprep.mubr.bf16.mxu0 0
        %571 = vmatmul.mubr.bf16.gmra.mrb[0].mxu0 %v367
        %v572 = vpop.f32.mrb[0].mxu0
        %v573 = vadd.f32 %v392, %v572
        %v574 = vpop.f32.mrb[0].mxu0
        %v575 = vpop.f32.mrb[0].mxu0
        %v576 = vadd.f32 %v392, %v575
        %v577 = vpop.f32.mrb[0].mxu0
        %578 = vmatprep.mubr.bf16.mxu0 0
        %579 = vmatmul.mubr.bf16.gmra.mrb[0].mxu0 %v368
        %v580 = vpop.f32.mrb[0].mxu0
        %v581 = vadd.f32 %v392, %v580
        %v582 = vpop.f32.mrb[0].mxu0
        %v583 = vpop.f32.mrb[0].mxu0
        %v584 = vadd.f32 %v392, %v583
        %v585 = vpop.f32.mrb[0].mxu0
        %586 = vmatprep.mubr.bf16.mxu0 0
        %587 = vmatmul.mubr.bf16.gmra.mrb[0].mxu0 %v369
        %v588 = vpop.f32.mrb[0].mxu0
        %v589 = vadd.f32 %v392, %v588
        %v590 = vpop.f32.mrb[0].mxu0
        %v591 = vpop.f32.mrb[0].mxu0
        %v592 = vadd.f32 %v392, %v591
        %v593 = vpop.f32.mrb[0].mxu0
        %594 = vmatprep.mubr.bf16.mxu0 0
        %595 = vmatmul.mubr.bf16.gmra.mrb[0].mxu0 %v370
        %v596 = vpop.f32.mrb[0].mxu0
        %v597 = vadd.f32 %v392, %v596
        %v598 = vpop.f32.mrb[0].mxu0
        %v599 = vpop.f32.mrb[0].mxu0
        %v600 = vadd.f32 %v392, %v599
        %v601 = vpop.f32.mrb[0].mxu0
        %602 = vdwg.mxu0
        %v603 = vmax.f32 %v477, 0.0
        %v604 = vmax.f32 %v480, 0.0
        %v605 = vmax.f32 %v485, 0.0
        %v606 = vmax.f32 %v488, 0.0
        %v607 = vmax.f32 %v493, 0.0
        %v608 = vmax.f32 %v496, 0.0
        %v609 = vmax.f32 %v501, 0.0
        %v610 = vmax.f32 %v504, 0.0
        %v611 = vmax.f32 %v509, 0.0
        %v612 = vmax.f32 %v512, 0.0
        %v613 = vmax.f32 %v517, 0.0
        %v614 = vmax.f32 %v520, 0.0
        %v615 = vmax.f32 %v525, 0.0
        %v616 = vmax.f32 %v528, 0.0
        %v617 = vmax.f32 %v533, 0.0
        %v618 = vmax.f32 %v536, 0.0
        %v619 = vmax.f32 %v541, 0.0
        %v620 = vmax.f32 %v544, 0.0
        %v621 = vmax.f32 %v549, 0.0
        %v622 = vmax.f32 %v552, 0.0
        %v623 = vmax.f32 %v557, 0.0
        %v624 = vmax.f32 %v560, 0.0
        %v625 = vmax.f32 %v565, 0.0
        %v626 = vmax.f32 %v568, 0.0
        %v627 = vmax.f32 %v573, 0.0
        %v628 = vmax.f32 %v576, 0.0
        %v629 = vmax.f32 %v581, 0.0
        %v630 = vmax.f32 %v584, 0.0
        %v631 = vmax.f32 %v589, 0.0
        %v632 = vmax.f32 %v592, 0.0
        %v633 = vmax.f32 %v597, 0.0
        %v634 = vmax.f32 %v600, 0.0
        %v635 = vpack.c.bf16 %v604, %v603
        %v636 = vpack.c.bf16 %v606, %v605
        %v637 = vpack.c.bf16 %v608, %v607
        %v638 = vpack.c.bf16 %v610, %v609
        %v639 = vpack.c.bf16 %v612, %v611
        %v640 = vpack.c.bf16 %v614, %v613
        %v641 = vpack.c.bf16 %v616, %v615
        %v642 = vpack.c.bf16 %v618, %v617
        %v643 = vpack.c.bf16 %v620, %v619
        %v644 = vpack.c.bf16 %v622, %v621
        %v645 = vpack.c.bf16 %v624, %v623
        %v646 = vpack.c.bf16 %v626, %v625
        %v647 = vpack.c.bf16 %v628, %v627
        %v648 = vpack.c.bf16 %v630, %v629
        %v649 = vpack.c.bf16 %v632, %v631
        %v650 = vpack.c.bf16 %v634, %v633
        %v651 = vld [vmem:[%s3] sm:$0xf]
        %v652 = vld [vmem:[%s3 + $0x4] sm:$0xf]
        %v653 = vld [vmem:[%s3 + $0x8] sm:$0xf]
        %v654 = vld [vmem:[%s3 + $0xc] sm:$0xf]
        %v655 = vld [vmem:[%s3 + $0x10] sm:$0xf]
        %v656 = vld [vmem:[%s3 + $0x14] sm:$0xf]
        %v657 = vld [vmem:[%s3 + $0x18] sm:$0xf]
        %v658 = vld [vmem:[%s3 + $0x1c] sm:$0xf]
        %v659 = vld [vmem:[%s3 + $0x20] sm:$0xf]
        %v660 = vld [vmem:[%s3 + $0x24] sm:$0xf]
        %v661 = vld [vmem:[%s3 + $0x28] sm:$0xf]
        %v662 = vld [vmem:[%s3 + $0x2c] sm:$0xf]
        %v663 = vld [vmem:[%s3 + $0x30] sm:$0xf]
        %v664 = vld [vmem:[%s3 + $0x34] sm:$0xf]
        %v665 = vld [vmem:[%s3 + $0x38] sm:$0xf]
        %v666 = vld [vmem:[%s3 + $0x3c] sm:$0xf]
        %v667 = vld [vmem:[%s4] sm:$0x1]
        %v669 = vlaneseq
        %v670 = vshrl.u32 %v669, 7
        %v671 = vsub.s32 0, %v670
        %v672 = vrot.slane %v667, %v671
        %v690 = vunpack.c.l.b16 %v651
        %v691 = vunpack.c.l.b16 %v652
        %v692 = vunpack.c.l.b16 %v653
        %v693 = vunpack.c.l.b16 %v654
        %v694 = vunpack.c.l.b16 %v655
        %v695 = vunpack.c.l.b16 %v656
        %v696 = vunpack.c.l.b16 %v657
        %v697 = vunpack.c.l.b16 %v658
        %v698 = vunpack.c.l.b16 %v659
        %v699 = vunpack.c.l.b16 %v660
        %v700 = vunpack.c.l.b16 %v661
        %v701 = vunpack.c.l.b16 %v662
        %v702 = vunpack.c.l.b16 %v663
        %v703 = vunpack.c.l.b16 %v664
        %v704 = vunpack.c.l.b16 %v665
        %v705 = vunpack.c.l.b16 %v666
        %v706 = vpack.c.b16 %v691, %v690
        %v707 = vpack.c.b16 %v693, %v692
        %v708 = vpack.c.b16 %v695, %v694
        %v709 = vpack.c.b16 %v697, %v696
        %v710 = vpack.c.b16 %v699, %v698
        %v711 = vpack.c.b16 %v701, %v700
        %v712 = vpack.c.b16 %v703, %v702
        %v713 = vpack.c.b16 %v705, %v704
        %722 = vmatprep.subr.bf16.mxu0 0
        %723 = vmatpush1.bf16.msra.mxu0 %v706
        %724 = vmatprep.subr.bf16.mxu0 0
        %725 = vmatpush1.bf16.msra.mxu0 %v707
        %726 = vmatprep.subr.bf16.mxu0 0
        %727 = vmatpush1.bf16.msra.mxu0 %v708
        %728 = vmatprep.subr.bf16.mxu0 0
        %729 = vmatpush1.bf16.msra.mxu0 %v709
        %730 = vmatprep.subr.bf16.mxu0 0
        %731 = vmatpush1.bf16.msra.mxu0 %v710
        %732 = vmatprep.subr.bf16.mxu0 0
        %733 = vmatpush1.bf16.msra.mxu0 %v711
        %734 = vmatprep.subr.bf16.mxu0 0
        %735 = vmatpush1.bf16.msra.mxu0 %v712
        %736 = vmatprep.subr.bf16.mxu0 0
        %737 = vmatpush1.bf16.msra.mxu0 %v713
        %738 = vmatprep.subr.bf16.mxu0 0
        %739 = vmatpush1.bf16.msra.mxu0 0
        %740 = vmatprep.subr.bf16.mxu0 0
        %741 = vmatpush1.bf16.msra.mxu0 0
        %742 = vmatprep.subr.bf16.mxu0 0
        %743 = vmatpush1.bf16.msra.mxu0 0
        %744 = vmatprep.subr.bf16.mxu0 0
        %745 = vmatpush1.bf16.msra.mxu0 0
        %746 = vmatprep.subr.bf16.mxu0 0
        %747 = vmatpush1.bf16.msra.mxu0 0
        %748 = vmatprep.subr.bf16.mxu0 0
        %749 = vmatpush1.bf16.msra.mxu0 0
        %750 = vmatprep.subr.bf16.mxu0 0
        %751 = vmatpush1.bf16.msra.mxu0 0
        %752 = vmatprep.subr.bf16.mxu0 0
        %753 = vmatpush1.bf16.msra.mxu0 0
        %754 = vmatprep.mubr.bf16.mxu0 0
        %755 = vmatmul.mubr.bf16.gmra.mrb[0].mxu0 %v635
        %v756 = vpop.f32.mrb[0].mxu0
        %v757 = vadd.f32 %v672, %v756
        %v758 = vpop.f32.mrb[0].mxu0
        %v759 = vpop.f32.mrb[0].mxu0
        %v760 = vadd.f32 %v672, %v759
        %v761 = vpop.f32.mrb[0].mxu0
        %762 = vmatprep.mubr.bf16.mxu0 0
        %763 = vmatmul.mubr.bf16.gmra.mrb[0].mxu0 %v636
        %v764 = vpop.f32.mrb[0].mxu0
        %v765 = vadd.f32 %v672, %v764
        %v766 = vpop.f32.mrb[0].mxu0
        %v767 = vpop.f32.mrb[0].mxu0
        %v768 = vadd.f32 %v672, %v767
        %v769 = vpop.f32.mrb[0].mxu0
        %770 = vmatprep.mubr.bf16.mxu0 0
        %771 = vmatmul.mubr.bf16.gmra.mrb[0].mxu0 %v637
        %v772 = vpop.f32.mrb[0].mxu0
        %v773 = vadd.f32 %v672, %v772
        %v774 = vpop.f32.mrb[0].mxu0
        %v775 = vpop.f32.mrb[0].mxu0
        %v776 = vadd.f32 %v672, %v775
        %v777 = vpop.f32.mrb[0].mxu0
        %778 = vmatprep.mubr.bf16.mxu0 0
        %779 = vmatmul.mubr.bf16.gmra.mrb[0].mxu0 %v638
        %v780 = vpop.f32.mrb[0].mxu0
        %v781 = vadd.f32 %v672, %v780
        %v782 = vpop.f32.mrb[0].mxu0
        %v783 = vpop.f32.mrb[0].mxu0
        %v784 = vadd.f32 %v672, %v783
        %v785 = vpop.f32.mrb[0].mxu0
        %786 = vmatprep.mubr.bf16.mxu0 0
        %787 = vmatmul.mubr.bf16.gmra.mrb[0].mxu0 %v639
        %v788 = vpop.f32.mrb[0].mxu0
        %v789 = vadd.f32 %v672, %v788
        %v790 = vpop.f32.mrb[0].mxu0
        %v791 = vpop.f32.mrb[0].mxu0
        %v792 = vadd.f32 %v672, %v791
        %v793 = vpop.f32.mrb[0].mxu0
        %794 = vmatprep.mubr.bf16.mxu0 0
        %795 = vmatmul.mubr.bf16.gmra.mrb[0].mxu0 %v640
        %v796 = vpop.f32.mrb[0].mxu0
        %v797 = vadd.f32 %v672, %v796
        %v798 = vpop.f32.mrb[0].mxu0
        %v799 = vpop.f32.mrb[0].mxu0
        %v800 = vadd.f32 %v672, %v799
        %v801 = vpop.f32.mrb[0].mxu0
        %802 = vmatprep.mubr.bf16.mxu0 0
        %803 = vmatmul.mubr.bf16.gmra.mrb[0].mxu0 %v641
        %v804 = vpop.f32.mrb[0].mxu0
        %v805 = vadd.f32 %v672, %v804
        %v806 = vpop.f32.mrb[0].mxu0
        %v807 = vpop.f32.mrb[0].mxu0
        %v808 = vadd.f32 %v672, %v807
        %v809 = vpop.f32.mrb[0].mxu0
        %810 = vmatprep.mubr.bf16.mxu0 0
        %811 = vmatmul.mubr.bf16.gmra.mrb[0].mxu0 %v642
        %v812 = vpop.f32.mrb[0].mxu0
        %v813 = vadd.f32 %v672, %v812
        %v814 = vpop.f32.mrb[0].mxu0
        %v815 = vpop.f32.mrb[0].mxu0
        %v816 = vadd.f32 %v672, %v815
        %v817 = vpop.f32.mrb[0].mxu0
        %818 = vmatprep.mubr.bf16.mxu0 0
        %819 = vmatmul.mubr.bf16.gmra.mrb[0].mxu0 %v643
        %v820 = vpop.f32.mrb[0].mxu0
        %v821 = vadd.f32 %v672, %v820
        %v822 = vpop.f32.mrb[0].mxu0
        %v823 = vpop.f32.mrb[0].mxu0
        %v824 = vadd.f32 %v672, %v823
        %v825 = vpop.f32.mrb[0].mxu0
        %826 = vmatprep.mubr.bf16.mxu0 0
        %827 = vmatmul.mubr.bf16.gmra.mrb[0].mxu0 %v644
        %v828 = vpop.f32.mrb[0].mxu0
        %v829 = vadd.f32 %v672, %v828
        %v830 = vpop.f32.mrb[0].mxu0
        %v831 = vpop.f32.mrb[0].mxu0
        %v832 = vadd.f32 %v672, %v831
        %v833 = vpop.f32.mrb[0].mxu0
        %834 = vmatprep.mubr.bf16.mxu0 0
        %835 = vmatmul.mubr.bf16.gmra.mrb[0].mxu0 %v645
        %v836 = vpop.f32.mrb[0].mxu0
        %v837 = vadd.f32 %v672, %v836
        %v838 = vpop.f32.mrb[0].mxu0
        %v839 = vpop.f32.mrb[0].mxu0
        %v840 = vadd.f32 %v672, %v839
        %v841 = vpop.f32.mrb[0].mxu0
        %842 = vmatprep.mubr.bf16.mxu0 0
        %843 = vmatmul.mubr.bf16.gmra.mrb[0].mxu0 %v646
        %v844 = vpop.f32.mrb[0].mxu0
        %v845 = vadd.f32 %v672, %v844
        %v846 = vpop.f32.mrb[0].mxu0
        %v847 = vpop.f32.mrb[0].mxu0
        %v848 = vadd.f32 %v672, %v847
        %v849 = vpop.f32.mrb[0].mxu0
        %850 = vmatprep.mubr.bf16.mxu0 0
        %851 = vmatmul.mubr.bf16.gmra.mrb[0].mxu0 %v647
        %v852 = vpop.f32.mrb[0].mxu0
        %v853 = vadd.f32 %v672, %v852
        %v854 = vpop.f32.mrb[0].mxu0
        %v855 = vpop.f32.mrb[0].mxu0
        %v856 = vadd.f32 %v672, %v855
        %v857 = vpop.f32.mrb[0].mxu0
        %858 = vmatprep.mubr.bf16.mxu0 0
        %859 = vmatmul.mubr.bf16.gmra.mrb[0].mxu0 %v648
        %v860 = vpop.f32.mrb[0].mxu0
        %v861 = vadd.f32 %v672, %v860
        %v862 = vpop.f32.mrb[0].mxu0
        %v863 = vpop.f32.mrb[0].mxu0
        %v864 = vadd.f32 %v672, %v863
        %v865 = vpop.f32.mrb[0].mxu0
        %866 = vmatprep.mubr.bf16.mxu0 0
        %867 = vmatmul.mubr.bf16.gmra.mrb[0].mxu0 %v649
        %v868 = vpop.f32.mrb[0].mxu0
        %v869 = vadd.f32 %v672, %v868
        %v870 = vpop.f32.mrb[0].mxu0
        %v871 = vpop.f32.mrb[0].mxu0
        %v872 = vadd.f32 %v672, %v871
        %v873 = vpop.f32.mrb[0].mxu0
        %874 = vmatprep.mubr.bf16.mxu0 0
        %875 = vmatmul.mubr.bf16.gmra.mrb[0].mxu0 %v650
        %v876 = vpop.f32.mrb[0].mxu0
        %v877 = vadd.f32 %v672, %v876
        %v878 = vpop.f32.mrb[0].mxu0
        %v879 = vpop.f32.mrb[0].mxu0
        %v880 = vadd.f32 %v672, %v879
        %v881 = vpop.f32.mrb[0].mxu0
        %882 = vdwg.mxu0
        %v883 = vld [vmem:[%s5] sm:$0xf]
        %v884 = vld [vmem:[%s5 + $0x4] sm:$0xf]
        %v885 = vld [vmem:[%s5 + $0x8] sm:$0xf]
        %v886 = vld [vmem:[%s5 + $0xc] sm:$0xf]
        %v887 = vld [vmem:[%s5 + $0x10] sm:$0xf]
        %v888 = vld [vmem:[%s5 + $0x14] sm:$0xf]
        %v889 = vld [vmem:[%s5 + $0x18] sm:$0xf]
        %v890 = vld [vmem:[%s5 + $0x1c] sm:$0xf]
        %v891 = vld [vmem:[%s5 + $0x20] sm:$0xf]
        %v892 = vld [vmem:[%s5 + $0x24] sm:$0xf]
        %v893 = vld [vmem:[%s5 + $0x28] sm:$0xf]
        %v894 = vld [vmem:[%s5 + $0x2c] sm:$0xf]
        %v895 = vld [vmem:[%s5 + $0x30] sm:$0xf]
        %v896 = vld [vmem:[%s5 + $0x34] sm:$0xf]
        %v897 = vld [vmem:[%s5 + $0x38] sm:$0xf]
        %v898 = vld [vmem:[%s5 + $0x3c] sm:$0xf]
        %v899 = vld [vmem:[%s6] sm:$0x1]
        %v901 = vlaneseq
        %v902 = vshrl.u32 %v901, 7
        %v903 = vsub.s32 0, %v902
        %v904 = vrot.slane %v899, %v903
        %v922 = vunpack.c.l.b16 %v883
        %v923 = vunpack.c.l.b16 %v884
        %v924 = vunpack.c.l.b16 %v885
        %v925 = vunpack.c.l.b16 %v886
        %v926 = vunpack.c.l.b16 %v887
        %v927 = vunpack.c.l.b16 %v888
        %v928 = vunpack.c.l.b16 %v889
        %v929 = vunpack.c.l.b16 %v890
        %v930 = vunpack.c.l.b16 %v891
        %v931 = vunpack.c.l.b16 %v892
        %v932 = vunpack.c.l.b16 %v893
        %v933 = vunpack.c.l.b16 %v894
        %v934 = vunpack.c.l.b16 %v895
        %v935 = vunpack.c.l.b16 %v896
        %v936 = vunpack.c.l.b16 %v897
        %v937 = vunpack.c.l.b16 %v898
        %v938 = vpack.c.b16 %v923, %v922
        %v939 = vpack.c.b16 %v925, %v924
        %v940 = vpack.c.b16 %v927, %v926
        %v941 = vpack.c.b16 %v929, %v928
        %v942 = vpack.c.b16 %v931, %v930
        %v943 = vpack.c.b16 %v933, %v932
        %v944 = vpack.c.b16 %v935, %v934
        %v945 = vpack.c.b16 %v937, %v936
        %954 = vmatprep.subr.bf16.mxu0 0
        %955 = vmatpush1.bf16.msra.mxu0 %v938
        %956 = vmatprep.subr.bf16.mxu0 0
        %957 = vmatpush1.bf16.msra.mxu0 %v939
        %958 = vmatprep.subr.bf16.mxu0 0
        %959 = vmatpush1.bf16.msra.mxu0 %v940
        %960 = vmatprep.subr.bf16.mxu0 0
        %961 = vmatpush1.bf16.msra.mxu0 %v941
        %962 = vmatprep.subr.bf16.mxu0 0
        %963 = vmatpush1.bf16.msra.mxu0 %v942
        %964 = vmatprep.subr.bf16.mxu0 0
        %965 = vmatpush1.bf16.msra.mxu0 %v943
        %966 = vmatprep.subr.bf16.mxu0 0
        %967 = vmatpush1.bf16.msra.mxu0 %v944
        %968 = vmatprep.subr.bf16.mxu0 0
        %969 = vmatpush1.bf16.msra.mxu0 %v945
        %970 = vmatprep.subr.bf16.mxu0 0
        %971 = vmatpush1.bf16.msra.mxu0 0
        %972 = vmatprep.subr.bf16.mxu0 0
        %973 = vmatpush1.bf16.msra.mxu0 0
        %974 = vmatprep.subr.bf16.mxu0 0
        %975 = vmatpush1.bf16.msra.mxu0 0
        %976 = vmatprep.subr.bf16.mxu0 0
        %977 = vmatpush1.bf16.msra.mxu0 0
        %978 = vmatprep.subr.bf16.mxu0 0
        %979 = vmatpush1.bf16.msra.mxu0 0
        %980 = vmatprep.subr.bf16.mxu0 0
        %981 = vmatpush1.bf16.msra.mxu0 0
        %982 = vmatprep.subr.bf16.mxu0 0
        %983 = vmatpush1.bf16.msra.mxu0 0
        %984 = vmatprep.subr.bf16.mxu0 0
        %985 = vmatpush1.bf16.msra.mxu0 0
        %986 = vmatprep.mubr.bf16.mxu0 0
        %987 = vmatmul.mubr.bf16.gmra.mrb[0].mxu0 %v635
        %v988 = vpop.f32.mrb[0].mxu0
        %v989 = vadd.f32 %v904, %v988
        %v990 = vpop.f32.mrb[0].mxu0
        %v991 = vpop.f32.mrb[0].mxu0
        %v992 = vadd.f32 %v904, %v991
        %v993 = vpop.f32.mrb[0].mxu0
        %994 = vmatprep.mubr.bf16.mxu0 0
        %995 = vmatmul.mubr.bf16.gmra.mrb[0].mxu0 %v636
        %v996 = vpop.f32.mrb[0].mxu0
        %v997 = vadd.f32 %v904, %v996
        %v998 = vpop.f32.mrb[0].mxu0
        %v999 = vpop.f32.mrb[0].mxu0
        %v1000 = vadd.f32 %v904, %v999
        %v1001 = vpop.f32.mrb[0].mxu0
        %1002 = vmatprep.mubr.bf16.mxu0 0
        %1003 = vmatmul.mubr.bf16.gmra.mrb[0].mxu0 %v637
        %v1004 = vpop.f32.mrb[0].mxu0
        %v1005 = vadd.f32 %v904, %v1004
        %v1006 = vpop.f32.mrb[0].mxu0
        %v1007 = vpop.f32.mrb[0].mxu0
        %v1008 = vadd.f32 %v904, %v1007
        %v1009 = vpop.f32.mrb[0].mxu0
        %1010 = vmatprep.mubr.bf16.mxu0 0
        %1011 = vmatmul.mubr.bf16.gmra.mrb[0].mxu0 %v638
        %v1012 = vpop.f32.mrb[0].mxu0
        %v1013 = vadd.f32 %v904, %v1012
        %v1014 = vpop.f32.mrb[0].mxu0
        %v1015 = vpop.f32.mrb[0].mxu0
        %v1016 = vadd.f32 %v904, %v1015
        %v1017 = vpop.f32.mrb[0].mxu0
        %1018 = vmatprep.mubr.bf16.mxu0 0
        %1019 = vmatmul.mubr.bf16.gmra.mrb[0].mxu0 %v639
        %v1020 = vpop.f32.mrb[0].mxu0
        %v1021 = vadd.f32 %v904, %v1020
        %v1022 = vpop.f32.mrb[0].mxu0
        %v1023 = vpop.f32.mrb[0].mxu0
        %v1024 = vadd.f32 %v904, %v1023
        %v1025 = vpop.f32.mrb[0].mxu0
        %1026 = vmatprep.mubr.bf16.mxu0 0
        %1027 = vmatmul.mubr.bf16.gmra.mrb[0].mxu0 %v640
        %v1028 = vpop.f32.mrb[0].mxu0
        %v1029 = vadd.f32 %v904, %v1028
        %v1030 = vpop.f32.mrb[0].mxu0
        %v1031 = vpop.f32.mrb[0].mxu0
        %v1032 = vadd.f32 %v904, %v1031
        %v1033 = vpop.f32.mrb[0].mxu0
        %1034 = vmatprep.mubr.bf16.mxu0 0
        %1035 = vmatmul.mubr.bf16.gmra.mrb[0].mxu0 %v641
        %v1036 = vpop.f32.mrb[0].mxu0
        %v1037 = vadd.f32 %v904, %v1036
        %v1038 = vpop.f32.mrb[0].mxu0
        %v1039 = vpop.f32.mrb[0].mxu0
        %v1040 = vadd.f32 %v904, %v1039
        %v1041 = vpop.f32.mrb[0].mxu0
        %1042 = vmatprep.mubr.bf16.mxu0 0
        %1043 = vmatmul.mubr.bf16.gmra.mrb[0].mxu0 %v642
        %v1044 = vpop.f32.mrb[0].mxu0
        %v1045 = vadd.f32 %v904, %v1044
        %v1046 = vpop.f32.mrb[0].mxu0
        %v1047 = vpop.f32.mrb[0].mxu0
        %v1048 = vadd.f32 %v904, %v1047
        %v1049 = vpop.f32.mrb[0].mxu0
        %1050 = vmatprep.mubr.bf16.mxu0 0
        %1051 = vmatmul.mubr.bf16.gmra.mrb[0].mxu0 %v643
        %v1052 = vpop.f32.mrb[0].mxu0
        %v1053 = vadd.f32 %v904, %v1052
        %v1054 = vpop.f32.mrb[0].mxu0
        %v1055 = vpop.f32.mrb[0].mxu0
        %v1056 = vadd.f32 %v904, %v1055
        %v1057 = vpop.f32.mrb[0].mxu0
        %1058 = vmatprep.mubr.bf16.mxu0 0
        %1059 = vmatmul.mubr.bf16.gmra.mrb[0].mxu0 %v644
        %v1060 = vpop.f32.mrb[0].mxu0
        %v1061 = vadd.f32 %v904, %v1060
        %v1062 = vpop.f32.mrb[0].mxu0
        %v1063 = vpop.f32.mrb[0].mxu0
        %v1064 = vadd.f32 %v904, %v1063
        %v1065 = vpop.f32.mrb[0].mxu0
        %1066 = vmatprep.mubr.bf16.mxu0 0
        %1067 = vmatmul.mubr.bf16.gmra.mrb[0].mxu0 %v645
        %v1068 = vpop.f32.mrb[0].mxu0
        %v1069 = vadd.f32 %v904, %v1068
        %v1070 = vpop.f32.mrb[0].mxu0
        %v1071 = vpop.f32.mrb[0].mxu0
        %v1072 = vadd.f32 %v904, %v1071
        %v1073 = vpop.f32.mrb[0].mxu0
        %1074 = vmatprep.mubr.bf16.mxu0 0
        %1075 = vmatmul.mubr.bf16.gmra.mrb[0].mxu0 %v646
        %v1076 = vpop.f32.mrb[0].mxu0
        %v1077 = vadd.f32 %v904, %v1076
        %v1078 = vpop.f32.mrb[0].mxu0
        %v1079 = vpop.f32.mrb[0].mxu0
        %v1080 = vadd.f32 %v904, %v1079
        %v1081 = vpop.f32.mrb[0].mxu0
        %1082 = vmatprep.mubr.bf16.mxu0 0
        %1083 = vmatmul.mubr.bf16.gmra.mrb[0].mxu0 %v647
        %v1084 = vpop.f32.mrb[0].mxu0
        %v1085 = vadd.f32 %v904, %v1084
        %v1086 = vpop.f32.mrb[0].mxu0
        %v1087 = vpop.f32.mrb[0].mxu0
        %v1088 = vadd.f32 %v904, %v1087
        %v1089 = vpop.f32.mrb[0].mxu0
        %1090 = vmatprep.mubr.bf16.mxu0 0
        %1091 = vmatmul.mubr.bf16.gmra.mrb[0].mxu0 %v648
        %v1092 = vpop.f32.mrb[0].mxu0
        %v1093 = vadd.f32 %v904, %v1092
        %v1094 = vpop.f32.mrb[0].mxu0
        %v1095 = vpop.f32.mrb[0].mxu0
        %v1096 = vadd.f32 %v904, %v1095
        %v1097 = vpop.f32.mrb[0].mxu0
        %1098 = vmatprep.mubr.bf16.mxu0 0
        %1099 = vmatmul.mubr.bf16.gmra.mrb[0].mxu0 %v649
        %v1100 = vpop.f32.mrb[0].mxu0
        %v1101 = vadd.f32 %v904, %v1100
        %v1102 = vpop.f32.mrb[0].mxu0
        %v1103 = vpop.f32.mrb[0].mxu0
        %v1104 = vadd.f32 %v904, %v1103
        %v1105 = vpop.f32.mrb[0].mxu0
        %1106 = vmatprep.mubr.bf16.mxu0 0
        %1107 = vmatmul.mubr.bf16.gmra.mrb[0].mxu0 %v650
        %v1108 = vpop.f32.mrb[0].mxu0
        %v1109 = vadd.f32 %v904, %v1108
        %v1110 = vpop.f32.mrb[0].mxu0
        %v1111 = vpop.f32.mrb[0].mxu0
        %v1112 = vadd.f32 %v904, %v1111
        %v1113 = vpop.f32.mrb[0].mxu0
        %1114 = vdwg.mxu0
        %v1115 = vld [vmem:[%s314] sm:$0xff]
        %v1116 = vld [vmem:[%s314 + $0x8] sm:$0xff]
        %v1117 = vld [vmem:[%s314 + $0x10] sm:$0xff]
        %v1118 = vld [vmem:[%s314 + $0x18] sm:$0xff]
        %v1119 = vld [vmem:[%s314 + $0x20] sm:$0xff]
        %v1120 = vld [vmem:[%s314 + $0x28] sm:$0xff]
        %v1121 = vld [vmem:[%s314 + $0x30] sm:$0xff]
        %v1122 = vld [vmem:[%s314 + $0x38] sm:$0xff]
        %v1123 = vld [vmem:[%s314 + $0x40] sm:$0xff]
        %v1124 = vld [vmem:[%s314 + $0x48] sm:$0xff]
        %v1125 = vld [vmem:[%s314 + $0x50] sm:$0xff]
        %v1126 = vld [vmem:[%s314 + $0x58] sm:$0xff]
        %v1127 = vld [vmem:[%s314 + $0x60] sm:$0xff]
        %v1128 = vld [vmem:[%s314 + $0x68] sm:$0xff]
        %v1129 = vld [vmem:[%s314 + $0x70] sm:$0xff]
        %v1130 = vld [vmem:[%s314 + $0x78] sm:$0xff]
        %v1131 = vld [vmem:[%s314 + $0x80] sm:$0xff]
        %v1132 = vld [vmem:[%s314 + $0x88] sm:$0xff]
        %v1133 = vld [vmem:[%s314 + $0x90] sm:$0xff]
        %v1134 = vld [vmem:[%s314 + $0x98] sm:$0xff]
        %v1135 = vld [vmem:[%s314 + $0xa0] sm:$0xff]
        %v1136 = vld [vmem:[%s314 + $0xa8] sm:$0xff]
        %v1137 = vld [vmem:[%s314 + $0xb0] sm:$0xff]
        %v1138 = vld [vmem:[%s314 + $0xb8] sm:$0xff]
        %v1139 = vld [vmem:[%s314 + $0xc0] sm:$0xff]
        %v1140 = vld [vmem:[%s314 + $0xc8] sm:$0xff]
        %v1141 = vld [vmem:[%s314 + $0xd0] sm:$0xff]
        %v1142 = vld [vmem:[%s314 + $0xd8] sm:$0xff]
        %v1143 = vld [vmem:[%s314 + $0xe0] sm:$0xff]
        %v1144 = vld [vmem:[%s314 + $0xe8] sm:$0xff]
        %v1145 = vld [vmem:[%s314 + $0xf0] sm:$0xff]
        %v1146 = vld [vmem:[%s314 + $0xf8] sm:$0xff]
        %v1147 = vlaneseq
        %v1148 = vand.u32 %v1147, 127
        %v1149 = vlaneseq
        %v1150 = vshrl.u32 %v1149, 7
        %v1151 = vadd.s32 %v1150, 8
        %v1152 = vadd.s32 %v1150, 16
        %v1153 = vadd.s32 %v1150, 24
        %v1154 = vadd.s32 %v1150, 32
        %v1155 = vadd.s32 %v1150, 40
        %v1156 = vadd.s32 %v1150, 48
        %v1157 = vadd.s32 %v1150, 56
        %v1158 = vadd.s32 %v1150, 64
        %v1159 = vadd.s32 %v1150, 72
        %v1160 = vadd.s32 %v1150, 80
        %v1161 = vadd.s32 %v1150, 88
        %v1162 = vadd.s32 %v1150, 96
        %v1163 = vadd.s32 %v1150, 104
        %v1164 = vadd.s32 %v1150, 112
        %v1165 = vadd.s32 %v1150, 120
        %v1166 = vadd.s32 %v1150, 128
        %v1167 = vadd.s32 %v1150, 136
        %v1168 = vadd.s32 %v1150, 144
        %v1169 = vadd.s32 %v1150, 152
        %v1170 = vadd.s32 %v1150, 160
        %v1171 = vadd.s32 %v1150, 168
        %v1172 = vadd.s32 %v1150, 176
        %v1173 = vadd.s32 %v1150, 184
        %v1174 = vadd.s32 %v1150, 192
        %v1175 = vadd.s32 %v1150, 200
        %v1176 = vadd.s32 %v1150, 208
        %v1177 = vadd.s32 %v1150, 216
        %v1178 = vadd.s32 %v1150, 224
        %v1179 = vadd.s32 %v1150, 232
        %v1180 = vadd.s32 %v1150, 240
        %v1181 = vadd.s32 %v1150, 248
        %s1182 = smul.u32 %s20, 256
        %v1183 = vstv %s1182
        %v1184 = vadd.s32 %v1150, %v1183
        %v1185 = vadd.s32 %v1151, %v1183
        %v1186 = vadd.s32 %v1152, %v1183
        %v1187 = vadd.s32 %v1153, %v1183
        %v1188 = vadd.s32 %v1154, %v1183
        %v1189 = vadd.s32 %v1155, %v1183
        %v1190 = vadd.s32 %v1156, %v1183
        %v1191 = vadd.s32 %v1157, %v1183
        %v1192 = vadd.s32 %v1158, %v1183
        %v1193 = vadd.s32 %v1159, %v1183
        %v1194 = vadd.s32 %v1160, %v1183
        %v1195 = vadd.s32 %v1161, %v1183
        %v1196 = vadd.s32 %v1162, %v1183
        %v1197 = vadd.s32 %v1163, %v1183
        %v1198 = vadd.s32 %v1164, %v1183
        %v1199 = vadd.s32 %v1165, %v1183
        %v1200 = vadd.s32 %v1166, %v1183
        %v1201 = vadd.s32 %v1167, %v1183
        %v1202 = vadd.s32 %v1168, %v1183
        %v1203 = vadd.s32 %v1169, %v1183
        %v1204 = vadd.s32 %v1170, %v1183
        %v1205 = vadd.s32 %v1171, %v1183
        %v1206 = vadd.s32 %v1172, %v1183
        %v1207 = vadd.s32 %v1173, %v1183
        %v1208 = vadd.s32 %v1174, %v1183
        %v1209 = vadd.s32 %v1175, %v1183
        %v1210 = vadd.s32 %v1176, %v1183
        %v1211 = vadd.s32 %v1177, %v1183
        %v1212 = vadd.s32 %v1178, %v1183
        %v1213 = vadd.s32 %v1179, %v1183
        %v1214 = vadd.s32 %v1180, %v1183
        %v1215 = vadd.s32 %v1181, %v1183
        %vm1216 = vcmp.lt.s32.totalorder %v1148, 10
        %vm1217 = vcmp.lt.s32.totalorder %v1184, 512
        %vm1218 = vcmp.lt.s32.totalorder %v1185, 512
        %vm1219 = vcmp.lt.s32.totalorder %v1186, 512
        %vm1220 = vcmp.lt.s32.totalorder %v1187, 512
        %vm1221 = vcmp.lt.s32.totalorder %v1188, 512
        %vm1222 = vcmp.lt.s32.totalorder %v1189, 512
        %vm1223 = vcmp.lt.s32.totalorder %v1190, 512
        %vm1224 = vcmp.lt.s32.totalorder %v1191, 512
        %vm1225 = vcmp.lt.s32.totalorder %v1192, 512
        %vm1226 = vcmp.lt.s32.totalorder %v1193, 512
        %vm1227 = vcmp.lt.s32.totalorder %v1194, 512
        %vm1228 = vcmp.lt.s32.totalorder %v1195, 512
        %vm1229 = vcmp.lt.s32.totalorder %v1196, 512
        %vm1230 = vcmp.lt.s32.totalorder %v1197, 512
        %vm1231 = vcmp.lt.s32.totalorder %v1198, 512
        %vm1232 = vcmp.lt.s32.totalorder %v1199, 512
        %vm1233 = vcmp.lt.s32.totalorder %v1200, 512
        %vm1234 = vcmp.lt.s32.totalorder %v1201, 512
        %vm1235 = vcmp.lt.s32.totalorder %v1202, 512
        %vm1236 = vcmp.lt.s32.totalorder %v1203, 512
        %vm1237 = vcmp.lt.s32.totalorder %v1204, 512
        %vm1238 = vcmp.lt.s32.totalorder %v1205, 512
        %vm1239 = vcmp.lt.s32.totalorder %v1206, 512
        %vm1240 = vcmp.lt.s32.totalorder %v1207, 512
        %vm1241 = vcmp.lt.s32.totalorder %v1208, 512
        %vm1242 = vcmp.lt.s32.totalorder %v1209, 512
        %vm1243 = vcmp.lt.s32.totalorder %v1210, 512
        %vm1244 = vcmp.lt.s32.totalorder %v1211, 512
        %vm1245 = vcmp.lt.s32.totalorder %v1212, 512
        %vm1246 = vcmp.lt.s32.totalorder %v1213, 512
        %vm1247 = vcmp.lt.s32.totalorder %v1214, 512
        %vm1248 = vcmp.lt.s32.totalorder %v1215, 512
        %vm1249 = vmand %vm1216, %vm1217
        %vm1250 = vmand %vm1216, %vm1218
        %vm1251 = vmand %vm1216, %vm1219
        %vm1252 = vmand %vm1216, %vm1220
        %vm1253 = vmand %vm1216, %vm1221
        %vm1254 = vmand %vm1216, %vm1222
        %vm1255 = vmand %vm1216, %vm1223
        %vm1256 = vmand %vm1216, %vm1224
        %vm1257 = vmand %vm1216, %vm1225
        %vm1258 = vmand %vm1216, %vm1226
        %vm1259 = vmand %vm1216, %vm1227
        %vm1260 = vmand %vm1216, %vm1228
        %vm1261 = vmand %vm1216, %vm1229
        %vm1262 = vmand %vm1216, %vm1230
        %vm1263 = vmand %vm1216, %vm1231
        %vm1264 = vmand %vm1216, %vm1232
        %vm1265 = vmand %vm1216, %vm1233
        %vm1266 = vmand %vm1216, %vm1234
        %vm1267 = vmand %vm1216, %vm1235
        %vm1268 = vmand %vm1216, %vm1236
        %vm1269 = vmand %vm1216, %vm1237
        %vm1270 = vmand %vm1216, %vm1238
        %vm1271 = vmand %vm1216, %vm1239
        %vm1272 = vmand %vm1216, %vm1240
        %vm1273 = vmand %vm1216, %vm1241
        %vm1274 = vmand %vm1216, %vm1242
        %vm1275 = vmand %vm1216, %vm1243
        %vm1276 = vmand %vm1216, %vm1244
        %vm1277 = vmand %vm1216, %vm1245
        %vm1278 = vmand %vm1216, %vm1246
        %vm1279 = vmand %vm1216, %vm1247
        %vm1280 = vmand %vm1216, %vm1248
        %v1281 = vsub.f32 %v1115, %v757
        %v1282 = vsub.f32 %v1116, %v760
        %v1283 = vsub.f32 %v1117, %v765
        %v1284 = vsub.f32 %v1118, %v768
        %v1285 = vsub.f32 %v1119, %v773
        %v1286 = vsub.f32 %v1120, %v776
        %v1287 = vsub.f32 %v1121, %v781
        %v1288 = vsub.f32 %v1122, %v784
        %v1289 = vsub.f32 %v1123, %v789
        %v1290 = vsub.f32 %v1124, %v792
        %v1291 = vsub.f32 %v1125, %v797
        %v1292 = vsub.f32 %v1126, %v800
        %v1293 = vsub.f32 %v1127, %v805
        %v1294 = vsub.f32 %v1128, %v808
        %v1295 = vsub.f32 %v1129, %v813
        %v1296 = vsub.f32 %v1130, %v816
        %v1297 = vsub.f32 %v1131, %v821
        %v1298 = vsub.f32 %v1132, %v824
        %v1299 = vsub.f32 %v1133, %v829
        %v1300 = vsub.f32 %v1134, %v832
        %v1301 = vsub.f32 %v1135, %v837
        %v1302 = vsub.f32 %v1136, %v840
        %v1303 = vsub.f32 %v1137, %v845
        %v1304 = vsub.f32 %v1138, %v848
        %v1305 = vsub.f32 %v1139, %v853
        %v1306 = vsub.f32 %v1140, %v856
        %v1307 = vsub.f32 %v1141, %v861
        %v1308 = vsub.f32 %v1142, %v864
        %v1309 = vsub.f32 %v1143, %v869
        %v1310 = vsub.f32 %v1144, %v872
        %v1311 = vsub.f32 %v1145, %v877
        %v1312 = vsub.f32 %v1146, %v880
        %v1313 = vsub.f32 0.0, %v989
        %v1314 = vsub.f32 0.0, %v992
        %v1315 = vsub.f32 0.0, %v997
        %v1316 = vsub.f32 0.0, %v1000
        %v1317 = vsub.f32 0.0, %v1005
        %v1318 = vsub.f32 0.0, %v1008
        %v1319 = vsub.f32 0.0, %v1013
        %v1320 = vsub.f32 0.0, %v1016
        %v1321 = vsub.f32 0.0, %v1021
        %v1322 = vsub.f32 0.0, %v1024
        %v1323 = vsub.f32 0.0, %v1029
        %v1324 = vsub.f32 0.0, %v1032
        %v1325 = vsub.f32 0.0, %v1037
        %v1326 = vsub.f32 0.0, %v1040
        %v1327 = vsub.f32 0.0, %v1045
        %v1328 = vsub.f32 0.0, %v1048
        %v1329 = vsub.f32 0.0, %v1053
        %v1330 = vsub.f32 0.0, %v1056
        %v1331 = vsub.f32 0.0, %v1061
        %v1332 = vsub.f32 0.0, %v1064
        %v1333 = vsub.f32 0.0, %v1069
        %v1334 = vsub.f32 0.0, %v1072
        %v1335 = vsub.f32 0.0, %v1077
        %v1336 = vsub.f32 0.0, %v1080
        %v1337 = vsub.f32 0.0, %v1085
        %v1338 = vsub.f32 0.0, %v1088
        %v1339 = vsub.f32 0.0, %v1093
        %v1340 = vsub.f32 0.0, %v1096
        %v1341 = vsub.f32 0.0, %v1101
        %v1342 = vsub.f32 0.0, %v1104
        %v1343 = vsub.f32 0.0, %v1109
        %v1344 = vsub.f32 0.0, %v1112
        %v1345 = vmul.f32 %v1313, 1.442695
        %v1346 = vpow.pop %v1345
        %v1347 = vmul.f32 %v1314, 1.442695
        %v1348 = vpow.pop %v1347
        %v1349 = vmul.f32 %v1315, 1.442695
        %v1350 = vpow.pop %v1349
        %v1351 = vmul.f32 %v1316, 1.442695
        %v1352 = vpow.pop %v1351
        %v1353 = vmul.f32 %v1317, 1.442695
        %v1354 = vpow.pop %v1353
        %v1355 = vmul.f32 %v1318, 1.442695
        %v1356 = vpow.pop %v1355
        %v1357 = vmul.f32 %v1319, 1.442695
        %v1358 = vpow.pop %v1357
        %v1359 = vmul.f32 %v1320, 1.442695
        %v1360 = vpow.pop %v1359
        %v1361 = vmul.f32 %v1321, 1.442695
        %v1362 = vpow.pop %v1361
        %v1363 = vmul.f32 %v1322, 1.442695
        %v1364 = vpow.pop %v1363
        %v1365 = vmul.f32 %v1323, 1.442695
        %v1366 = vpow.pop %v1365
        %v1367 = vmul.f32 %v1324, 1.442695
        %v1368 = vpow.pop %v1367
        %v1369 = vmul.f32 %v1325, 1.442695
        %v1370 = vpow.pop %v1369
        %v1371 = vmul.f32 %v1326, 1.442695
        %v1372 = vpow.pop %v1371
        %v1373 = vmul.f32 %v1327, 1.442695
        %v1374 = vpow.pop %v1373
        %v1375 = vmul.f32 %v1328, 1.442695
        %v1376 = vpow.pop %v1375
        %v1377 = vmul.f32 %v1329, 1.442695
        %v1378 = vpow.pop %v1377
        %v1379 = vmul.f32 %v1330, 1.442695
        %v1380 = vpow.pop %v1379
        %v1381 = vmul.f32 %v1331, 1.442695
        %v1382 = vpow.pop %v1381
        %v1383 = vmul.f32 %v1332, 1.442695
        %v1384 = vpow.pop %v1383
        %v1385 = vmul.f32 %v1333, 1.442695
        %v1386 = vpow.pop %v1385
        %v1387 = vmul.f32 %v1334, 1.442695
        %v1388 = vpow.pop %v1387
        %v1389 = vmul.f32 %v1335, 1.442695
        %v1390 = vpow.pop %v1389
        %v1391 = vmul.f32 %v1336, 1.442695
        %v1392 = vpow.pop %v1391
        %v1393 = vmul.f32 %v1337, 1.442695
        %v1394 = vpow.pop %v1393
        %v1395 = vmul.f32 %v1338, 1.442695
        %v1396 = vpow.pop %v1395
        %v1397 = vmul.f32 %v1339, 1.442695
        %v1398 = vpow.pop %v1397
        %v1399 = vmul.f32 %v1340, 1.442695
        %v1400 = vpow.pop %v1399
        %v1401 = vmul.f32 %v1341, 1.442695
        %v1402 = vpow.pop %v1401
        %v1403 = vmul.f32 %v1342, 1.442695
        %v1404 = vpow.pop %v1403
        %v1405 = vmul.f32 %v1343, 1.442695
        %v1406 = vpow.pop %v1405
        %v1407 = vmul.f32 %v1344, 1.442695
        %v1408 = vpow.pop %v1407
        %v1409 = vmul.f32 %v1281, %v1346
        %v1410 = vmul.f32 %v1282, %v1348
        %v1411 = vmul.f32 %v1283, %v1350
        %v1412 = vmul.f32 %v1284, %v1352
        %v1413 = vmul.f32 %v1285, %v1354
        %v1414 = vmul.f32 %v1286, %v1356
        %v1415 = vmul.f32 %v1287, %v1358
        %v1416 = vmul.f32 %v1288, %v1360
        %v1417 = vmul.f32 %v1289, %v1362
        %v1418 = vmul.f32 %v1290, %v1364
        %v1419 = vmul.f32 %v1291, %v1366
        %v1420 = vmul.f32 %v1292, %v1368
        %v1421 = vmul.f32 %v1293, %v1370
        %v1422 = vmul.f32 %v1294, %v1372
        %v1423 = vmul.f32 %v1295, %v1374
        %v1424 = vmul.f32 %v1296, %v1376
        %v1425 = vmul.f32 %v1297, %v1378
        %v1426 = vmul.f32 %v1298, %v1380
        %v1427 = vmul.f32 %v1299, %v1382
        %v1428 = vmul.f32 %v1300, %v1384
        %v1429 = vmul.f32 %v1301, %v1386
        %v1430 = vmul.f32 %v1302, %v1388
        %v1431 = vmul.f32 %v1303, %v1390
        %v1432 = vmul.f32 %v1304, %v1392
        %v1433 = vmul.f32 %v1305, %v1394
        %v1434 = vmul.f32 %v1306, %v1396
        %v1435 = vmul.f32 %v1307, %v1398
        %v1436 = vmul.f32 %v1308, %v1400
        %v1437 = vmul.f32 %v1309, %v1402
        %v1438 = vmul.f32 %v1310, %v1404
        %v1439 = vmul.f32 %v1311, %v1406
        %v1440 = vmul.f32 %v1312, %v1408
        %v1441 = vmul.f32 %v1409, 0.5
        %v1442 = vmul.f32 %v1410, 0.5
        %v1443 = vmul.f32 %v1411, 0.5
        %v1444 = vmul.f32 %v1412, 0.5
        %v1445 = vmul.f32 %v1413, 0.5
        %v1446 = vmul.f32 %v1414, 0.5
        %v1447 = vmul.f32 %v1415, 0.5
        %v1448 = vmul.f32 %v1416, 0.5
        %v1449 = vmul.f32 %v1417, 0.5
        %v1450 = vmul.f32 %v1418, 0.5
        %v1451 = vmul.f32 %v1419, 0.5
        %v1452 = vmul.f32 %v1420, 0.5
        %v1453 = vmul.f32 %v1421, 0.5
        %v1454 = vmul.f32 %v1422, 0.5
        %v1455 = vmul.f32 %v1423, 0.5
        %v1456 = vmul.f32 %v1424, 0.5
        %v1457 = vmul.f32 %v1425, 0.5
        %v1458 = vmul.f32 %v1426, 0.5
        %v1459 = vmul.f32 %v1427, 0.5
        %v1460 = vmul.f32 %v1428, 0.5
        %v1461 = vmul.f32 %v1429, 0.5
        %v1462 = vmul.f32 %v1430, 0.5
        %v1463 = vmul.f32 %v1431, 0.5
        %v1464 = vmul.f32 %v1432, 0.5
        %v1465 = vmul.f32 %v1433, 0.5
        %v1466 = vmul.f32 %v1434, 0.5
        %v1467 = vmul.f32 %v1435, 0.5
        %v1468 = vmul.f32 %v1436, 0.5
        %v1469 = vmul.f32 %v1437, 0.5
        %v1470 = vmul.f32 %v1438, 0.5
        %v1471 = vmul.f32 %v1439, 0.5
        %v1472 = vmul.f32 %v1440, 0.5
        %v1473 = vmul.f32 %v1441, %v1409
        %v1474 = vmul.f32 %v1442, %v1410
        %v1475 = vmul.f32 %v1443, %v1411
        %v1476 = vmul.f32 %v1444, %v1412
        %v1477 = vmul.f32 %v1445, %v1413
        %v1478 = vmul.f32 %v1446, %v1414
        %v1479 = vmul.f32 %v1447, %v1415
        %v1480 = vmul.f32 %v1448, %v1416
        %v1481 = vmul.f32 %v1449, %v1417
        %v1482 = vmul.f32 %v1450, %v1418
        %v1483 = vmul.f32 %v1451, %v1419
        %v1484 = vmul.f32 %v1452, %v1420
        %v1485 = vmul.f32 %v1453, %v1421
        %v1486 = vmul.f32 %v1454, %v1422
        %v1487 = vmul.f32 %v1455, %v1423
        %v1488 = vmul.f32 %v1456, %v1424
        %v1489 = vmul.f32 %v1457, %v1425
        %v1490 = vmul.f32 %v1458, %v1426
        %v1491 = vmul.f32 %v1459, %v1427
        %v1492 = vmul.f32 %v1460, %v1428
        %v1493 = vmul.f32 %v1461, %v1429
        %v1494 = vmul.f32 %v1462, %v1430
        %v1495 = vmul.f32 %v1463, %v1431
        %v1496 = vmul.f32 %v1464, %v1432
        %v1497 = vmul.f32 %v1465, %v1433
        %v1498 = vmul.f32 %v1466, %v1434
        %v1499 = vmul.f32 %v1467, %v1435
        %v1500 = vmul.f32 %v1468, %v1436
        %v1501 = vmul.f32 %v1469, %v1437
        %v1502 = vmul.f32 %v1470, %v1438
        %v1503 = vmul.f32 %v1471, %v1439
        %v1504 = vmul.f32 %v1472, %v1440
        %v1505 = vadd.f32 %v989, %v1473
        %v1506 = vadd.f32 %v992, %v1474
        %v1507 = vadd.f32 %v997, %v1475
        %v1508 = vadd.f32 %v1000, %v1476
        %v1509 = vadd.f32 %v1005, %v1477
        %v1510 = vadd.f32 %v1008, %v1478
        %v1511 = vadd.f32 %v1013, %v1479
        %v1512 = vadd.f32 %v1016, %v1480
        %v1513 = vadd.f32 %v1021, %v1481
        %v1514 = vadd.f32 %v1024, %v1482
        %v1515 = vadd.f32 %v1029, %v1483
        %v1516 = vadd.f32 %v1032, %v1484
        %v1517 = vadd.f32 %v1037, %v1485
        %v1518 = vadd.f32 %v1040, %v1486
        %v1519 = vadd.f32 %v1045, %v1487
        %v1520 = vadd.f32 %v1048, %v1488
        %v1521 = vadd.f32 %v1053, %v1489
        %v1522 = vadd.f32 %v1056, %v1490
        %v1523 = vadd.f32 %v1061, %v1491
        %v1524 = vadd.f32 %v1064, %v1492
        %v1525 = vadd.f32 %v1069, %v1493
        %v1526 = vadd.f32 %v1072, %v1494
        %v1527 = vadd.f32 %v1077, %v1495
        %v1528 = vadd.f32 %v1080, %v1496
        %v1529 = vadd.f32 %v1085, %v1497
        %v1530 = vadd.f32 %v1088, %v1498
        %v1531 = vadd.f32 %v1093, %v1499
        %v1532 = vadd.f32 %v1096, %v1500
        %v1533 = vadd.f32 %v1101, %v1501
        %v1534 = vadd.f32 %v1104, %v1502
        %v1535 = vadd.f32 %v1109, %v1503
        %v1536 = vadd.f32 %v1112, %v1504
        %v1537 = vadd.f32 %v1505, 0.9189385
        %v1538 = vadd.f32 %v1506, 0.9189385
        %v1539 = vadd.f32 %v1507, 0.9189385
        %v1540 = vadd.f32 %v1508, 0.9189385
        %v1541 = vadd.f32 %v1509, 0.9189385
        %v1542 = vadd.f32 %v1510, 0.9189385
        %v1543 = vadd.f32 %v1511, 0.9189385
        %v1544 = vadd.f32 %v1512, 0.9189385
        %v1545 = vadd.f32 %v1513, 0.9189385
        %v1546 = vadd.f32 %v1514, 0.9189385
        %v1547 = vadd.f32 %v1515, 0.9189385
        %v1548 = vadd.f32 %v1516, 0.9189385
        %v1549 = vadd.f32 %v1517, 0.9189385
        %v1550 = vadd.f32 %v1518, 0.9189385
        %v1551 = vadd.f32 %v1519, 0.9189385
        %v1552 = vadd.f32 %v1520, 0.9189385
        %v1553 = vadd.f32 %v1521, 0.9189385
        %v1554 = vadd.f32 %v1522, 0.9189385
        %v1555 = vadd.f32 %v1523, 0.9189385
        %v1556 = vadd.f32 %v1524, 0.9189385
        %v1557 = vadd.f32 %v1525, 0.9189385
        %v1558 = vadd.f32 %v1526, 0.9189385
        %v1559 = vadd.f32 %v1527, 0.9189385
        %v1560 = vadd.f32 %v1528, 0.9189385
        %v1561 = vadd.f32 %v1529, 0.9189385
        %v1562 = vadd.f32 %v1530, 0.9189385
        %v1563 = vadd.f32 %v1531, 0.9189385
        %v1564 = vadd.f32 %v1532, 0.9189385
        %v1565 = vadd.f32 %v1533, 0.9189385
        %v1566 = vadd.f32 %v1534, 0.9189385
        %v1567 = vadd.f32 %v1535, 0.9189385
        %v1568 = vadd.f32 %v1536, 0.9189385
        %s1569 = sld [smem:[#allocation2]]
        %v1570 = vsel %vm1249, %v1537, 0.0
        %v1571 = vsel %vm1250, %v1538, 0.0
        %v1572 = vsel %vm1251, %v1539, 0.0
        %v1573 = vsel %vm1252, %v1540, 0.0
        %v1574 = vsel %vm1253, %v1541, 0.0
        %v1575 = vsel %vm1254, %v1542, 0.0
        %v1576 = vsel %vm1255, %v1543, 0.0
        %v1577 = vsel %vm1256, %v1544, 0.0
        %v1578 = vsel %vm1257, %v1545, 0.0
        %v1579 = vsel %vm1258, %v1546, 0.0
        %v1580 = vsel %vm1259, %v1547, 0.0
        %v1581 = vsel %vm1260, %v1548, 0.0
        %v1582 = vsel %vm1261, %v1549, 0.0
        %v1583 = vsel %vm1262, %v1550, 0.0
        %v1584 = vsel %vm1263, %v1551, 0.0
        %v1585 = vsel %vm1264, %v1552, 0.0
        %v1586 = vsel %vm1265, %v1553, 0.0
        %v1587 = vsel %vm1266, %v1554, 0.0
        %v1588 = vsel %vm1267, %v1555, 0.0
        %v1589 = vsel %vm1268, %v1556, 0.0
        %v1590 = vsel %vm1269, %v1557, 0.0
        %v1591 = vsel %vm1270, %v1558, 0.0
        %v1592 = vsel %vm1271, %v1559, 0.0
        %v1593 = vsel %vm1272, %v1560, 0.0
        %v1594 = vsel %vm1273, %v1561, 0.0
        %v1595 = vsel %vm1274, %v1562, 0.0
        %v1596 = vsel %vm1275, %v1563, 0.0
        %v1597 = vsel %vm1276, %v1564, 0.0
        %v1598 = vsel %vm1277, %v1565, 0.0
        %v1599 = vsel %vm1278, %v1566, 0.0
        %v1600 = vsel %vm1279, %v1567, 0.0
        %v1601 = vsel %vm1280, %v1568, 0.0
        %v1602 = vadd.f32 %v1570, %v1571
        %v1603 = vadd.f32 %v1602, %v1572
        %v1604 = vadd.f32 %v1603, %v1573
        %v1605 = vadd.f32 %v1604, %v1574
        %v1606 = vadd.f32 %v1605, %v1575
        %v1607 = vadd.f32 %v1606, %v1576
        %v1608 = vadd.f32 %v1607, %v1577
        %v1609 = vadd.f32 %v1608, %v1578
        %v1610 = vadd.f32 %v1609, %v1579
        %v1611 = vadd.f32 %v1610, %v1580
        %v1612 = vadd.f32 %v1611, %v1581
        %v1613 = vadd.f32 %v1612, %v1582
        %v1614 = vadd.f32 %v1613, %v1583
        %v1615 = vadd.f32 %v1614, %v1584
        %v1616 = vadd.f32 %v1615, %v1585
        %v1617 = vadd.f32 %v1616, %v1586
        %v1618 = vadd.f32 %v1617, %v1587
        %v1619 = vadd.f32 %v1618, %v1588
        %v1620 = vadd.f32 %v1619, %v1589
        %v1621 = vadd.f32 %v1620, %v1590
        %v1622 = vadd.f32 %v1621, %v1591
        %v1623 = vadd.f32 %v1622, %v1592
        %v1624 = vadd.f32 %v1623, %v1593
        %v1625 = vadd.f32 %v1624, %v1594
        %v1626 = vadd.f32 %v1625, %v1595
        %v1627 = vadd.f32 %v1626, %v1596
        %v1628 = vadd.f32 %v1627, %v1597
        %v1629 = vadd.f32 %v1628, %v1598
        %v1630 = vadd.f32 %v1629, %v1599
        %v1631 = vadd.f32 %v1630, %v1600
        %v1632 = vadd.f32 %v1631, %v1601
        %1633 = vadd.xlane.f32.xlu0 %v1632
        %v1634 = vpop.xlane.xlu0 %1633
        %v1635 = vrot.slane %v1634, 4
        %v1636 = vadd.f32 %v1634, %v1635
        %v1637 = vrot.slane %v1636, 2
        %v1638 = vadd.f32 %v1636, %v1637
        %v1639 = vrot.slane %v1638, 1
        %v1640 = vadd.f32 %v1638, %v1639
        %s1641 = vtos %v1640
        %s1642 = sadd.f32 %s1569, %s1641
        %s1643 = scalar_lea.smem [#allocation2], 0
        %1644 = sst [smem:[%s1643]] %s1642
        // Predicated region
        $region57: #{_lambda_.11} parent=51 // pred_check
          %p1645 = pneg %p211
        $region58: #{_lambda_.11} parent=51 // pred_check_branch
          %1647 = sbr.rel (%p1645) target = $region60
        $region59: #{_lambda_.11} parent=51 // pred_region
          %s1649 = ssub.s32 16, 16
          %1650 = vsyncadd [#allocation3], %s1649
          %1653 = dma.smem_to_hbm [#allocation2], 16, %s8, [#allocation3]
        $region60: #{_lambda_.11} parent=51 // pred_fallthru
          _
        // Predicated region
        $region61: #{_lambda_.11} parent=51 // pred_check
          %p1654 = pneg %p211
        $region62: #{_lambda_.11} parent=51 // pred_check_branch
          %1656 = sbr.rel (%p1654) target = $region64
        $region63: #{_lambda_.11} parent=51 // pred_region
          %1657 = dma.done [#allocation3], 16
        $region64: #{_lambda_.11} parent=51 // pred_fallthru
          _
        %1658 = sfence
      $region52: #{_lambda_.11} parent=5 // pred_fallthru
        _
      %p1659 = scmp.le.s32.totalorder 2, %s15
      // Predicated region
      $region65: #{_lambda_.11} parent=5 // pred_check
        %p1660 = pneg %p1659
      $region66: #{_lambda_.11} parent=5 // pred_check_branch
        %1662 = sbr.rel (%p1660) target = $region68
      $region67: #{_lambda_.11} parent=5 // pred_region
        %s1663 = ssub.s32 %s15, 2
      $region68: #{_lambda_.11} parent=5 // pred_fallthru
        _
    $region6: #{_lambda_.11} parent=1 // loop_footer
      %s19 = sadd.s32 1, %s15
    $region7: #{_lambda_.11} parent=1 // loop_footer_branch
      %14 = sbr.rel target = $region3
    $region8: #{_lambda_.11} parent=1 // loop_exit
      _
    %1664 = vsyncpa [#allocation3], 1
    %s1665 = scalar_lea.sflag [#allocation3], 1
    %1666 = vsyncpa %s1665, 1

</llo_original>
